<compile_context>
chip_gen: v6e
topology: v6e:2x2x1
jax: 0.10.0
libtpu: 0.0.40
codegen_flags: <defaults>
</compile_context>

<pallas_src>
import math
import numpy as np

import jax
import jax.numpy as jnp
from jax.experimental import pallas as pl

_EPS = 1e-5


# ----------------------------------------------------------------------------
# Graph utilities (host-side Python on the numpy adjacency matrix)
# ----------------------------------------------------------------------------

def get_prev_nodes(matrix, j):
    return [i for i in range(j) if matrix[i, j]]


def compute_vertex_channels(matrix, input_channels, output_channels):
    """NAS-Bench-101 style channel distribution."""
    n = matrix.shape[0]
    vc = [0] * n
    vc[0] = input_channels
    vc[n - 1] = output_channels
    if n == 2:
        return vc
    in_degree = matrix[1:].sum(axis=0)
    interior = output_channels // int(in_degree[n - 1])
    correction = output_channels % int(in_degree[n - 1])
    for v in range(1, n - 1):
        if matrix[v, n - 1]:
            vc[v] = interior
            if correction:
                vc[v] += 1
                correction -= 1
    for v in range(n - 3, 0, -1):
        if not matrix[v, n - 1]:
            for dst in range(v + 1, n - 1):
                if matrix[v, dst]:
                    vc[v] = max(vc[v], vc[dst])
    return vc


# ----------------------------------------------------------------------------
# Parameter initialization (mirrors the PyTorch module structure)
# ----------------------------------------------------------------------------

def make_convbnrelu(key, c_in_max, c_out_max, kernel_size, stride, padding):
    k1, k2 = jax.random.split(key)
    fan_in = c_in_max * kernel_size * kernel_size
    w = jax.random.normal(k1, (c_out_max, c_in_max, kernel_size, kernel_size),
                          jnp.float32) * (1.0 / math.sqrt(fan_in))
    gamma = 1.0 + 0.1 * jax.random.normal(k2, (c_out_max,), jnp.float32)
    beta = jnp.zeros((c_out_max,), jnp.float32)
    mean = jnp.zeros((c_out_max,), jnp.float32)
    var = jnp.ones((c_out_max,), jnp.float32)
    return dict(w=w, gamma=gamma, beta=beta, mean=mean, var=var,
                k=kernel_size, stride=stride, padding=padding)


def make_node(key, c_out_max, stride):
    # single_k=True: ops = [MaxPool(3, stride, 1), ConvBNRelu(3x3, stride, pad=1)]
    return dict(conv=make_convbnrelu(key, c_out_max, c_out_max, 3, stride, 1),
                stride=stride)


def make_cell(key, n_nodes_max, n_out_min, c_in, c_out):
    keys = jax.random.split(key, 2 * n_nodes_max)
    projs, nodes = {}, {}
    for i in range(1, n_nodes_max - 1):
        projs[i] = make_convbnrelu(keys[i], c_in,
                                   math.ceil(c_out / n_out_min), 1, 1, 0)
    projs[n_nodes_max - 1] = make_convbnrelu(keys[n_nodes_max - 1], c_in, c_out,
                                             1, 1, 0)
    for i in range(1, n_nodes_max - 1):
        nodes[i] = make_node(keys[n_nodes_max + i],
                             math.ceil(c_out / n_out_min), stride=1)
    return dict(projs=projs, nodes=nodes, c_in=c_in, c_out=c_out,
                n_nodes_max=n_nodes_max)


def make_graph(key, c_init, input_channels, n_classes, n_cells, n_stacks,
               n_nodes_max, n_out_min):
    keys = jax.random.split(key, 2 + n_stacks * n_cells)
    stem = make_convbnrelu(keys[0], input_channels, c_init, 3, 1, 1)
    layers = []
    c_in = c_init
    c_out = c_init
    ki = 1
    for i in range(n_stacks):
        if i > 0:
            layers.append(("maxpool", None))
            c_out = 2 * c_in
        for _ in range(n_cells):
            layers.append(("cell", make_cell(keys[ki], n_nodes_max, n_out_min,
                                             c_in, c_out)))
            ki += 1
            c_in = c_out
    k1, k2 = jax.random.split(keys[-1])
    wc = jax.random.normal(k1, (c_in, n_classes), jnp.float32) / math.sqrt(c_in)
    bc = 0.01 * jax.random.normal(k2, (n_classes,), jnp.float32)
    return dict(stem=stem, layers=layers, wc=wc, bc=bc, c_init=c_init,
                n_classes=n_classes)


# ----------------------------------------------------------------------------
# Host-side prepared-array builders (run once, outside the kernel / jit)
# ----------------------------------------------------------------------------

def _banded_conv_weight(wf, W, pad):
    """(c_out, c_in, k, k) f32 -> list of k banded bf16 matrices (W*c_in, W*c_out).

    The W-direction taps AND the W zero-padding are folded into the band
    structure, so the conv along W (and over input channels) is a single MXU dot
    per dy tap on lane-dense activations."""
    c_out, c_in, k, _ = wf.shape
    mats = []
    for dy in range(k):
        m = np.zeros((W * c_in, W * c_out), np.float32)
        for ow in range(W):
            for dx in range(k):
                iw = ow + dx - pad
                if 0 <= iw < W:
                    m[iw * c_in:(iw + 1) * c_in,
                      ow * c_out:(ow + 1) * c_out] = wf[:, :, dy, dx].T
        mats.append(m.astype(jnp.bfloat16))
    return mats


def _row_shift_mats(B, H, k, pad):
    """0/1 (B*H, B*H) matrices realizing the H-direction tap shift (zero fill at
    the image borders, never crossing batch boundaries); None at the center tap."""
    mats = []
    for dy in range(k):
        off = dy - pad
        if off == 0:
            mats.append(None)
            continue
        m = np.zeros((B * H, B * H), np.float32)
        for b in range(B):
            for oh in range(H):
                ih = oh + off
                if 0 <= ih < H:
                    m[b * H + oh, b * H + ih] = 1.0
        mats.append(m)
    return mats


def _lane_shift_mats(W, C):
    """0/1 (W*C, W*C) matrices shifting lane-dense data by +-1 pixel along W
    (zero fill at the borders)."""
    mats = []
    for offw in (-1, 1):
        m = np.zeros((W * C, W * C), np.float32)
        for ow in range(W):
            iw = ow + offw
            if 0 <= iw < W:
                for c in range(C):
                    m[iw * C + c, ow * C + c] = 1.0
        mats.append(m)
    return mats


# ----------------------------------------------------------------------------
# Two-pass plumbing: pass 1 records prepared arrays, pass 2 (inside the Pallas
# kernel) consumes the loaded values in the identical walk order.
# ----------------------------------------------------------------------------

class Act:
    """Lane-dense activation: v has shape (B, H, W*C); v is None in the prep pass."""
    __slots__ = ("v", "H", "W", "C")

    def __init__(self, v, H, W, C):
        self.v, self.H, self.W, self.C = v, H, W, C


def add_acts(a, b):
    if a is None:
        return b
    v = None if a.v is None else a.v + b.v
    return Act(v, b.H, b.W, b.C)


class PrepFeed:
    """Pass 1: record the prepared parameter arrays for each op (in walk order)."""

    def __init__(self):
        self.groups = []

    def get(self, build_fn):
        self.groups.append(list(build_fn()))
        return None


class KernelFeed:
    """Pass 2 (inside the kernel): return the loaded parameter values in order."""

    def __init__(self, values, group_sizes):
        self._values = values
        self._sizes = list(group_sizes)
        self._pos = 0

    def get(self, _build_fn):
        n = self._sizes.pop(0)
        out = self._values[self._pos:self._pos + n]
        self._pos += n
        return out


# ----------------------------------------------------------------------------
# Fused ops (shared between the prep pass and the in-kernel compute pass)
# ----------------------------------------------------------------------------

def conv_bn_relu_op(feed, B, p, act, c_out, kernel_size=None, add=None):
    """Slicable Conv2d(bias=False) + eval-mode BatchNorm + ReLU [+ fused post-ReLU
    add] on a lane-dense (B, H, W*C) activation: k MXU dots against prepared
    banded bf16 weights (BN scale folded in) + (k-1) tiny row-shift dots."""
    c_in, H, W = act.C, act.H, act.W
    if kernel_size is not None and kernel_size != p["k"]:
        k_use = kernel_size
        pad_use = kernel_size // 2
        off = (p["k"] - kernel_size) // 2
    else:
        k_use = p["k"]
        pad_use = p["padding"]
        off = 0
    # every conv in this architecture is stride-1 "same"
    assert p["stride"] == 1 and pad_use == k_use // 2
    if add is not None:
        assert add.C == c_out and add.H == H and add.W == W

    def build():
        w = np.asarray(p["w"], np.float32)[:c_out, :c_in,
                                           off:off + k_use, off:off + k_use]
        gamma = np.asarray(p["gamma"], np.float32)[:c_out]
        beta = np.asarray(p["beta"], np.float32)[:c_out]
        mean = np.asarray(p["mean"], np.float32)[:c_out]
        var = np.asarray(p["var"], np.float32)[:c_out]
        scale = gamma / np.sqrt(var + _EPS)
        bias = beta - mean * scale
        wf = w * scale[:, None, None, None]             # fold BN scale into conv
        banded = _banded_conv_weight(wf, W, pad_use)    # k_use bf16 matrices
        bias_dense = np.tile(bias, W).reshape(1, W * c_out).astype(np.float32)
        shifts = [s for s in _row_shift_mats(B, H, k_use, pad_use)
                  if s is not None]
        return banded + [bias_dense] + shifts

    got = feed.get(build)
    if act.v is None:
        return Act(None, H, W, c_out)

    banded = got[:k_use]
    bias_dense = got[k_use]
    shifts = got[k_use + 1:]
    x2 = act.v.reshape(B * H, W * c_in).astype(jnp.bfloat16)
    acc = None
    si = 0
    for dy in range(k_use):
        t = jnp.dot(x2, banded[dy], preferred_element_type=jnp.float32)
        if dy != pad_use:          # H-direction tap shift (zero fill at borders)
            t = jnp.dot(shifts[si], t, preferred_element_type=jnp.float32)
            si += 1
        acc = t if acc is None else acc + t
    y = jnp.maximum(acc + bias_dense, 0.0)              # BN bias + ReLU
    if add is not None:                                  # fused DAG / residual add
        y = y + add.v.reshape(B * H, W * c_out)
    return Act(y.reshape(B, H, W * c_out), H, W, c_out)


def maxpool3x3_op(feed, B, act):
    """MaxPool2d(kernel=3, stride=1, padding=1).  Uses zero (not -inf) border fill;
    inputs here are sums of ReLU outputs (>= 0), so the result is identical."""
    H, W, C = act.H, act.W, act.C

    def build():
        rs = _row_shift_mats(B, H, 3, 1)
        ls = _lane_shift_mats(W, C)
        return [rs[0], rs[2], ls[0], ls[1]]

    got = feed.get(build)
    if act.v is None:
        return Act(None, H, W, C)
    r_up, r_dn, l_lf, l_rt = got
    x2 = act.v.reshape(B * H, W * C)
    hm = jnp.maximum(x2, jnp.maximum(
        jnp.dot(r_up, x2, preferred_element_type=jnp.float32),
        jnp.dot(r_dn, x2, preferred_element_type=jnp.float32)))
    wm = jnp.maximum(hm, jnp.maximum(
        jnp.dot(hm, l_lf, preferred_element_type=jnp.float32),
        jnp.dot(hm, l_rt, preferred_element_type=jnp.float32)))
    return Act(wm.reshape(B, H, W * C), H, W, C)


def maxpool2x2_op(feed, B, act):
    """MaxPool2d(kernel=2, stride=2, padding=0) via prepared 0/1 selection dots."""
    H, W, C = act.H, act.W, act.C
    Ho, Wo = H // 2, W // 2

    def build():
        e0 = np.zeros((B * Ho, B * H), np.float32)
        e1 = np.zeros((B * Ho, B * H), np.float32)
        for b in range(B):
            for oh in range(Ho):
                e0[b * Ho + oh, b * H + 2 * oh] = 1.0
                e1[b * Ho + oh, b * H + 2 * oh + 1] = 1.0
        s0 = np.zeros((W * C, Wo * C), np.float32)
        s1 = np.zeros((W * C, Wo * C), np.float32)
        for ow in range(Wo):
            for c in range(C):
                s0[(2 * ow) * C + c, ow * C + c] = 1.0
                s1[(2 * ow + 1) * C + c, ow * C + c] = 1.0
        return [e0, e1, s0, s1]

    got = feed.get(build)
    if act.v is None:
        return Act(None, Ho, Wo, C)
    e0, e1, s0, s1 = got
    x2 = act.v.reshape(B * H, W * C)
    hm = jnp.maximum(jnp.dot(e0, x2, preferred_element_type=jnp.float32),
                     jnp.dot(e1, x2, preferred_element_type=jnp.float32))
    out = jnp.maximum(jnp.dot(hm, s0, preferred_element_type=jnp.float32),
                      jnp.dot(hm, s1, preferred_element_type=jnp.float32))
    return Act(out.reshape(B, Ho, Wo * C), Ho, Wo, C)


def slice_channels_op(feed, B, act, c_to):
    """states[i][:, :c_to] in lane-dense layout (selection matmul; no-op here
    because the DAG channel counts already match)."""
    H, W, C = act.H, act.W, act.C
    if c_to == C:
        return act
    assert c_to < C

    def build():
        s = np.zeros((W * C, W * c_to), np.float32)
        for w in range(W):
            for c in range(c_to):
                s[w * C + c, w * c_to + c] = 1.0
        return [s]

    got = feed.get(build)
    if act.v is None:
        return Act(None, H, W, c_to)
    (s,) = got
    y = jnp.dot(act.v.reshape(B * H, W * C), s, preferred_element_type=jnp.float32)
    return Act(y.reshape(B, H, W * c_to), H, W, c_to)


def concat_channels_op(feed, B, acts):
    """torch.cat(..., dim=1) in lane-dense layout via prepared placement matmuls."""
    if len(acts) == 1:
        return acts[0]
    H, W = acts[0].H, acts[0].W
    Cs = [a.C for a in acts]
    Ct = sum(Cs)

    def build():
        mats = []
        offc = 0
        for Ci in Cs:
            s = np.zeros((W * Ci, W * Ct), np.float32)
            for w in range(W):
                for c in range(Ci):
                    s[w * Ci + c, w * Ct + offc + c] = 1.0
            mats.append(s)
            offc += Ci
        return mats

    got = feed.get(build)
    if acts[0].v is None:
        return Act(None, H, W, Ct)
    y = None
    for a, s in zip(acts, got):
        t = jnp.dot(a.v.reshape(B * H, W * a.C), s,
                    preferred_element_type=jnp.float32)
        y = t if y is None else y + t
    return Act(y.reshape(B, H, W * Ct), H, W, Ct)


def head_op(feed, B, act, wc, bc, n_classes):
    """Global average pool (as a prepared pooling matmul) + linear classifier."""
    H, W, C = act.H, act.W, act.C

    def build():
        pool = np.zeros((B, B * H), np.float32)
        for b in range(B):
            pool[b, b * H:(b + 1) * H] = 1.0 / (H * W)
        wcd = np.tile(np.asarray(wc, np.float32), (W, 1))   # (W*C, n_classes)
        bcd = np.asarray(bc, np.float32).reshape(1, n_classes)
        return [pool, wcd, bcd]

    got = feed.get(build)
    if act.v is None:
        return None
    pool, wcd, bcd = got
    x2 = act.v.reshape(B * H, W * C)
    pooled = jnp.dot(pool, x2, preferred_element_type=jnp.float32)     # (B, W*C)
    return jnp.dot(pooled, wcd, preferred_element_type=jnp.float32) + bcd


def node_op(feed, B, node, act, id_op, c_out):
    if int(id_op) == 0:
        assert node["stride"] == 1
        return maxpool3x3_op(feed, B, act)
    if int(id_op) == 1:
        return conv_bn_relu_op(feed, B, node["conv"], act, c_out, kernel_size=1)
    return conv_bn_relu_op(feed, B, node["conv"], act, c_out, kernel_size=3)


def cell_op(feed, B, cell, s0, matrix, ops):
    nb_cs = compute_vertex_channels(matrix, cell["c_in"], cell["c_out"])
    nb_nodes = matrix.shape[0]
    states = [s0]
    for j in range(1, nb_nodes - 1):
        prev = get_prev_nodes(matrix, j)
        addend = None
        for i in prev:
            if i > 0:
                h = slice_channels_op(feed, B, states[i], nb_cs[j])
                addend = add_acts(addend, h)
        if 0 in prev:
            # Fuse the input sum into the projection conv's epilogue (post-ReLU add).
            data_in = conv_bn_relu_op(feed, B, cell["projs"][j], states[0],
                                      nb_cs[j], add=addend)
        else:
            data_in = addend
        if data_in is None:
            states.append(None)
            continue
        states.append(node_op(feed, B, cell["nodes"][j], data_in,
                              int(ops[j - 1]), nb_cs[j]))
    prev_last = get_prev_nodes(matrix, nb_nodes - 1)
    tmp = [states[i] for i in prev_last if i > 0]
    if len(tmp) > 0:
        out = concat_channels_op(feed, B, tmp)
        if matrix[0, nb_nodes - 1]:
            # Fuse the residual add into the final projection conv's epilogue.
            out = conv_bn_relu_op(feed, B, cell["projs"][cell["n_nodes_max"] - 1],
                                  states[0], nb_cs[-1], add=out)
    else:
        out = conv_bn_relu_op(feed, B, cell["projs"][cell["n_nodes_max"] - 1],
                              states[0], nb_cs[-1])
    return out


def graph_forward(feed, B, g, x_act, matrix, ops):
    x = conv_bn_relu_op(feed, B, g["stem"], x_act, g["c_init"])
    for kind, layer in g["layers"]:
        if kind == "maxpool":
            x = maxpool2x2_op(feed, B, x)
        else:
            x = cell_op(feed, B, layer, x, matrix, ops)
    return head_op(feed, B, x, g["wc"], g["bc"], g["n_classes"])


# ----------------------------------------------------------------------------
# Fused-forward builder: one pallas_call for the whole network
# ----------------------------------------------------------------------------

def build_fused_forward(g, matrix, ops, B, H, W, c_in):
    # Pass 1 (host, eager, once): walk the graph with shape stubs and build every
    # prepared parameter array (banded bf16 conv weights with BN folded, dense
    # biases, 0/1 shift / selection / pooling matrices) in a deterministic order.
    prep = PrepFeed()
    graph_forward(prep, B, g, Act(None, H, W, c_in), matrix, ops)
    group_sizes = [len(grp) for grp in prep.groups]
    flat_params = [jnp.asarray(a) for grp in prep.groups for a in grp]
    n_classes = g["n_classes"]

    # Pass 2: the kernel body repeats the identical walk, consuming the prepared
    # parameters (now whole-array VMEM-resident ref values) in the same order.
    # Total VMEM footprint (all params + activations) is well under 1 MiB, far
    # below the default scoped limit on v5e/v6e/v7x, so no explicit vmem limit or
    # tiling is needed.
    def kernel(*refs):
        x_ref = refs[0]
        param_refs = refs[1:-1]
        o_ref = refs[-1]
        feed = KernelFeed([r[...] for r in param_refs], group_sizes)
        x_act = Act(x_ref[...], H, W, c_in)
        logits = graph_forward(feed, B, g, x_act, matrix, ops)
        o_ref[...] = logits.astype(o_ref.dtype)

    fused = pl.pallas_call(
        kernel,
        out_shape=jax.ShapeDtypeStruct((B, n_classes), jnp.float32),
    )

    def forward(x_nchw):
        # Public layout is NCHW (PyTorch convention); internal compute is lane-dense
        # (B, H, W*C).  This transpose is the only XLA op outside the fused kernel.
        x_dense = jnp.transpose(x_nchw.astype(jnp.float32),
                                (0, 2, 3, 1)).reshape(B, H, W * c_in)
        return fused(x_dense, *flat_params)

    return forward


# ----------------------------------------------------------------------------
# main
# ----------------------------------------------------------------------------

if __name__ == "__main__":
    key = jax.random.PRNGKey(0)
    k_params, k_input = jax.random.split(key)

    # Small config: c_init=8, input_channels=3, n_classes=10,
    #               n_cells=1, n_stacks=2, n_nodes_max=4, n_out_min=2, single_k=True
    graph = make_graph(k_params, c_init=8, input_channels=3, n_classes=10,
                       n_cells=1, n_stacks=2, n_nodes_max=4, n_out_min=2)

    # Task: DAG adjacency (upper triangular) + per-interior-node op ids.
    matrix = np.array([[0, 1, 1, 1],
                       [0, 0, 1, 1],
                       [0, 0, 0, 1],
                       [0, 0, 0, 0]], dtype=np.int32)
    ops = [2, 1]   # node1: conv3x3, node2: conv1x1 (single_k semantics)

    B, C_IN, H, W = 2, 3, 16, 16
    x = jax.random.normal(k_input, (B, C_IN, H, W), jnp.float32)   # NCHW

    # matrix/ops drive Python (trace-time) control flow; params are captured
    # constants inside the single fused kernel.
    forward = build_fused_forward(graph, matrix, ops, B, H, W, C_IN)
    fwd = jax.jit(forward)
    logits = jax.block_until_ready(fwd(x))

    assert logits.shape == (B, 10), logits.shape
    assert bool(jnp.all(jnp.isfinite(logits)))
    print("KERNEL_OK")
</pallas_src>

<mosaic_0001>
module attributes {stable_mosaic.version = 11 : i64} {
  func.func @kernel(%arg0: memref<2x16x48xf32, #tpu.memory_space<vmem>>, %arg1: memref<48x128xbf16, #tpu.memory_space<vmem>>, %arg2: memref<48x128xbf16, #tpu.memory_space<vmem>>, %arg3: memref<48x128xbf16, #tpu.memory_space<vmem>>, %arg4: memref<1x128xf32, #tpu.memory_space<vmem>>, %arg5: memref<32x32xf32, #tpu.memory_space<vmem>>, %arg6: memref<32x32xf32, #tpu.memory_space<vmem>>, %arg7: memref<128x64xbf16, #tpu.memory_space<vmem>>, %arg8: memref<1x64xf32, #tpu.memory_space<vmem>>, %arg9: memref<64x64xbf16, #tpu.memory_space<vmem>>, %arg10: memref<64x64xbf16, #tpu.memory_space<vmem>>, %arg11: memref<64x64xbf16, #tpu.memory_space<vmem>>, %arg12: memref<1x64xf32, #tpu.memory_space<vmem>>, %arg13: memref<32x32xf32, #tpu.memory_space<vmem>>, %arg14: memref<32x32xf32, #tpu.memory_space<vmem>>, %arg15: memref<128x64xbf16, #tpu.memory_space<vmem>>, %arg16: memref<1x64xf32, #tpu.memory_space<vmem>>, %arg17: memref<64x64xbf16, #tpu.memory_space<vmem>>, %arg18: memref<1x64xf32, #tpu.memory_space<vmem>>, %arg19: memref<64x128xf32, #tpu.memory_space<vmem>>, %arg20: memref<64x128xf32, #tpu.memory_space<vmem>>, %arg21: memref<128x128xbf16, #tpu.memory_space<vmem>>, %arg22: memref<1x128xf32, #tpu.memory_space<vmem>>, %arg23: memref<16x32xf32, #tpu.memory_space<vmem>>, %arg24: memref<16x32xf32, #tpu.memory_space<vmem>>, %arg25: memref<128x64xf32, #tpu.memory_space<vmem>>, %arg26: memref<128x64xf32, #tpu.memory_space<vmem>>, %arg27: memref<64x64xbf16, #tpu.memory_space<vmem>>, %arg28: memref<1x64xf32, #tpu.memory_space<vmem>>, %arg29: memref<64x64xbf16, #tpu.memory_space<vmem>>, %arg30: memref<64x64xbf16, #tpu.memory_space<vmem>>, %arg31: memref<64x64xbf16, #tpu.memory_space<vmem>>, %arg32: memref<1x64xf32, #tpu.memory_space<vmem>>, %arg33: memref<16x16xf32, #tpu.memory_space<vmem>>, %arg34: memref<16x16xf32, #tpu.memory_space<vmem>>, %arg35: memref<64x64xbf16, #tpu.memory_space<vmem>>, %arg36: memref<1x64xf32, #tpu.memory_space<vmem>>, %arg37: memref<64x64xbf16, #tpu.memory_space<vmem>>, %arg38: memref<1x64xf32, #tpu.memory_space<vmem>>, %arg39: memref<64x128xf32, #tpu.memory_space<vmem>>, %arg40: memref<64x128xf32, #tpu.memory_space<vmem>>, %arg41: memref<64x128xbf16, #tpu.memory_space<vmem>>, %arg42: memref<1x128xf32, #tpu.memory_space<vmem>>, %arg43: memref<2x16xf32, #tpu.memory_space<vmem>>, %arg44: memref<128x10xf32, #tpu.memory_space<vmem>>, %arg45: memref<1x10xf32, #tpu.memory_space<vmem>>, %arg46: memref<2x10xf32, #tpu.memory_space<vmem>>) attributes {dimension_semantics = [], scalar_prefetch = 0 : i64, scratch_operands = 0 : i64, tpu.core_type = #tpu.core_type<tc>} {
    %c0 = arith.constant 0 : index
    %c0_0 = arith.constant 0 : index
    %0 = vector.load %arg1[%c0, %c0_0] : memref<48x128xbf16, #tpu.memory_space<vmem>>, vector<48x128xbf16>
    %c0_1 = arith.constant 0 : index
    %c0_2 = arith.constant 0 : index
    %1 = vector.load %arg2[%c0_1, %c0_2] : memref<48x128xbf16, #tpu.memory_space<vmem>>, vector<48x128xbf16>
    %c0_3 = arith.constant 0 : index
    %c0_4 = arith.constant 0 : index
    %2 = vector.load %arg3[%c0_3, %c0_4] : memref<48x128xbf16, #tpu.memory_space<vmem>>, vector<48x128xbf16>
    %c0_5 = arith.constant 0 : index
    %c0_6 = arith.constant 0 : index
    %3 = vector.load %arg4[%c0_5, %c0_6] : memref<1x128xf32, #tpu.memory_space<vmem>>, vector<1x128xf32>
    %c0_7 = arith.constant 0 : index
    %c0_8 = arith.constant 0 : index
    %4 = vector.load %arg5[%c0_7, %c0_8] : memref<32x32xf32, #tpu.memory_space<vmem>>, vector<32x32xf32>
    %c0_9 = arith.constant 0 : index
    %c0_10 = arith.constant 0 : index
    %5 = vector.load %arg6[%c0_9, %c0_10] : memref<32x32xf32, #tpu.memory_space<vmem>>, vector<32x32xf32>
    %c0_11 = arith.constant 0 : index
    %c0_12 = arith.constant 0 : index
    %6 = vector.load %arg7[%c0_11, %c0_12] : memref<128x64xbf16, #tpu.memory_space<vmem>>, vector<128x64xbf16>
    %c0_13 = arith.constant 0 : index
    %c0_14 = arith.constant 0 : index
    %7 = vector.load %arg8[%c0_13, %c0_14] : memref<1x64xf32, #tpu.memory_space<vmem>>, vector<1x64xf32>
    %c0_15 = arith.constant 0 : index
    %c0_16 = arith.constant 0 : index
    %8 = vector.load %arg9[%c0_15, %c0_16] : memref<64x64xbf16, #tpu.memory_space<vmem>>, vector<64x64xbf16>
    %c0_17 = arith.constant 0 : index
    %c0_18 = arith.constant 0 : index
    %9 = vector.load %arg10[%c0_17, %c0_18] : memref<64x64xbf16, #tpu.memory_space<vmem>>, vector<64x64xbf16>
    %c0_19 = arith.constant 0 : index
    %c0_20 = arith.constant 0 : index
    %10 = vector.load %arg11[%c0_19, %c0_20] : memref<64x64xbf16, #tpu.memory_space<vmem>>, vector<64x64xbf16>
    %c0_21 = arith.constant 0 : index
    %c0_22 = arith.constant 0 : index
    %11 = vector.load %arg12[%c0_21, %c0_22] : memref<1x64xf32, #tpu.memory_space<vmem>>, vector<1x64xf32>
    %c0_23 = arith.constant 0 : index
    %c0_24 = arith.constant 0 : index
    %12 = vector.load %arg13[%c0_23, %c0_24] : memref<32x32xf32, #tpu.memory_space<vmem>>, vector<32x32xf32>
    %c0_25 = arith.constant 0 : index
    %c0_26 = arith.constant 0 : index
    %13 = vector.load %arg14[%c0_25, %c0_26] : memref<32x32xf32, #tpu.memory_space<vmem>>, vector<32x32xf32>
    %c0_27 = arith.constant 0 : index
    %c0_28 = arith.constant 0 : index
    %14 = vector.load %arg15[%c0_27, %c0_28] : memref<128x64xbf16, #tpu.memory_space<vmem>>, vector<128x64xbf16>
    %c0_29 = arith.constant 0 : index
    %c0_30 = arith.constant 0 : index
    %15 = vector.load %arg16[%c0_29, %c0_30] : memref<1x64xf32, #tpu.memory_space<vmem>>, vector<1x64xf32>
    %c0_31 = arith.constant 0 : index
    %c0_32 = arith.constant 0 : index
    %16 = vector.load %arg17[%c0_31, %c0_32] : memref<64x64xbf16, #tpu.memory_space<vmem>>, vector<64x64xbf16>
    %c0_33 = arith.constant 0 : index
    %c0_34 = arith.constant 0 : index
    %17 = vector.load %arg18[%c0_33, %c0_34] : memref<1x64xf32, #tpu.memory_space<vmem>>, vector<1x64xf32>
    %c0_35 = arith.constant 0 : index
    %c0_36 = arith.constant 0 : index
    %18 = vector.load %arg19[%c0_35, %c0_36] : memref<64x128xf32, #tpu.memory_space<vmem>>, vector<64x128xf32>
    %c0_37 = arith.constant 0 : index
    %c0_38 = arith.constant 0 : index
    %19 = vector.load %arg20[%c0_37, %c0_38] : memref<64x128xf32, #tpu.memory_space<vmem>>, vector<64x128xf32>
    %c0_39 = arith.constant 0 : index
    %c0_40 = arith.constant 0 : index
    %20 = vector.load %arg21[%c0_39, %c0_40] : memref<128x128xbf16, #tpu.memory_space<vmem>>, vector<128x128xbf16>
    %c0_41 = arith.constant 0 : index
    %c0_42 = arith.constant 0 : index
    %21 = vector.load %arg22[%c0_41, %c0_42] : memref<1x128xf32, #tpu.memory_space<vmem>>, vector<1x128xf32>
    %c0_43 = arith.constant 0 : index
    %c0_44 = arith.constant 0 : index
    %22 = vector.load %arg23[%c0_43, %c0_44] : memref<16x32xf32, #tpu.memory_space<vmem>>, vector<16x32xf32>
    %c0_45 = arith.constant 0 : index
    %c0_46 = arith.constant 0 : index
    %23 = vector.load %arg24[%c0_45, %c0_46] : memref<16x32xf32, #tpu.memory_space<vmem>>, vector<16x32xf32>
    %c0_47 = arith.constant 0 : index
    %c0_48 = arith.constant 0 : index
    %24 = vector.load %arg25[%c0_47, %c0_48] : memref<128x64xf32, #tpu.memory_space<vmem>>, vector<128x64xf32>
    %c0_49 = arith.constant 0 : index
    %c0_50 = arith.constant 0 : index
    %25 = vector.load %arg26[%c0_49, %c0_50] : memref<128x64xf32, #tpu.memory_space<vmem>>, vector<128x64xf32>
    %c0_51 = arith.constant 0 : index
    %c0_52 = arith.constant 0 : index
    %26 = vector.load %arg27[%c0_51, %c0_52] : memref<64x64xbf16, #tpu.memory_space<vmem>>, vector<64x64xbf16>
    %c0_53 = arith.constant 0 : index
    %c0_54 = arith.constant 0 : index
    %27 = vector.load %arg28[%c0_53, %c0_54] : memref<1x64xf32, #tpu.memory_space<vmem>>, vector<1x64xf32>
    %c0_55 = arith.constant 0 : index
    %c0_56 = arith.constant 0 : index
    %28 = vector.load %arg29[%c0_55, %c0_56] : memref<64x64xbf16, #tpu.memory_space<vmem>>, vector<64x64xbf16>
    %c0_57 = arith.constant 0 : index
    %c0_58 = arith.constant 0 : index
    %29 = vector.load %arg30[%c0_57, %c0_58] : memref<64x64xbf16, #tpu.memory_space<vmem>>, vector<64x64xbf16>
    %c0_59 = arith.constant 0 : index
    %c0_60 = arith.constant 0 : index
    %30 = vector.load %arg31[%c0_59, %c0_60] : memref<64x64xbf16, #tpu.memory_space<vmem>>, vector<64x64xbf16>
    %c0_61 = arith.constant 0 : index
    %c0_62 = arith.constant 0 : index
    %31 = vector.load %arg32[%c0_61, %c0_62] : memref<1x64xf32, #tpu.memory_space<vmem>>, vector<1x64xf32>
    %c0_63 = arith.constant 0 : index
    %c0_64 = arith.constant 0 : index
    %32 = vector.load %arg33[%c0_63, %c0_64] : memref<16x16xf32, #tpu.memory_space<vmem>>, vector<16x16xf32>
    %c0_65 = arith.constant 0 : index
    %c0_66 = arith.constant 0 : index
    %33 = vector.load %arg34[%c0_65, %c0_66] : memref<16x16xf32, #tpu.memory_space<vmem>>, vector<16x16xf32>
    %c0_67 = arith.constant 0 : index
    %c0_68 = arith.constant 0 : index
    %34 = vector.load %arg35[%c0_67, %c0_68] : memref<64x64xbf16, #tpu.memory_space<vmem>>, vector<64x64xbf16>
    %c0_69 = arith.constant 0 : index
    %c0_70 = arith.constant 0 : index
    %35 = vector.load %arg36[%c0_69, %c0_70] : memref<1x64xf32, #tpu.memory_space<vmem>>, vector<1x64xf32>
    %c0_71 = arith.constant 0 : index
    %c0_72 = arith.constant 0 : index
    %36 = vector.load %arg37[%c0_71, %c0_72] : memref<64x64xbf16, #tpu.memory_space<vmem>>, vector<64x64xbf16>
    %c0_73 = arith.constant 0 : index
    %c0_74 = arith.constant 0 : index
    %37 = vector.load %arg38[%c0_73, %c0_74] : memref<1x64xf32, #tpu.memory_space<vmem>>, vector<1x64xf32>
    %c0_75 = arith.constant 0 : index
    %c0_76 = arith.constant 0 : index
    %38 = vector.load %arg39[%c0_75, %c0_76] : memref<64x128xf32, #tpu.memory_space<vmem>>, vector<64x128xf32>
    %c0_77 = arith.constant 0 : index
    %c0_78 = arith.constant 0 : index
    %39 = vector.load %arg40[%c0_77, %c0_78] : memref<64x128xf32, #tpu.memory_space<vmem>>, vector<64x128xf32>
    %c0_79 = arith.constant 0 : index
    %c0_80 = arith.constant 0 : index
    %40 = vector.load %arg41[%c0_79, %c0_80] : memref<64x128xbf16, #tpu.memory_space<vmem>>, vector<64x128xbf16>
    %c0_81 = arith.constant 0 : index
    %c0_82 = arith.constant 0 : index
    %41 = vector.load %arg42[%c0_81, %c0_82] : memref<1x128xf32, #tpu.memory_space<vmem>>, vector<1x128xf32>
    %c0_83 = arith.constant 0 : index
    %c0_84 = arith.constant 0 : index
    %42 = vector.load %arg43[%c0_83, %c0_84] : memref<2x16xf32, #tpu.memory_space<vmem>>, vector<2x16xf32>
    %c0_85 = arith.constant 0 : index
    %c0_86 = arith.constant 0 : index
    %43 = vector.load %arg44[%c0_85, %c0_86] : memref<128x10xf32, #tpu.memory_space<vmem>>, vector<128x10xf32>
    %c0_87 = arith.constant 0 : index
    %c0_88 = arith.constant 0 : index
    %44 = vector.load %arg45[%c0_87, %c0_88] : memref<1x10xf32, #tpu.memory_space<vmem>>, vector<1x10xf32>
    %c0_89 = arith.constant 0 : index
    %c0_90 = arith.constant 0 : index
    %c0_91 = arith.constant 0 : index
    %45 = vector.load %arg0[%c0_89, %c0_90, %c0_91] : memref<2x16x48xf32, #tpu.memory_space<vmem>>, vector<2x16x48xf32>
    %46 = vector.shape_cast %45 : vector<2x16x48xf32> to vector<32x48xf32>
    %47 = arith.truncf %46 : vector<32x48xf32> to vector<32x48xbf16>
    %cst = arith.constant dense<0.000000e+00> : vector<32x128xf32>
    %48 = tpu.matmul %47, %0, %cst {dimension_numbers = #tpu.dot_dimension_numbers<[1], [0], [0], [1], [0, 0, 1, 1], [], []>} : vector<32x48xbf16>, vector<48x128xbf16>, vector<32x128xf32> -> vector<32x128xf32>
    %cst_92 = arith.constant dense<0.000000e+00> : vector<32x128xf32>
    %49 = tpu.matmul %4, %48, %cst_92 {dimension_numbers = #tpu.dot_dimension_numbers<[1], [0], [0], [1], [0, 0, 1, 1], [], []>} : vector<32x32xf32>, vector<32x128xf32>, vector<32x128xf32> -> vector<32x128xf32>
    %cst_93 = arith.constant dense<0.000000e+00> : vector<32x128xf32>
    %50 = tpu.matmul %47, %1, %cst_93 {dimension_numbers = #tpu.dot_dimension_numbers<[1], [0], [0], [1], [0, 0, 1, 1], [], []>} : vector<32x48xbf16>, vector<48x128xbf16>, vector<32x128xf32> -> vector<32x128xf32>
    %51 = arith.addf %49, %50 : vector<32x128xf32>
    %cst_94 = arith.constant dense<0.000000e+00> : vector<32x128xf32>
    %52 = tpu.matmul %47, %2, %cst_94 {dimension_numbers = #tpu.dot_dimension_numbers<[1], [0], [0], [1], [0, 0, 1, 1], [], []>} : vector<32x48xbf16>, vector<48x128xbf16>, vector<32x128xf32> -> vector<32x128xf32>
    %cst_95 = arith.constant dense<0.000000e+00> : vector<32x128xf32>
    %53 = tpu.matmul %5, %52, %cst_95 {dimension_numbers = #tpu.dot_dimension_numbers<[1], [0], [0], [1], [0, 0, 1, 1], [], []>} : vector<32x32xf32>, vector<32x128xf32>, vector<32x128xf32> -> vector<32x128xf32>
    %54 = arith.addf %51, %53 : vector<32x128xf32>
    %55 = vector.broadcast %3 : vector<1x128xf32> to vector<32x128xf32>
    %56 = arith.addf %54, %55 : vector<32x128xf32>
    %cst_96 = arith.constant 0.000000e+00 : f32
    %57 = vector.broadcast %cst_96 : f32 to vector<32x128xf32>
    %58 = arith.maximumf %56, %57 : vector<32x128xf32>
    %59 = vector.shape_cast %58 : vector<32x128xf32> to vector<2x16x128xf32>
    %60 = vector.shape_cast %59 : vector<2x16x128xf32> to vector<32x128xf32>
    %61 = arith.truncf %60 : vector<32x128xf32> to vector<32x128xbf16>
    %cst_97 = arith.constant dense<0.000000e+00> : vector<32x64xf32>
    %62 = tpu.matmul %61, %6, %cst_97 {dimension_numbers = #tpu.dot_dimension_numbers<[1], [0], [0], [1], [0, 0, 1, 1], [], []>} : vector<32x128xbf16>, vector<128x64xbf16>, vector<32x64xf32> -> vector<32x64xf32>
    %63 = vector.broadcast %7 : vector<1x64xf32> to vector<32x64xf32>
    %64 = arith.addf %62, %63 : vector<32x64xf32>
    %cst_98 = arith.constant 0.000000e+00 : f32
    %65 = vector.broadcast %cst_98 : f32 to vector<32x64xf32>
    %66 = arith.maximumf %64, %65 : vector<32x64xf32>
    %67 = vector.shape_cast %66 : vector<32x64xf32> to vector<2x16x64xf32>
    %68 = vector.shape_cast %67 : vector<2x16x64xf32> to vector<32x64xf32>
    %69 = arith.truncf %68 : vector<32x64xf32> to vector<32x64xbf16>
    %cst_99 = arith.constant dense<0.000000e+00> : vector<32x64xf32>
    %70 = tpu.matmul %69, %8, %cst_99 {dimension_numbers = #tpu.dot_dimension_numbers<[1], [0], [0], [1], [0, 0, 1, 1], [], []>} : vector<32x64xbf16>, vector<64x64xbf16>, vector<32x64xf32> -> vector<32x64xf32>
    %cst_100 = arith.constant dense<0.000000e+00> : vector<32x64xf32>
    %71 = tpu.matmul %12, %70, %cst_100 {dimension_numbers = #tpu.dot_dimension_numbers<[1], [0], [0], [1], [0, 0, 1, 1], [], []>} : vector<32x32xf32>, vector<32x64xf32>, vector<32x64xf32> -> vector<32x64xf32>
    %cst_101 = arith.constant dense<0.000000e+00> : vector<32x64xf32>
    %72 = tpu.matmul %69, %9, %cst_101 {dimension_numbers = #tpu.dot_dimension_numbers<[1], [0], [0], [1], [0, 0, 1, 1], [], []>} : vector<32x64xbf16>, vector<64x64xbf16>, vector<32x64xf32> -> vector<32x64xf32>
    %73 = arith.addf %71, %72 : vector<32x64xf32>
    %cst_102 = arith.constant dense<0.000000e+00> : vector<32x64xf32>
    %74 = tpu.matmul %69, %10, %cst_102 {dimension_numbers = #tpu.dot_dimension_numbers<[1], [0], [0], [1], [0, 0, 1, 1], [], []>} : vector<32x64xbf16>, vector<64x64xbf16>, vector<32x64xf32> -> vector<32x64xf32>
    %cst_103 = arith.constant dense<0.000000e+00> : vector<32x64xf32>
    %75 = tpu.matmul %13, %74, %cst_103 {dimension_numbers = #tpu.dot_dimension_numbers<[1], [0], [0], [1], [0, 0, 1, 1], [], []>} : vector<32x32xf32>, vector<32x64xf32>, vector<32x64xf32> -> vector<32x64xf32>
    %76 = arith.addf %73, %75 : vector<32x64xf32>
    %77 = vector.broadcast %11 : vector<1x64xf32> to vector<32x64xf32>
    %78 = arith.addf %76, %77 : vector<32x64xf32>
    %cst_104 = arith.constant 0.000000e+00 : f32
    %79 = vector.broadcast %cst_104 : f32 to vector<32x64xf32>
    %80 = arith.maximumf %78, %79 : vector<32x64xf32>
    %81 = vector.shape_cast %80 : vector<32x64xf32> to vector<2x16x64xf32>
    %82 = vector.shape_cast %59 : vector<2x16x128xf32> to vector<32x128xf32>
    %83 = arith.truncf %82 : vector<32x128xf32> to vector<32x128xbf16>
    %cst_105 = arith.constant dense<0.000000e+00> : vector<32x64xf32>
    %84 = tpu.matmul %83, %14, %cst_105 {dimension_numbers = #tpu.dot_dimension_numbers<[1], [0], [0], [1], [0, 0, 1, 1], [], []>} : vector<32x128xbf16>, vector<128x64xbf16>, vector<32x64xf32> -> vector<32x64xf32>
    %85 = vector.broadcast %15 : vector<1x64xf32> to vector<32x64xf32>
    %86 = arith.addf %84, %85 : vector<32x64xf32>
    %cst_106 = arith.constant 0.000000e+00 : f32
    %87 = vector.broadcast %cst_106 : f32 to vector<32x64xf32>
    %88 = arith.maximumf %86, %87 : vector<32x64xf32>
    %89 = vector.shape_cast %81 : vector<2x16x64xf32> to vector<32x64xf32>
    %90 = arith.addf %88, %89 : vector<32x64xf32>
    %91 = vector.shape_cast %90 : vector<32x64xf32> to vector<2x16x64xf32>
    %92 = vector.shape_cast %91 : vector<2x16x64xf32> to vector<32x64xf32>
    %93 = arith.truncf %92 : vector<32x64xf32> to vector<32x64xbf16>
    %cst_107 = arith.constant dense<0.000000e+00> : vector<32x64xf32>
    %94 = tpu.matmul %93, %16, %cst_107 {dimension_numbers = #tpu.dot_dimension_numbers<[1], [0], [0], [1], [0, 0, 1, 1], [], []>} : vector<32x64xbf16>, vector<64x64xbf16>, vector<32x64xf32> -> vector<32x64xf32>
    %95 = vector.broadcast %17 : vector<1x64xf32> to vector<32x64xf32>
    %96 = arith.addf %94, %95 : vector<32x64xf32>
    %cst_108 = arith.constant 0.000000e+00 : f32
    %97 = vector.broadcast %cst_108 : f32 to vector<32x64xf32>
    %98 = arith.maximumf %96, %97 : vector<32x64xf32>
    %99 = vector.shape_cast %98 : vector<32x64xf32> to vector<2x16x64xf32>
    %100 = vector.shape_cast %81 : vector<2x16x64xf32> to vector<32x64xf32>
    %cst_109 = arith.constant dense<0.000000e+00> : vector<32x128xf32>
    %101 = tpu.matmul %100, %18, %cst_109 {dimension_numbers = #tpu.dot_dimension_numbers<[1], [0], [0], [1], [0, 0, 1, 1], [], []>} : vector<32x64xf32>, vector<64x128xf32>, vector<32x128xf32> -> vector<32x128xf32>
    %102 = vector.shape_cast %99 : vector<2x16x64xf32> to vector<32x64xf32>
    %cst_110 = arith.constant dense<0.000000e+00> : vector<32x128xf32>
    %103 = tpu.matmul %102, %19, %cst_110 {dimension_numbers = #tpu.dot_dimension_numbers<[1], [0], [0], [1], [0, 0, 1, 1], [], []>} : vector<32x64xf32>, vector<64x128xf32>, vector<32x128xf32> -> vector<32x128xf32>
    %104 = arith.addf %101, %103 : vector<32x128xf32>
    %105 = vector.shape_cast %104 : vector<32x128xf32> to vector<2x16x128xf32>
    %106 = vector.shape_cast %59 : vector<2x16x128xf32> to vector<32x128xf32>
    %107 = arith.truncf %106 : vector<32x128xf32> to vector<32x128xbf16>
    %cst_111 = arith.constant dense<0.000000e+00> : vector<32x128xf32>
    %108 = tpu.matmul %107, %20, %cst_111 {dimension_numbers = #tpu.dot_dimension_numbers<[1], [0], [0], [1], [0, 0, 1, 1], [], []>} : vector<32x128xbf16>, vector<128x128xbf16>, vector<32x128xf32> -> vector<32x128xf32>
    %109 = vector.broadcast %21 : vector<1x128xf32> to vector<32x128xf32>
    %110 = arith.addf %108, %109 : vector<32x128xf32>
    %cst_112 = arith.constant 0.000000e+00 : f32
    %111 = vector.broadcast %cst_112 : f32 to vector<32x128xf32>
    %112 = arith.maximumf %110, %111 : vector<32x128xf32>
    %113 = vector.shape_cast %105 : vector<2x16x128xf32> to vector<32x128xf32>
    %114 = arith.addf %112, %113 : vector<32x128xf32>
    %115 = vector.shape_cast %114 : vector<32x128xf32> to vector<2x16x128xf32>
    %116 = vector.shape_cast %115 : vector<2x16x128xf32> to vector<32x128xf32>
    %cst_113 = arith.constant dense<0.000000e+00> : vector<16x128xf32>
    %117 = tpu.matmul %22, %116, %cst_113 {dimension_numbers = #tpu.dot_dimension_numbers<[1], [0], [0], [1], [0, 0, 1, 1], [], []>} : vector<16x32xf32>, vector<32x128xf32>, vector<16x128xf32> -> vector<16x128xf32>
    %cst_114 = arith.constant dense<0.000000e+00> : vector<16x128xf32>
    %118 = tpu.matmul %23, %116, %cst_114 {dimension_numbers = #tpu.dot_dimension_numbers<[1], [0], [0], [1], [0, 0, 1, 1], [], []>} : vector<16x32xf32>, vector<32x128xf32>, vector<16x128xf32> -> vector<16x128xf32>
    %119 = arith.maximumf %117, %118 : vector<16x128xf32>
    %cst_115 = arith.constant dense<0.000000e+00> : vector<16x64xf32>
    %120 = tpu.matmul %119, %24, %cst_115 {dimension_numbers = #tpu.dot_dimension_numbers<[1], [0], [0], [1], [0, 0, 1, 1], [], []>} : vector<16x128xf32>, vector<128x64xf32>, vector<16x64xf32> -> vector<16x64xf32>
    %cst_116 = arith.constant dense<0.000000e+00> : vector<16x64xf32>
    %121 = tpu.matmul %119, %25, %cst_116 {dimension_numbers = #tpu.dot_dimension_numbers<[1], [0], [0], [1], [0, 0, 1, 1], [], []>} : vector<16x128xf32>, vector<128x64xf32>, vector<16x64xf32> -> vector<16x64xf32>
    %122 = arith.maximumf %120, %121 : vector<16x64xf32>
    %123 = vector.shape_cast %122 : vector<16x64xf32> to vector<2x8x64xf32>
    %124 = vector.shape_cast %123 : vector<2x8x64xf32> to vector<16x64xf32>
    %125 = arith.truncf %124 : vector<16x64xf32> to vector<16x64xbf16>
    %cst_117 = arith.constant dense<0.000000e+00> : vector<16x64xf32>
    %126 = tpu.matmul %125, %26, %cst_117 {dimension_numbers = #tpu.dot_dimension_numbers<[1], [0], [0], [1], [0, 0, 1, 1], [], []>} : vector<16x64xbf16>, vector<64x64xbf16>, vector<16x64xf32> -> vector<16x64xf32>
    %127 = vector.broadcast %27 : vector<1x64xf32> to vector<16x64xf32>
    %128 = arith.addf %126, %127 : vector<16x64xf32>
    %cst_118 = arith.constant 0.000000e+00 : f32
    %129 = vector.broadcast %cst_118 : f32 to vector<16x64xf32>
    %130 = arith.maximumf %128, %129 : vector<16x64xf32>
    %131 = vector.shape_cast %130 : vector<16x64xf32> to vector<2x8x64xf32>
    %132 = vector.shape_cast %131 : vector<2x8x64xf32> to vector<16x64xf32>
    %133 = arith.truncf %132 : vector<16x64xf32> to vector<16x64xbf16>
    %cst_119 = arith.constant dense<0.000000e+00> : vector<16x64xf32>
    %134 = tpu.matmul %133, %28, %cst_119 {dimension_numbers = #tpu.dot_dimension_numbers<[1], [0], [0], [1], [0, 0, 1, 1], [], []>} : vector<16x64xbf16>, vector<64x64xbf16>, vector<16x64xf32> -> vector<16x64xf32>
    %cst_120 = arith.constant dense<0.000000e+00> : vector<16x64xf32>
    %135 = tpu.matmul %32, %134, %cst_120 {dimension_numbers = #tpu.dot_dimension_numbers<[1], [0], [0], [1], [0, 0, 1, 1], [], []>} : vector<16x16xf32>, vector<16x64xf32>, vector<16x64xf32> -> vector<16x64xf32>
    %cst_121 = arith.constant dense<0.000000e+00> : vector<16x64xf32>
    %136 = tpu.matmul %133, %29, %cst_121 {dimension_numbers = #tpu.dot_dimension_numbers<[1], [0], [0], [1], [0, 0, 1, 1], [], []>} : vector<16x64xbf16>, vector<64x64xbf16>, vector<16x64xf32> -> vector<16x64xf32>
    %137 = arith.addf %135, %136 : vector<16x64xf32>
    %cst_122 = arith.constant dense<0.000000e+00> : vector<16x64xf32>
    %138 = tpu.matmul %133, %30, %cst_122 {dimension_numbers = #tpu.dot_dimension_numbers<[1], [0], [0], [1], [0, 0, 1, 1], [], []>} : vector<16x64xbf16>, vector<64x64xbf16>, vector<16x64xf32> -> vector<16x64xf32>
    %cst_123 = arith.constant dense<0.000000e+00> : vector<16x64xf32>
    %139 = tpu.matmul %33, %138, %cst_123 {dimension_numbers = #tpu.dot_dimension_numbers<[1], [0], [0], [1], [0, 0, 1, 1], [], []>} : vector<16x16xf32>, vector<16x64xf32>, vector<16x64xf32> -> vector<16x64xf32>
    %140 = arith.addf %137, %139 : vector<16x64xf32>
    %141 = vector.broadcast %31 : vector<1x64xf32> to vector<16x64xf32>
    %142 = arith.addf %140, %141 : vector<16x64xf32>
    %cst_124 = arith.constant 0.000000e+00 : f32
    %143 = vector.broadcast %cst_124 : f32 to vector<16x64xf32>
    %144 = arith.maximumf %142, %143 : vector<16x64xf32>
    %145 = vector.shape_cast %144 : vector<16x64xf32> to vector<2x8x64xf32>
    %146 = vector.shape_cast %123 : vector<2x8x64xf32> to vector<16x64xf32>
    %147 = arith.truncf %146 : vector<16x64xf32> to vector<16x64xbf16>
    %cst_125 = arith.constant dense<0.000000e+00> : vector<16x64xf32>
    %148 = tpu.matmul %147, %34, %cst_125 {dimension_numbers = #tpu.dot_dimension_numbers<[1], [0], [0], [1], [0, 0, 1, 1], [], []>} : vector<16x64xbf16>, vector<64x64xbf16>, vector<16x64xf32> -> vector<16x64xf32>
    %149 = vector.broadcast %35 : vector<1x64xf32> to vector<16x64xf32>
    %150 = arith.addf %148, %149 : vector<16x64xf32>
    %cst_126 = arith.constant 0.000000e+00 : f32
    %151 = vector.broadcast %cst_126 : f32 to vector<16x64xf32>
    %152 = arith.maximumf %150, %151 : vector<16x64xf32>
    %153 = vector.shape_cast %145 : vector<2x8x64xf32> to vector<16x64xf32>
    %154 = arith.addf %152, %153 : vector<16x64xf32>
    %155 = vector.shape_cast %154 : vector<16x64xf32> to vector<2x8x64xf32>
    %156 = vector.shape_cast %155 : vector<2x8x64xf32> to vector<16x64xf32>
    %157 = arith.truncf %156 : vector<16x64xf32> to vector<16x64xbf16>
    %cst_127 = arith.constant dense<0.000000e+00> : vector<16x64xf32>
    %158 = tpu.matmul %157, %36, %cst_127 {dimension_numbers = #tpu.dot_dimension_numbers<[1], [0], [0], [1], [0, 0, 1, 1], [], []>} : vector<16x64xbf16>, vector<64x64xbf16>, vector<16x64xf32> -> vector<16x64xf32>
    %159 = vector.broadcast %37 : vector<1x64xf32> to vector<16x64xf32>
    %160 = arith.addf %158, %159 : vector<16x64xf32>
    %cst_128 = arith.constant 0.000000e+00 : f32
    %161 = vector.broadcast %cst_128 : f32 to vector<16x64xf32>
    %162 = arith.maximumf %160, %161 : vector<16x64xf32>
    %163 = vector.shape_cast %162 : vector<16x64xf32> to vector<2x8x64xf32>
    %164 = vector.shape_cast %145 : vector<2x8x64xf32> to vector<16x64xf32>
    %cst_129 = arith.constant dense<0.000000e+00> : vector<16x128xf32>
    %165 = tpu.matmul %164, %38, %cst_129 {dimension_numbers = #tpu.dot_dimension_numbers<[1], [0], [0], [1], [0, 0, 1, 1], [], []>} : vector<16x64xf32>, vector<64x128xf32>, vector<16x128xf32> -> vector<16x128xf32>
    %166 = vector.shape_cast %163 : vector<2x8x64xf32> to vector<16x64xf32>
    %cst_130 = arith.constant dense<0.000000e+00> : vector<16x128xf32>
    %167 = tpu.matmul %166, %39, %cst_130 {dimension_numbers = #tpu.dot_dimension_numbers<[1], [0], [0], [1], [0, 0, 1, 1], [], []>} : vector<16x64xf32>, vector<64x128xf32>, vector<16x128xf32> -> vector<16x128xf32>
    %168 = arith.addf %165, %167 : vector<16x128xf32>
    %169 = vector.shape_cast %168 : vector<16x128xf32> to vector<2x8x128xf32>
    %170 = vector.shape_cast %123 : vector<2x8x64xf32> to vector<16x64xf32>
    %171 = arith.truncf %170 : vector<16x64xf32> to vector<16x64xbf16>
    %cst_131 = arith.constant dense<0.000000e+00> : vector<16x128xf32>
    %172 = tpu.matmul %171, %40, %cst_131 {dimension_numbers = #tpu.dot_dimension_numbers<[1], [0], [0], [1], [0, 0, 1, 1], [], []>} : vector<16x64xbf16>, vector<64x128xbf16>, vector<16x128xf32> -> vector<16x128xf32>
    %173 = vector.broadcast %41 : vector<1x128xf32> to vector<16x128xf32>
    %174 = arith.addf %172, %173 : vector<16x128xf32>
    %cst_132 = arith.constant 0.000000e+00 : f32
    %175 = vector.broadcast %cst_132 : f32 to vector<16x128xf32>
    %176 = arith.maximumf %174, %175 : vector<16x128xf32>
    %177 = vector.shape_cast %169 : vector<2x8x128xf32> to vector<16x128xf32>
    %178 = arith.addf %176, %177 : vector<16x128xf32>
    %179 = vector.shape_cast %178 : vector<16x128xf32> to vector<2x8x128xf32>
    %180 = vector.shape_cast %179 : vector<2x8x128xf32> to vector<16x128xf32>
    %cst_133 = arith.constant dense<0.000000e+00> : vector<2x128xf32>
    %181 = tpu.matmul %42, %180, %cst_133 {dimension_numbers = #tpu.dot_dimension_numbers<[1], [0], [0], [1], [0, 0, 1, 1], [], []>} : vector<2x16xf32>, vector<16x128xf32>, vector<2x128xf32> -> vector<2x128xf32>
    %cst_134 = arith.constant dense<0.000000e+00> : vector<2x10xf32>
    %182 = tpu.matmul %181, %43, %cst_134 {dimension_numbers = #tpu.dot_dimension_numbers<[1], [0], [0], [1], [0, 0, 1, 1], [], []>} : vector<2x128xf32>, vector<128x10xf32>, vector<2x10xf32> -> vector<2x10xf32>
    %183 = vector.broadcast %44 : vector<1x10xf32> to vector<2x10xf32>
    %184 = arith.addf %182, %183 : vector<2x10xf32>
    %c0_135 = arith.constant 0 : index
    %c0_136 = arith.constant 0 : index
    %185 = vector.load %arg46[%c0_135, %c0_136] : memref<2x10xf32, #tpu.memory_space<vmem>>, vector<2x10xf32>
    tpu.vector_store %arg46[%c0_135, %c0_136], %184 {strides = array<i32>} : memref<2x10xf32, #tpu.memory_space<vmem>>, vector<2x10xf32>,
    return
  }
}

</mosaic_0001>

<llo_original>
// kernel: forward.1
$region0: #{forward.1}
  #allocation0 [shape = 'u32[]', space=smem, size = 0x4, offset = 0x4, fixed_abs, tag = 'smem constant byte address 0x4 - core index']
  #allocation1 [shape = 'u32[144,128]{1,0:T(1,128)}', space=vmem, size = 0x12000, scoped, tag = 'internal scratch']
  %s0 = inlined_call_operand.smem [shape: u32[47], index: -1, kind: input, shape index: {}]
  %s1 = sld [smem:[%s0]]
  %s2 = scalar_lea.smem %s0, 1
  %s3 = sld [smem:[%s2]]
  %s4 = scalar_lea.smem %s0, 2
  %s5 = sld [smem:[%s4]]
  %s6 = scalar_lea.smem %s0, 3
  %s7 = sld [smem:[%s6]]
  %s8 = scalar_lea.smem %s0, 4
  %s9 = sld [smem:[%s8]]
  %s10 = scalar_lea.smem %s0, 5
  %s11 = sld [smem:[%s10]]
  %s12 = scalar_lea.smem %s0, 6
  %s13 = sld [smem:[%s12]]
  %s14 = scalar_lea.smem %s0, 7
  %s15 = sld [smem:[%s14]]
  %s16 = scalar_lea.smem %s0, 8
  %s17 = sld [smem:[%s16]]
  %s18 = scalar_lea.smem %s0, 9
  %s19 = sld [smem:[%s18]]
  %s20 = scalar_lea.smem %s0, 10
  %s21 = sld [smem:[%s20]]
  %s22 = scalar_lea.smem %s0, 11
  %s23 = sld [smem:[%s22]]
  %s24 = scalar_lea.smem %s0, 12
  %s25 = sld [smem:[%s24]]
  %s26 = scalar_lea.smem %s0, 13
  %s27 = sld [smem:[%s26]]
  %s28 = scalar_lea.smem %s0, 14
  %s29 = sld [smem:[%s28]]
  %s30 = scalar_lea.smem %s0, 15
  %s31 = sld [smem:[%s30]]
  %s32 = scalar_lea.smem %s0, 16
  %s33 = sld [smem:[%s32]]
  %s34 = scalar_lea.smem %s0, 17
  %s35 = sld [smem:[%s34]]
  %s36 = scalar_lea.smem %s0, 18
  %s37 = sld [smem:[%s36]]
  %s38 = scalar_lea.smem %s0, 19
  %s39 = sld [smem:[%s38]]
  %s40 = scalar_lea.smem %s0, 20
  %s41 = sld [smem:[%s40]]
  %s42 = scalar_lea.smem %s0, 21
  %s43 = sld [smem:[%s42]]
  %s44 = scalar_lea.smem %s0, 22
  %s45 = sld [smem:[%s44]]
  %s46 = scalar_lea.smem %s0, 23
  %s47 = sld [smem:[%s46]]
  %s48 = scalar_lea.smem %s0, 24
  %s49 = sld [smem:[%s48]]
  %s50 = scalar_lea.smem %s0, 25
  %s51 = sld [smem:[%s50]]
  %s52 = scalar_lea.smem %s0, 26
  %s53 = sld [smem:[%s52]]
  %s54 = scalar_lea.smem %s0, 27
  %s55 = sld [smem:[%s54]]
  %s56 = scalar_lea.smem %s0, 28
  %s57 = sld [smem:[%s56]]
  %s58 = scalar_lea.smem %s0, 29
  %s59 = sld [smem:[%s58]]
  %s60 = scalar_lea.smem %s0, 30
  %s61 = sld [smem:[%s60]]
  %s62 = scalar_lea.smem %s0, 31
  %s63 = sld [smem:[%s62]]
  %s64 = scalar_lea.smem %s0, 32
  %s65 = sld [smem:[%s64]]
  %s66 = scalar_lea.smem %s0, 33
  %s67 = sld [smem:[%s66]]
  %s68 = scalar_lea.smem %s0, 34
  %s69 = sld [smem:[%s68]]
  %s70 = scalar_lea.smem %s0, 35
  %s71 = sld [smem:[%s70]]
  %s72 = scalar_lea.smem %s0, 36
  %s73 = sld [smem:[%s72]]
  %s74 = scalar_lea.smem %s0, 37
  %s75 = sld [smem:[%s74]]
  %s76 = scalar_lea.smem %s0, 38
  %s77 = sld [smem:[%s76]]
  %s78 = scalar_lea.smem %s0, 39
  %s79 = sld [smem:[%s78]]
  %s80 = scalar_lea.smem %s0, 40
  %s81 = sld [smem:[%s80]]
  %s82 = scalar_lea.smem %s0, 41
  %s83 = sld [smem:[%s82]]
  %s84 = scalar_lea.smem %s0, 42
  %s85 = sld [smem:[%s84]]
  %s86 = scalar_lea.smem %s0, 43
  %s87 = sld [smem:[%s86]]
  %s88 = scalar_lea.smem %s0, 44
  %s89 = sld [smem:[%s88]]
  %s90 = scalar_lea.smem %s0, 45
  %s91 = sld [smem:[%s90]]
  %s92 = scalar_lea.smem %s0, 46
  %s93 = sld [smem:[%s92]]
  %s94 = sld [smem:[#allocation0]]
  $region294: #{forward.1} parent=0
    _
  %s96 = ssub.s32 1, %s94
  %s97 = scalar_select 0, %s96, %s94
  $region1: #{forward.1} parent=0
    #allocation2 [shape = 'u8[12288]{0}', space=vmem, size = 0x3000, scoped, tag = 'input window, operand 2, single buffered']
    #allocation3 [shape = 's32[1]{0}', space=sflag, size = 0x4, scoped, tag = 'scoped memory for forward.1']
    #allocation4 [shape = 's32[1]{0}', space=sflag, size = 0x4, scoped, tag = 'scoped memory for forward.1']
    #allocation5 [shape = 'u8[12288]{0}', space=vmem, size = 0x3000, scoped, tag = 'input window, operand 3, single buffered']
    #allocation6 [shape = 's32[1]{0}', space=sflag, size = 0x4, scoped, tag = 'scoped memory for forward.1']
    #allocation7 [shape = 'u8[32768]{0}', space=vmem, size = 0x8000, scoped, tag = 'input window, operand 7, single buffered']
    #allocation8 [shape = 'u8[16384]{0}', space=vmem, size = 0x4000, scoped, tag = 'input window, operand 10, single buffered']
    #allocation9 [shape = 's32[1]{0}', space=sflag, size = 0x4, scoped, tag = 'scoped memory for forward.1']
    #allocation10 [shape = 'u8[16384]{0}', space=vmem, size = 0x4000, scoped, tag = 'input window, operand 11, single buffered']
    #allocation11 [shape = 'u8[32768]{0}', space=vmem, size = 0x8000, scoped, tag = 'input window, operand 15, single buffered']
    #allocation12 [shape = 's32[1]{0}', space=sflag, size = 0x4, scoped, tag = 'scoped memory for forward.1']
    #allocation13 [shape = 'u8[16384]{0}', space=vmem, size = 0x4000, scoped, tag = 'input window, operand 17, single buffered']
    #allocation14 [shape = 'u8[32768]{0}', space=vmem, size = 0x8000, scoped, tag = 'input window, operand 19, single buffered']
    #allocation15 [shape = 's32[1]{0}', space=sflag, size = 0x4, scoped, tag = 'scoped memory for forward.1']
    #allocation16 [shape = 'u8[32768]{0}', space=vmem, size = 0x8000, scoped, tag = 'input window, operand 20, single buffered']
    #allocation17 [shape = 'u8[32768]{0}', space=vmem, size = 0x8000, scoped, tag = 'input window, operand 21, single buffered']
    #allocation18 [shape = 's32[1]{0}', space=sflag, size = 0x4, scoped, tag = 'scoped memory for forward.1']
    #allocation19 [shape = 'u8[8192]{0}', space=vmem, size = 0x2000, scoped, tag = 'input window, operand 23, single buffered']
    #allocation20 [shape = 'u8[8192]{0}', space=vmem, size = 0x2000, scoped, tag = 'input window, operand 24, single buffered']
    #allocation21 [shape = 's32[1]{0}', space=sflag, size = 0x4, scoped, tag = 'scoped memory for forward.1']
    #allocation22 [shape = 'u8[16384]{0}', space=vmem, size = 0x4000, scoped, tag = 'input window, operand 27, single buffered']
    #allocation23 [shape = 'u8[16384]{0}', space=vmem, size = 0x4000, scoped, tag = 'input window, operand 29, single buffered']
    #allocation24 [shape = 's32[1]{0}', space=sflag, size = 0x4, scoped, tag = 'scoped memory for forward.1']
    #allocation25 [shape = 'u8[16384]{0}', space=vmem, size = 0x4000, scoped, tag = 'input window, operand 30, single buffered']
    #allocation26 [shape = 'u8[16384]{0}', space=vmem, size = 0x4000, scoped, tag = 'input window, operand 31, single buffered']
    #allocation27 [shape = 's32[1]{0}', space=sflag, size = 0x4, scoped, tag = 'scoped memory for forward.1']
    #allocation28 [shape = 'u8[8192]{0}', space=vmem, size = 0x2000, scoped, tag = 'input window, operand 33, single buffered']
    #allocation29 [shape = 'u8[8192]{0}', space=vmem, size = 0x2000, scoped, tag = 'input window, operand 34, single buffered']
    #allocation30 [shape = 's32[1]{0}', space=sflag, size = 0x4, scoped, tag = 'scoped memory for forward.1']
    #allocation31 [shape = 'u8[16384]{0}', space=vmem, size = 0x4000, scoped, tag = 'input window, operand 35, single buffered']
    #allocation32 [shape = 'u8[16384]{0}', space=vmem, size = 0x4000, scoped, tag = 'input window, operand 37, single buffered']
    #allocation33 [shape = 's32[1]{0}', space=sflag, size = 0x4, scoped, tag = 'scoped memory for forward.1']
    #allocation34 [shape = 'u8[32768]{0}', space=vmem, size = 0x8000, scoped, tag = 'input window, operand 39, single buffered']
    #allocation35 [shape = 'u8[32768]{0}', space=vmem, size = 0x8000, scoped, tag = 'input window, operand 40, single buffered']
    #allocation36 [shape = 's32[1]{0}', space=sflag, size = 0x4, scoped, tag = 'scoped memory for forward.1']
    #allocation37 [shape = 'u8[16384]{0}', space=vmem, size = 0x4000, scoped, tag = 'input window, operand 41, single buffered']
    #allocation38 [shape = 'u8[1024]{0}', space=vmem, size = 0x400, scoped, tag = 'input window, operand 43, single buffered']
    #allocation39 [shape = 's32[1]{0}', space=sflag, size = 0x4, scoped, tag = 'scoped memory for forward.1']
    #allocation40 [shape = 'u8[65536]{0}', space=vmem, size = 0x10000, scoped, tag = 'input window, operand 44, single buffered']
    #allocation41 [shape = 'u8[1024]{0}', space=vmem, size = 0x400, scoped, tag = 'output window, operand 0, single buffered']
    %98 = vsyncpa [#allocation3], 0
    %99 = vsyncpa [#allocation6], 0
    %100 = vsyncpa [#allocation9], 0
    %101 = vsyncpa [#allocation12], 0
    %102 = vsyncpa [#allocation15], 0
    %103 = vsyncpa [#allocation18], 0
    %104 = vsyncpa [#allocation21], 0
    %105 = vsyncpa [#allocation24], 0
    %106 = vsyncpa [#allocation27], 0
    %107 = vsyncpa [#allocation30], 0
    %108 = vsyncpa [#allocation33], 0
    %109 = vsyncpa [#allocation36], 0
    %110 = vsyncpa [#allocation39], 0
    %111 = vsyncpa [#allocation4], 0
    // Predicated region
    $region2: #{forward.1} parent=1 // pred_check
      _
    $region3: #{forward.1} parent=1 // pred_check_branch
      %113 = sbr.rel (0) target = $region5
    $region4: #{forward.1} parent=1 // pred_region
      _
    $region5: #{forward.1} parent=1 // pred_fallthru
      _
    // Predicated region
    $region6: #{forward.1} parent=1 // pred_check
      _
    $region7: #{forward.1} parent=1 // pred_check_branch
      %115 = sbr.rel (0) target = $region9
    $region8: #{forward.1} parent=1 // pred_region
      _
    $region9: #{forward.1} parent=1 // pred_fallthru
      _
    // Predicated region
    $region10: #{forward.1} parent=1 // pred_check
      _
    $region11: #{forward.1} parent=1 // pred_check_branch
      %117 = sbr.rel (0) target = $region13
    $region12: #{forward.1} parent=1 // pred_region
      %s119 = ssub.s32 384, 384
      %120 = vsyncadd [#allocation3], %s119
      %s121 = sshll.u32 [#allocation2], 4
      %s122 = int_to_ptr.vmem [resolvable:$true] %s121
      %127 = dma.hbm_to_vmem [thread:$0]  %s5, 384, %s122, [#allocation3], 64, 64, 4
    $region13: #{forward.1} parent=1 // pred_fallthru
      _
    // Predicated region
    $region14: #{forward.1} parent=1 // pred_check
      _
    $region15: #{forward.1} parent=1 // pred_check_branch
      %129 = sbr.rel (0) target = $region17
    $region16: #{forward.1} parent=1 // pred_region
      %s131 = ssub.s32 384, 384
      %132 = vsyncadd [#allocation6], %s131
      %s133 = sshll.u32 [#allocation5], 4
      %s134 = int_to_ptr.vmem [resolvable:$true] %s133
      %139 = dma.hbm_to_vmem [thread:$0]  %s7, 384, %s134, [#allocation6], 64, 64, 4
    $region17: #{forward.1} parent=1 // pred_fallthru
      _
    // Predicated region
    $region18: #{forward.1} parent=1 // pred_check
      _
    $region19: #{forward.1} parent=1 // pred_check_branch
      %141 = sbr.rel (0) target = $region21
    $region20: #{forward.1} parent=1 // pred_region
      _
    $region21: #{forward.1} parent=1 // pred_fallthru
      _
    // Predicated region
    $region22: #{forward.1} parent=1 // pred_check
      _
    $region23: #{forward.1} parent=1 // pred_check_branch
      %143 = sbr.rel (0) target = $region25
    $region24: #{forward.1} parent=1 // pred_region
      _
    $region25: #{forward.1} parent=1 // pred_fallthru
      _
    // Predicated region
    $region26: #{forward.1} parent=1 // pred_check
      _
    $region27: #{forward.1} parent=1 // pred_check_branch
      %145 = sbr.rel (0) target = $region29
    $region28: #{forward.1} parent=1 // pred_region
      _
    $region29: #{forward.1} parent=1 // pred_fallthru
      _
    // Predicated region
    $region30: #{forward.1} parent=1 // pred_check
      _
    $region31: #{forward.1} parent=1 // pred_check_branch
      %147 = sbr.rel (0) target = $region33
    $region32: #{forward.1} parent=1 // pred_region
      %s149 = ssub.s32 1024, 1024
      %150 = vsyncadd [#allocation6], %s149
      %s151 = sshll.u32 [#allocation7], 4
      %s152 = int_to_ptr.vmem [resolvable:$true] %s151
      %157 = dma.hbm_to_vmem [thread:$0]  %s15, 1024, %s152, [#allocation6], 64, 64, 4
    $region33: #{forward.1} parent=1 // pred_fallthru
      _
    // Predicated region
    $region34: #{forward.1} parent=1 // pred_check
      _
    $region35: #{forward.1} parent=1 // pred_check_branch
      %159 = sbr.rel (0) target = $region37
    $region36: #{forward.1} parent=1 // pred_region
      _
    $region37: #{forward.1} parent=1 // pred_fallthru
      _
    // Predicated region
    $region38: #{forward.1} parent=1 // pred_check
      _
    $region39: #{forward.1} parent=1 // pred_check_branch
      %161 = sbr.rel (0) target = $region41
    $region40: #{forward.1} parent=1 // pred_region
      _
    $region41: #{forward.1} parent=1 // pred_fallthru
      _
    // Predicated region
    $region42: #{forward.1} parent=1 // pred_check
      _
    $region43: #{forward.1} parent=1 // pred_check_branch
      %163 = sbr.rel (0) target = $region45
    $region44: #{forward.1} parent=1 // pred_region
      %s165 = ssub.s32 512, 512
      %166 = vsyncadd [#allocation9], %s165
      %s167 = sshll.u32 [#allocation8], 4
      %s168 = int_to_ptr.vmem [resolvable:$true] %s167
      %173 = dma.hbm_to_vmem [thread:$0]  %s21, 512, %s168, [#allocation9], 64, 64, 4
    $region45: #{forward.1} parent=1 // pred_fallthru
      _
    // Predicated region
    $region46: #{forward.1} parent=1 // pred_check
      _
    $region47: #{forward.1} parent=1 // pred_check_branch
      %175 = sbr.rel (0) target = $region49
    $region48: #{forward.1} parent=1 // pred_region
      %s177 = ssub.s32 512, 512
      %178 = vsyncadd [#allocation9], %s177
      %s179 = sshll.u32 [#allocation10], 4
      %s180 = int_to_ptr.vmem [resolvable:$true] %s179
      %185 = dma.hbm_to_vmem [thread:$0]  %s23, 512, %s180, [#allocation9], 64, 64, 4
    $region49: #{forward.1} parent=1 // pred_fallthru
      _
    // Predicated region
    $region50: #{forward.1} parent=1 // pred_check
      _
    $region51: #{forward.1} parent=1 // pred_check_branch
      %187 = sbr.rel (0) target = $region53
    $region52: #{forward.1} parent=1 // pred_region
      _
    $region53: #{forward.1} parent=1 // pred_fallthru
      _
    // Predicated region
    $region54: #{forward.1} parent=1 // pred_check
      _
    $region55: #{forward.1} parent=1 // pred_check_branch
      %189 = sbr.rel (0) target = $region57
    $region56: #{forward.1} parent=1 // pred_region
      _
    $region57: #{forward.1} parent=1 // pred_fallthru
      _
    // Predicated region
    $region58: #{forward.1} parent=1 // pred_check
      _
    $region59: #{forward.1} parent=1 // pred_check_branch
      %191 = sbr.rel (0) target = $region61
    $region60: #{forward.1} parent=1 // pred_region
      _
    $region61: #{forward.1} parent=1 // pred_fallthru
      _
    // Predicated region
    $region62: #{forward.1} parent=1 // pred_check
      _
    $region63: #{forward.1} parent=1 // pred_check_branch
      %193 = sbr.rel (0) target = $region65
    $region64: #{forward.1} parent=1 // pred_region
      %s195 = ssub.s32 1024, 1024
      %196 = vsyncadd [#allocation12], %s195
      %s197 = sshll.u32 [#allocation11], 4
      %s198 = int_to_ptr.vmem [resolvable:$true] %s197
      %203 = dma.hbm_to_vmem [thread:$0]  %s31, 1024, %s198, [#allocation12], 64, 64, 4
    $region65: #{forward.1} parent=1 // pred_fallthru
      _
    // Predicated region
    $region66: #{forward.1} parent=1 // pred_check
      _
    $region67: #{forward.1} parent=1 // pred_check_branch
      %205 = sbr.rel (0) target = $region69
    $region68: #{forward.1} parent=1 // pred_region
      _
    $region69: #{forward.1} parent=1 // pred_fallthru
      _
    // Predicated region
    $region70: #{forward.1} parent=1 // pred_check
      _
    $region71: #{forward.1} parent=1 // pred_check_branch
      %207 = sbr.rel (0) target = $region73
    $region72: #{forward.1} parent=1 // pred_region
      %s209 = ssub.s32 512, 512
      %210 = vsyncadd [#allocation12], %s209
      %s211 = sshll.u32 [#allocation13], 4
      %s212 = int_to_ptr.vmem [resolvable:$true] %s211
      %217 = dma.hbm_to_vmem [thread:$0]  %s35, 512, %s212, [#allocation12], 64, 64, 4
    $region73: #{forward.1} parent=1 // pred_fallthru
      _
    // Predicated region
    $region74: #{forward.1} parent=1 // pred_check
      _
    $region75: #{forward.1} parent=1 // pred_check_branch
      %219 = sbr.rel (0) target = $region77
    $region76: #{forward.1} parent=1 // pred_region
      _
    $region77: #{forward.1} parent=1 // pred_fallthru
      _
    // Predicated region
    $region78: #{forward.1} parent=1 // pred_check
      _
    $region79: #{forward.1} parent=1 // pred_check_branch
      %221 = sbr.rel (0) target = $region81
    $region80: #{forward.1} parent=1 // pred_region
      %s223 = ssub.s32 1024, 1024
      %224 = vsyncadd [#allocation15], %s223
      %s225 = sshll.u32 [#allocation14], 4
      %s226 = int_to_ptr.vmem [resolvable:$true] %s225
      %231 = dma.hbm_to_vmem [thread:$0]  %s39, 1024, %s226, [#allocation15], 128, 128, 8
    $region81: #{forward.1} parent=1 // pred_fallthru
      _
    // Predicated region
    $region82: #{forward.1} parent=1 // pred_check
      _
    $region83: #{forward.1} parent=1 // pred_check_branch
      %233 = sbr.rel (0) target = $region85
    $region84: #{forward.1} parent=1 // pred_region
      %s235 = ssub.s32 1024, 1024
      %236 = vsyncadd [#allocation15], %s235
      %s237 = sshll.u32 [#allocation16], 4
      %s238 = int_to_ptr.vmem [resolvable:$true] %s237
      %243 = dma.hbm_to_vmem [thread:$0]  %s41, 1024, %s238, [#allocation15], 128, 128, 8
    $region85: #{forward.1} parent=1 // pred_fallthru
      _
    // Predicated region
    $region86: #{forward.1} parent=1 // pred_check
      _
    $region87: #{forward.1} parent=1 // pred_check_branch
      %245 = sbr.rel (0) target = $region89
    $region88: #{forward.1} parent=1 // pred_region
      %s247 = ssub.s32 1024, 1024
      %248 = vsyncadd [#allocation18], %s247
      %s249 = sshll.u32 [#allocation17], 4
      %s250 = int_to_ptr.vmem [resolvable:$true] %s249
      %255 = dma.hbm_to_vmem [thread:$0]  %s43, 1024, %s250, [#allocation18], 64, 64, 4
    $region89: #{forward.1} parent=1 // pred_fallthru
      _
    // Predicated region
    $region90: #{forward.1} parent=1 // pred_check
      _
    $region91: #{forward.1} parent=1 // pred_check_branch
      %257 = sbr.rel (0) target = $region93
    $region92: #{forward.1} parent=1 // pred_region
      _
    $region93: #{forward.1} parent=1 // pred_fallthru
      _
    // Predicated region
    $region94: #{forward.1} parent=1 // pred_check
      _
    $region95: #{forward.1} parent=1 // pred_check_branch
      %259 = sbr.rel (0) target = $region97
    $region96: #{forward.1} parent=1 // pred_region
      %s261 = ssub.s32 256, 256
      %262 = vsyncadd [#allocation18], %s261
      %s263 = sshll.u32 [#allocation19], 4
      %s264 = int_to_ptr.vmem [resolvable:$true] %s263
      %269 = dma.hbm_to_vmem [thread:$0]  %s47, 256, %s264, [#allocation18], 128, 128, 8
    $region97: #{forward.1} parent=1 // pred_fallthru
      _
    // Predicated region
    $region98: #{forward.1} parent=1 // pred_check
      _
    $region99: #{forward.1} parent=1 // pred_check_branch
      %271 = sbr.rel (0) target = $region101
    $region100: #{forward.1} parent=1 // pred_region
      %s273 = ssub.s32 256, 256
      %274 = vsyncadd [#allocation21], %s273
      %s275 = sshll.u32 [#allocation20], 4
      %s276 = int_to_ptr.vmem [resolvable:$true] %s275
      %281 = dma.hbm_to_vmem [thread:$0]  %s49, 256, %s276, [#allocation21], 128, 128, 8
    $region101: #{forward.1} parent=1 // pred_fallthru
      _
    // Predicated region
    $region102: #{forward.1} parent=1 // pred_check
      _
    $region103: #{forward.1} parent=1 // pred_check_branch
      %283 = sbr.rel (0) target = $region105
    $region104: #{forward.1} parent=1 // pred_region
      _
    $region105: #{forward.1} parent=1 // pred_fallthru
      _
    // Predicated region
    $region106: #{forward.1} parent=1 // pred_check
      _
    $region107: #{forward.1} parent=1 // pred_check_branch
      %285 = sbr.rel (0) target = $region109
    $region108: #{forward.1} parent=1 // pred_region
      _
    $region109: #{forward.1} parent=1 // pred_fallthru
      _
    // Predicated region
    $region110: #{forward.1} parent=1 // pred_check
      _
    $region111: #{forward.1} parent=1 // pred_check_branch
      %287 = sbr.rel (0) target = $region113
    $region112: #{forward.1} parent=1 // pred_region
      %s289 = ssub.s32 512, 512
      %290 = vsyncadd [#allocation21], %s289
      %s291 = sshll.u32 [#allocation22], 4
      %s292 = int_to_ptr.vmem [resolvable:$true] %s291
      %297 = dma.hbm_to_vmem [thread:$0]  %s55, 512, %s292, [#allocation21], 64, 64, 4
    $region113: #{forward.1} parent=1 // pred_fallthru
      _
    // Predicated region
    $region114: #{forward.1} parent=1 // pred_check
      _
    $region115: #{forward.1} parent=1 // pred_check_branch
      %299 = sbr.rel (0) target = $region117
    $region116: #{forward.1} parent=1 // pred_region
      _
    $region117: #{forward.1} parent=1 // pred_fallthru
      _
    // Predicated region
    $region118: #{forward.1} parent=1 // pred_check
      _
    $region119: #{forward.1} parent=1 // pred_check_branch
      %301 = sbr.rel (0) target = $region121
    $region120: #{forward.1} parent=1 // pred_region
      %s303 = ssub.s32 512, 512
      %304 = vsyncadd [#allocation24], %s303
      %s305 = sshll.u32 [#allocation23], 4
      %s306 = int_to_ptr.vmem [resolvable:$true] %s305
      %311 = dma.hbm_to_vmem [thread:$0]  %s59, 512, %s306, [#allocation24], 64, 64, 4
    $region121: #{forward.1} parent=1 // pred_fallthru
      _
    // Predicated region
    $region122: #{forward.1} parent=1 // pred_check
      _
    $region123: #{forward.1} parent=1 // pred_check_branch
      %313 = sbr.rel (0) target = $region125
    $region124: #{forward.1} parent=1 // pred_region
      %s315 = ssub.s32 512, 512
      %316 = vsyncadd [#allocation24], %s315
      %s317 = sshll.u32 [#allocation25], 4
      %s318 = int_to_ptr.vmem [resolvable:$true] %s317
      %323 = dma.hbm_to_vmem [thread:$0]  %s61, 512, %s318, [#allocation24], 64, 64, 4
    $region125: #{forward.1} parent=1 // pred_fallthru
      _
    // Predicated region
    $region126: #{forward.1} parent=1 // pred_check
      _
    $region127: #{forward.1} parent=1 // pred_check_branch
      %325 = sbr.rel (0) target = $region129
    $region128: #{forward.1} parent=1 // pred_region
      %s327 = ssub.s32 512, 512
      %328 = vsyncadd [#allocation27], %s327
      %s329 = sshll.u32 [#allocation26], 4
      %s330 = int_to_ptr.vmem [resolvable:$true] %s329
      %335 = dma.hbm_to_vmem [thread:$0]  %s63, 512, %s330, [#allocation27], 64, 64, 4
    $region129: #{forward.1} parent=1 // pred_fallthru
      _
    // Predicated region
    $region130: #{forward.1} parent=1 // pred_check
      _
    $region131: #{forward.1} parent=1 // pred_check_branch
      %337 = sbr.rel (0) target = $region133
    $region132: #{forward.1} parent=1 // pred_region
      _
    $region133: #{forward.1} parent=1 // pred_fallthru
      _
    // Predicated region
    $region134: #{forward.1} parent=1 // pred_check
      _
    $region135: #{forward.1} parent=1 // pred_check_branch
      %339 = sbr.rel (0) target = $region137
    $region136: #{forward.1} parent=1 // pred_region
      %s341 = ssub.s32 256, 256
      %342 = vsyncadd [#allocation27], %s341
      %s343 = sshll.u32 [#allocation28], 4
      %s344 = int_to_ptr.vmem [resolvable:$true] %s343
      %349 = dma.hbm_to_vmem [thread:$0]  %s67, 256, %s344, [#allocation27], 128, 128, 8
    $region137: #{forward.1} parent=1 // pred_fallthru
      _
    // Predicated region
    $region138: #{forward.1} parent=1 // pred_check
      _
    $region139: #{forward.1} parent=1 // pred_check_branch
      %351 = sbr.rel (0) target = $region141
    $region140: #{forward.1} parent=1 // pred_region
      %s353 = ssub.s32 256, 256
      %354 = vsyncadd [#allocation30], %s353
      %s355 = sshll.u32 [#allocation29], 4
      %s356 = int_to_ptr.vmem [resolvable:$true] %s355
      %361 = dma.hbm_to_vmem [thread:$0]  %s69, 256, %s356, [#allocation30], 128, 128, 8
    $region141: #{forward.1} parent=1 // pred_fallthru
      _
    // Predicated region
    $region142: #{forward.1} parent=1 // pred_check
      _
    $region143: #{forward.1} parent=1 // pred_check_branch
      %363 = sbr.rel (0) target = $region145
    $region144: #{forward.1} parent=1 // pred_region
      %s365 = ssub.s32 512, 512
      %366 = vsyncadd [#allocation30], %s365
      %s367 = sshll.u32 [#allocation31], 4
      %s368 = int_to_ptr.vmem [resolvable:$true] %s367
      %373 = dma.hbm_to_vmem [thread:$0]  %s71, 512, %s368, [#allocation30], 64, 64, 4
    $region145: #{forward.1} parent=1 // pred_fallthru
      _
    // Predicated region
    $region146: #{forward.1} parent=1 // pred_check
      _
    $region147: #{forward.1} parent=1 // pred_check_branch
      %375 = sbr.rel (0) target = $region149
    $region148: #{forward.1} parent=1 // pred_region
      _
    $region149: #{forward.1} parent=1 // pred_fallthru
      _
    // Predicated region
    $region150: #{forward.1} parent=1 // pred_check
      _
    $region151: #{forward.1} parent=1 // pred_check_branch
      %377 = sbr.rel (0) target = $region153
    $region152: #{forward.1} parent=1 // pred_region
      %s379 = ssub.s32 512, 512
      %380 = vsyncadd [#allocation33], %s379
      %s381 = sshll.u32 [#allocation32], 4
      %s382 = int_to_ptr.vmem [resolvable:$true] %s381
      %387 = dma.hbm_to_vmem [thread:$0]  %s75, 512, %s382, [#allocation33], 64, 64, 4
    $region153: #{forward.1} parent=1 // pred_fallthru
      _
    // Predicated region
    $region154: #{forward.1} parent=1 // pred_check
      _
    $region155: #{forward.1} parent=1 // pred_check_branch
      %389 = sbr.rel (0) target = $region157
    $region156: #{forward.1} parent=1 // pred_region
      _
    $region157: #{forward.1} parent=1 // pred_fallthru
      _
    // Predicated region
    $region158: #{forward.1} parent=1 // pred_check
      _
    $region159: #{forward.1} parent=1 // pred_check_branch
      %391 = sbr.rel (0) target = $region161
    $region160: #{forward.1} parent=1 // pred_region
      %s393 = ssub.s32 1024, 1024
      %394 = vsyncadd [#allocation33], %s393
      %s395 = sshll.u32 [#allocation34], 4
      %s396 = int_to_ptr.vmem [resolvable:$true] %s395
      %401 = dma.hbm_to_vmem [thread:$0]  %s79, 1024, %s396, [#allocation33], 128, 128, 8
    $region161: #{forward.1} parent=1 // pred_fallthru
      _
    // Predicated region
    $region162: #{forward.1} parent=1 // pred_check
      _
    $region163: #{forward.1} parent=1 // pred_check_branch
      %403 = sbr.rel (0) target = $region165
    $region164: #{forward.1} parent=1 // pred_region
      %s405 = ssub.s32 1024, 1024
      %406 = vsyncadd [#allocation36], %s405
      %s407 = sshll.u32 [#allocation35], 4
      %s408 = int_to_ptr.vmem [resolvable:$true] %s407
      %413 = dma.hbm_to_vmem [thread:$0]  %s81, 1024, %s408, [#allocation36], 128, 128, 8
    $region165: #{forward.1} parent=1 // pred_fallthru
      _
    // Predicated region
    $region166: #{forward.1} parent=1 // pred_check
      _
    $region167: #{forward.1} parent=1 // pred_check_branch
      %415 = sbr.rel (0) target = $region169
    $region168: #{forward.1} parent=1 // pred_region
      %s417 = ssub.s32 512, 512
      %418 = vsyncadd [#allocation36], %s417
      %s419 = sshll.u32 [#allocation37], 4
      %s420 = int_to_ptr.vmem [resolvable:$true] %s419
      %425 = dma.hbm_to_vmem [thread:$0]  %s83, 512, %s420, [#allocation36], 64, 64, 4
    $region169: #{forward.1} parent=1 // pred_fallthru
      _
    // Predicated region
    $region170: #{forward.1} parent=1 // pred_check
      _
    $region171: #{forward.1} parent=1 // pred_check_branch
      %427 = sbr.rel (0) target = $region173
    $region172: #{forward.1} parent=1 // pred_region
      _
    $region173: #{forward.1} parent=1 // pred_fallthru
      _
    // Predicated region
    $region174: #{forward.1} parent=1 // pred_check
      _
    $region175: #{forward.1} parent=1 // pred_check_branch
      %429 = sbr.rel (0) target = $region177
    $region176: #{forward.1} parent=1 // pred_region
      %s431 = ssub.s32 32, 32
      %432 = vsyncadd [#allocation39], %s431
      %s434 = sshll.u32 [#allocation38], 4
      %s435 = int_to_ptr.vmem [resolvable:$true] %s434
      %437 = dma.hbm_to_vmem [thread:$0]  %s87, 32, %s435, [#allocation39]
    $region177: #{forward.1} parent=1 // pred_fallthru
      _
    // Predicated region
    $region178: #{forward.1} parent=1 // pred_check
      _
    $region179: #{forward.1} parent=1 // pred_check_branch
      %439 = sbr.rel (0) target = $region181
    $region180: #{forward.1} parent=1 // pred_region
      %s441 = ssub.s32 2048, 2048
      %442 = vsyncadd [#allocation39], %s441
      %s443 = sshll.u32 [#allocation40], 4
      %s444 = int_to_ptr.vmem [resolvable:$true] %s443
      %449 = dma.hbm_to_vmem [thread:$0]  %s89, 2048, %s444, [#allocation39], 128, 128, 8
    $region181: #{forward.1} parent=1 // pred_fallthru
      _
    // Predicated region
    $region182: #{forward.1} parent=1 // pred_check
      _
    $region183: #{forward.1} parent=1 // pred_check_branch
      %451 = sbr.rel (0) target = $region185
    $region184: #{forward.1} parent=1 // pred_region
      _
    $region185: #{forward.1} parent=1 // pred_fallthru
      _
    // Predicated region
    $region186: #{forward.1} parent=1 // pred_check
      _
    $region187: #{forward.1} parent=1 // pred_check_branch
      %453 = sbr.rel (0) target = $region189
    $region188: #{forward.1} parent=1 // pred_region
      %454 = dma.done [#allocation3], 384
    $region189: #{forward.1} parent=1 // pred_fallthru
      _
    // Predicated region
    $region190: #{forward.1} parent=1 // pred_check
      _
    $region191: #{forward.1} parent=1 // pred_check_branch
      %456 = sbr.rel (0) target = $region193
    $region192: #{forward.1} parent=1 // pred_region
      %457 = dma.done [#allocation6], 384
    $region193: #{forward.1} parent=1 // pred_fallthru
      _
    // Predicated region
    $region194: #{forward.1} parent=1 // pred_check
      _
    $region195: #{forward.1} parent=1 // pred_check_branch
      %459 = sbr.rel (0) target = $region197
    $region196: #{forward.1} parent=1 // pred_region
      %460 = dma.done [#allocation6], 1024
    $region197: #{forward.1} parent=1 // pred_fallthru
      _
    // Predicated region
    $region198: #{forward.1} parent=1 // pred_check
      _
    $region199: #{forward.1} parent=1 // pred_check_branch
      %462 = sbr.rel (0) target = $region201
    $region200: #{forward.1} parent=1 // pred_region
      %463 = dma.done [#allocation9], 512
    $region201: #{forward.1} parent=1 // pred_fallthru
      _
    // Predicated region
    $region202: #{forward.1} parent=1 // pred_check
      _
    $region203: #{forward.1} parent=1 // pred_check_branch
      %465 = sbr.rel (0) target = $region205
    $region204: #{forward.1} parent=1 // pred_region
      %466 = dma.done [#allocation9], 512
    $region205: #{forward.1} parent=1 // pred_fallthru
      _
    // Predicated region
    $region206: #{forward.1} parent=1 // pred_check
      _
    $region207: #{forward.1} parent=1 // pred_check_branch
      %468 = sbr.rel (0) target = $region209
    $region208: #{forward.1} parent=1 // pred_region
      %469 = dma.done [#allocation12], 1024
    $region209: #{forward.1} parent=1 // pred_fallthru
      _
    // Predicated region
    $region210: #{forward.1} parent=1 // pred_check
      _
    $region211: #{forward.1} parent=1 // pred_check_branch
      %471 = sbr.rel (0) target = $region213
    $region212: #{forward.1} parent=1 // pred_region
      %472 = dma.done [#allocation12], 512
    $region213: #{forward.1} parent=1 // pred_fallthru
      _
    // Predicated region
    $region214: #{forward.1} parent=1 // pred_check
      _
    $region215: #{forward.1} parent=1 // pred_check_branch
      %474 = sbr.rel (0) target = $region217
    $region216: #{forward.1} parent=1 // pred_region
      %475 = dma.done [#allocation15], 1024
    $region217: #{forward.1} parent=1 // pred_fallthru
      _
    // Predicated region
    $region218: #{forward.1} parent=1 // pred_check
      _
    $region219: #{forward.1} parent=1 // pred_check_branch
      %477 = sbr.rel (0) target = $region221
    $region220: #{forward.1} parent=1 // pred_region
      %478 = dma.done [#allocation15], 1024
    $region221: #{forward.1} parent=1 // pred_fallthru
      _
    // Predicated region
    $region222: #{forward.1} parent=1 // pred_check
      _
    $region223: #{forward.1} parent=1 // pred_check_branch
      %480 = sbr.rel (0) target = $region225
    $region224: #{forward.1} parent=1 // pred_region
      %481 = dma.done [#allocation18], 1024
    $region225: #{forward.1} parent=1 // pred_fallthru
      _
    // Predicated region
    $region226: #{forward.1} parent=1 // pred_check
      _
    $region227: #{forward.1} parent=1 // pred_check_branch
      %483 = sbr.rel (0) target = $region229
    $region228: #{forward.1} parent=1 // pred_region
      %484 = dma.done [#allocation18], 256
    $region229: #{forward.1} parent=1 // pred_fallthru
      _
    // Predicated region
    $region230: #{forward.1} parent=1 // pred_check
      _
    $region231: #{forward.1} parent=1 // pred_check_branch
      %486 = sbr.rel (0) target = $region233
    $region232: #{forward.1} parent=1 // pred_region
      %487 = dma.done [#allocation21], 256
    $region233: #{forward.1} parent=1 // pred_fallthru
      _
    // Predicated region
    $region234: #{forward.1} parent=1 // pred_check
      _
    $region235: #{forward.1} parent=1 // pred_check_branch
      %489 = sbr.rel (0) target = $region237
    $region236: #{forward.1} parent=1 // pred_region
      %490 = dma.done [#allocation21], 512
    $region237: #{forward.1} parent=1 // pred_fallthru
      _
    // Predicated region
    $region238: #{forward.1} parent=1 // pred_check
      _
    $region239: #{forward.1} parent=1 // pred_check_branch
      %492 = sbr.rel (0) target = $region241
    $region240: #{forward.1} parent=1 // pred_region
      %493 = dma.done [#allocation24], 512
    $region241: #{forward.1} parent=1 // pred_fallthru
      _
    // Predicated region
    $region242: #{forward.1} parent=1 // pred_check
      _
    $region243: #{forward.1} parent=1 // pred_check_branch
      %495 = sbr.rel (0) target = $region245
    $region244: #{forward.1} parent=1 // pred_region
      %496 = dma.done [#allocation24], 512
    $region245: #{forward.1} parent=1 // pred_fallthru
      _
    // Predicated region
    $region246: #{forward.1} parent=1 // pred_check
      _
    $region247: #{forward.1} parent=1 // pred_check_branch
      %498 = sbr.rel (0) target = $region249
    $region248: #{forward.1} parent=1 // pred_region
      %499 = dma.done [#allocation27], 512
    $region249: #{forward.1} parent=1 // pred_fallthru
      _
    // Predicated region
    $region250: #{forward.1} parent=1 // pred_check
      _
    $region251: #{forward.1} parent=1 // pred_check_branch
      %501 = sbr.rel (0) target = $region253
    $region252: #{forward.1} parent=1 // pred_region
      %502 = dma.done [#allocation27], 256
    $region253: #{forward.1} parent=1 // pred_fallthru
      _
    // Predicated region
    $region254: #{forward.1} parent=1 // pred_check
      _
    $region255: #{forward.1} parent=1 // pred_check_branch
      %504 = sbr.rel (0) target = $region257
    $region256: #{forward.1} parent=1 // pred_region
      %505 = dma.done [#allocation30], 256
    $region257: #{forward.1} parent=1 // pred_fallthru
      _
    // Predicated region
    $region258: #{forward.1} parent=1 // pred_check
      _
    $region259: #{forward.1} parent=1 // pred_check_branch
      %507 = sbr.rel (0) target = $region261
    $region260: #{forward.1} parent=1 // pred_region
      %508 = dma.done [#allocation30], 512
    $region261: #{forward.1} parent=1 // pred_fallthru
      _
    // Predicated region
    $region262: #{forward.1} parent=1 // pred_check
      _
    $region263: #{forward.1} parent=1 // pred_check_branch
      %510 = sbr.rel (0) target = $region265
    $region264: #{forward.1} parent=1 // pred_region
      %511 = dma.done [#allocation33], 512
    $region265: #{forward.1} parent=1 // pred_fallthru
      _
    // Predicated region
    $region266: #{forward.1} parent=1 // pred_check
      _
    $region267: #{forward.1} parent=1 // pred_check_branch
      %513 = sbr.rel (0) target = $region269
    $region268: #{forward.1} parent=1 // pred_region
      %514 = dma.done [#allocation33], 1024
    $region269: #{forward.1} parent=1 // pred_fallthru
      _
    // Predicated region
    $region270: #{forward.1} parent=1 // pred_check
      _
    $region271: #{forward.1} parent=1 // pred_check_branch
      %516 = sbr.rel (0) target = $region273
    $region272: #{forward.1} parent=1 // pred_region
      %517 = dma.done [#allocation36], 1024
    $region273: #{forward.1} parent=1 // pred_fallthru
      _
    // Predicated region
    $region274: #{forward.1} parent=1 // pred_check
      _
    $region275: #{forward.1} parent=1 // pred_check_branch
      %519 = sbr.rel (0) target = $region277
    $region276: #{forward.1} parent=1 // pred_region
      %520 = dma.done [#allocation36], 512
    $region277: #{forward.1} parent=1 // pred_fallthru
      _
    // Predicated region
    $region278: #{forward.1} parent=1 // pred_check
      _
    $region279: #{forward.1} parent=1 // pred_check_branch
      %522 = sbr.rel (0) target = $region281
    $region280: #{forward.1} parent=1 // pred_region
      %523 = dma.done [#allocation39], 32
    $region281: #{forward.1} parent=1 // pred_fallthru
      _
    // Predicated region
    $region282: #{forward.1} parent=1 // pred_check
      _
    $region283: #{forward.1} parent=1 // pred_check_branch
      %525 = sbr.rel (0) target = $region285
    $region284: #{forward.1} parent=1 // pred_region
      %526 = dma.done [#allocation39], 2048
    $region285: #{forward.1} parent=1 // pred_fallthru
      _
    %v528 = vld [vmem:[%s3] sm:$0xf]
    %v529 = vld [vmem:[%s3 + $0x4] sm:$0xf]
    %v530 = vld [vmem:[%s3 + $0x8] sm:$0xf]
    %v531 = vld [vmem:[%s3 + $0xc] sm:$0xf]
    %v532 = vld [vmem:[%s3 + $0x10] sm:$0xf]
    %v533 = vld [vmem:[%s3 + $0x14] sm:$0xf]
    %v534 = vld [vmem:[#allocation2] sm:$0xf]
    %v535 = vld [vmem:[#allocation2 + $0x4] sm:$0xf]
    %v536 = vld [vmem:[#allocation2 + $0x8] sm:$0xf]
    %v537 = vld [vmem:[#allocation2 + $0xc] sm:$0xf]
    %v538 = vld [vmem:[#allocation2 + $0x10] sm:$0xf]
    %v539 = vld [vmem:[#allocation2 + $0x14] sm:$0xf]
    %v540 = vld [vmem:[#allocation5] sm:$0xf]
    %v541 = vld [vmem:[#allocation5 + $0x4] sm:$0xf]
    %v542 = vld [vmem:[#allocation5 + $0x8] sm:$0xf]
    %v543 = vld [vmem:[#allocation5 + $0xc] sm:$0xf]
    %v544 = vld [vmem:[#allocation5 + $0x10] sm:$0xf]
    %v545 = vld [vmem:[#allocation5 + $0x14] sm:$0xf]
    %v546 = vld [vmem:[%s9] sm:$0x1]
    %v547 = vld [vmem:[%s11] sm:$0xff]
    %v548 = vld [vmem:[%s11 + $0x8] sm:$0xff]
    %v549 = vld [vmem:[%s11 + $0x10] sm:$0xff]
    %v550 = vld [vmem:[%s11 + $0x18] sm:$0xff]
    %v551 = vld [vmem:[%s13] sm:$0xff]
    %v552 = vld [vmem:[%s13 + $0x8] sm:$0xff]
    %v553 = vld [vmem:[%s13 + $0x10] sm:$0xff]
    %v554 = vld [vmem:[%s13 + $0x18] sm:$0xff]
    %v555 = vld [vmem:[#allocation7] sm:$0xf]
    %v556 = vld [vmem:[#allocation7 + $0x4] sm:$0xf]
    %v557 = vld [vmem:[#allocation7 + $0x8] sm:$0xf]
    %v558 = vld [vmem:[#allocation7 + $0xc] sm:$0xf]
    %v559 = vld [vmem:[#allocation7 + $0x10] sm:$0xf]
    %v560 = vld [vmem:[#allocation7 + $0x14] sm:$0xf]
    %v561 = vld [vmem:[#allocation7 + $0x18] sm:$0xf]
    %v562 = vld [vmem:[#allocation7 + $0x1c] sm:$0xf]
    %v563 = vld [vmem:[#allocation7 + $0x20] sm:$0xf]
    %v564 = vld [vmem:[#allocation7 + $0x24] sm:$0xf]
    %v565 = vld [vmem:[#allocation7 + $0x28] sm:$0xf]
    %v566 = vld [vmem:[#allocation7 + $0x2c] sm:$0xf]
    %v567 = vld [vmem:[#allocation7 + $0x30] sm:$0xf]
    %v568 = vld [vmem:[#allocation7 + $0x34] sm:$0xf]
    %v569 = vld [vmem:[#allocation7 + $0x38] sm:$0xf]
    %v570 = vld [vmem:[#allocation7 + $0x3c] sm:$0xf]
    %v571 = vld [vmem:[%s17] sm:$0x1]
    %v572 = vld [vmem:[%s19] sm:$0xf]
    %v573 = vld [vmem:[%s19 + $0x4] sm:$0xf]
    %v574 = vld [vmem:[%s19 + $0x8] sm:$0xf]
    %v575 = vld [vmem:[%s19 + $0xc] sm:$0xf]
    %v576 = vld [vmem:[%s19 + $0x10] sm:$0xf]
    %v577 = vld [vmem:[%s19 + $0x14] sm:$0xf]
    %v578 = vld [vmem:[%s19 + $0x18] sm:$0xf]
    %v579 = vld [vmem:[%s19 + $0x1c] sm:$0xf]
    %v580 = vld [vmem:[#allocation8] sm:$0xf]
    %v581 = vld [vmem:[#allocation8 + $0x4] sm:$0xf]
    %v582 = vld [vmem:[#allocation8 + $0x8] sm:$0xf]
    %v583 = vld [vmem:[#allocation8 + $0xc] sm:$0xf]
    %v584 = vld [vmem:[#allocation8 + $0x10] sm:$0xf]
    %v585 = vld [vmem:[#allocation8 + $0x14] sm:$0xf]
    %v586 = vld [vmem:[#allocation8 + $0x18] sm:$0xf]
    %v587 = vld [vmem:[#allocation8 + $0x1c] sm:$0xf]
    %v588 = vld [vmem:[#allocation10] sm:$0xf]
    %v589 = vld [vmem:[#allocation10 + $0x4] sm:$0xf]
    %v590 = vld [vmem:[#allocation10 + $0x8] sm:$0xf]
    %v591 = vld [vmem:[#allocation10 + $0xc] sm:$0xf]
    %v592 = vld [vmem:[#allocation10 + $0x10] sm:$0xf]
    %v593 = vld [vmem:[#allocation10 + $0x14] sm:$0xf]
    %v594 = vld [vmem:[#allocation10 + $0x18] sm:$0xf]
    %v595 = vld [vmem:[#allocation10 + $0x1c] sm:$0xf]
    %v596 = vld [vmem:[%s25] sm:$0x1]
    %v597 = vld [vmem:[%s27] sm:$0xff]
    %v598 = vld [vmem:[%s27 + $0x8] sm:$0xff]
    %v599 = vld [vmem:[%s27 + $0x10] sm:$0xff]
    %v600 = vld [vmem:[%s27 + $0x18] sm:$0xff]
    %v601 = vld [vmem:[%s29] sm:$0xff]
    %v602 = vld [vmem:[%s29 + $0x8] sm:$0xff]
    %v603 = vld [vmem:[%s29 + $0x10] sm:$0xff]
    %v604 = vld [vmem:[%s29 + $0x18] sm:$0xff]
    %v605 = vld [vmem:[#allocation11] sm:$0xf]
    %v606 = vld [vmem:[#allocation11 + $0x4] sm:$0xf]
    %v607 = vld [vmem:[#allocation11 + $0x8] sm:$0xf]
    %v608 = vld [vmem:[#allocation11 + $0xc] sm:$0xf]
    %v609 = vld [vmem:[#allocation11 + $0x10] sm:$0xf]
    %v610 = vld [vmem:[#allocation11 + $0x14] sm:$0xf]
    %v611 = vld [vmem:[#allocation11 + $0x18] sm:$0xf]
    %v612 = vld [vmem:[#allocation11 + $0x1c] sm:$0xf]
    %v613 = vld [vmem:[#allocation11 + $0x20] sm:$0xf]
    %v614 = vld [vmem:[#allocation11 + $0x24] sm:$0xf]
    %v615 = vld [vmem:[#allocation11 + $0x28] sm:$0xf]
    %v616 = vld [vmem:[#allocation11 + $0x2c] sm:$0xf]
    %v617 = vld [vmem:[#allocation11 + $0x30] sm:$0xf]
    %v618 = vld [vmem:[#allocation11 + $0x34] sm:$0xf]
    %v619 = vld [vmem:[#allocation11 + $0x38] sm:$0xf]
    %v620 = vld [vmem:[#allocation11 + $0x3c] sm:$0xf]
    %v621 = vld [vmem:[%s33] sm:$0x1]
    %v622 = vld [vmem:[#allocation13] sm:$0xf]
    %v623 = vld [vmem:[#allocation13 + $0x4] sm:$0xf]
    %v624 = vld [vmem:[#allocation13 + $0x8] sm:$0xf]
    %v625 = vld [vmem:[#allocation13 + $0xc] sm:$0xf]
    %v626 = vld [vmem:[#allocation13 + $0x10] sm:$0xf]
    %v627 = vld [vmem:[#allocation13 + $0x14] sm:$0xf]
    %v628 = vld [vmem:[#allocation13 + $0x18] sm:$0xf]
    %v629 = vld [vmem:[#allocation13 + $0x1c] sm:$0xf]
    %v630 = vld [vmem:[%s37] sm:$0x1]
    %v631 = vld [vmem:[#allocation14] sm:$0xff]
    %v632 = vld [vmem:[#allocation14 + $0x8] sm:$0xff]
    %v633 = vld [vmem:[#allocation14 + $0x10] sm:$0xff]
    %v634 = vld [vmem:[#allocation14 + $0x18] sm:$0xff]
    %v635 = vld [vmem:[#allocation14 + $0x20] sm:$0xff]
    %v636 = vld [vmem:[#allocation14 + $0x28] sm:$0xff]
    %v637 = vld [vmem:[#allocation14 + $0x30] sm:$0xff]
    %v638 = vld [vmem:[#allocation14 + $0x38] sm:$0xff]
    %v639 = vld [vmem:[#allocation16] sm:$0xff]
    %v640 = vld [vmem:[#allocation16 + $0x8] sm:$0xff]
    %v641 = vld [vmem:[#allocation16 + $0x10] sm:$0xff]
    %v642 = vld [vmem:[#allocation16 + $0x18] sm:$0xff]
    %v643 = vld [vmem:[#allocation16 + $0x20] sm:$0xff]
    %v644 = vld [vmem:[#allocation16 + $0x28] sm:$0xff]
    %v645 = vld [vmem:[#allocation16 + $0x30] sm:$0xff]
    %v646 = vld [vmem:[#allocation16 + $0x38] sm:$0xff]
    %v647 = vld [vmem:[#allocation17] sm:$0xf]
    %v648 = vld [vmem:[#allocation17 + $0x4] sm:$0xf]
    %v649 = vld [vmem:[#allocation17 + $0x8] sm:$0xf]
    %v650 = vld [vmem:[#allocation17 + $0xc] sm:$0xf]
    %v651 = vld [vmem:[#allocation17 + $0x10] sm:$0xf]
    %v652 = vld [vmem:[#allocation17 + $0x14] sm:$0xf]
    %v653 = vld [vmem:[#allocation17 + $0x18] sm:$0xf]
    %v654 = vld [vmem:[#allocation17 + $0x1c] sm:$0xf]
    %v655 = vld [vmem:[#allocation17 + $0x20] sm:$0xf]
    %v656 = vld [vmem:[#allocation17 + $0x24] sm:$0xf]
    %v657 = vld [vmem:[#allocation17 + $0x28] sm:$0xf]
    %v658 = vld [vmem:[#allocation17 + $0x2c] sm:$0xf]
    %v659 = vld [vmem:[#allocation17 + $0x30] sm:$0xf]
    %v660 = vld [vmem:[#allocation17 + $0x34] sm:$0xf]
    %v661 = vld [vmem:[#allocation17 + $0x38] sm:$0xf]
    %v662 = vld [vmem:[#allocation17 + $0x3c] sm:$0xf]
    %v663 = vld [vmem:[%s45] sm:$0x1]
    %v664 = vld [vmem:[#allocation19] sm:$0xff]
    %v665 = vld [vmem:[#allocation19 + $0x8] sm:$0xff]
    %v666 = vld [vmem:[#allocation20] sm:$0xff]
    %v667 = vld [vmem:[#allocation20 + $0x8] sm:$0xff]
    %v668 = vld [vmem:[%s51] sm:$0xff]
    %v669 = vld [vmem:[%s51 + $0x8] sm:$0xff]
    %v670 = vld [vmem:[%s51 + $0x10] sm:$0xff]
    %v671 = vld [vmem:[%s51 + $0x18] sm:$0xff]
    %v672 = vld [vmem:[%s51 + $0x20] sm:$0xff]
    %v673 = vld [vmem:[%s51 + $0x28] sm:$0xff]
    %v674 = vld [vmem:[%s51 + $0x30] sm:$0xff]
    %v675 = vld [vmem:[%s51 + $0x38] sm:$0xff]
    %v676 = vld [vmem:[%s51 + $0x40] sm:$0xff]
    %v677 = vld [vmem:[%s51 + $0x48] sm:$0xff]
    %v678 = vld [vmem:[%s51 + $0x50] sm:$0xff]
    %v679 = vld [vmem:[%s51 + $0x58] sm:$0xff]
    %v680 = vld [vmem:[%s51 + $0x60] sm:$0xff]
    %v681 = vld [vmem:[%s51 + $0x68] sm:$0xff]
    %v682 = vld [vmem:[%s51 + $0x70] sm:$0xff]
    %v683 = vld [vmem:[%s51 + $0x78] sm:$0xff]
    %v684 = vld [vmem:[%s53] sm:$0xff]
    %v685 = vld [vmem:[%s53 + $0x8] sm:$0xff]
    %v686 = vld [vmem:[%s53 + $0x10] sm:$0xff]
    %v687 = vld [vmem:[%s53 + $0x18] sm:$0xff]
    %v688 = vld [vmem:[%s53 + $0x20] sm:$0xff]
    %v689 = vld [vmem:[%s53 + $0x28] sm:$0xff]
    %v690 = vld [vmem:[%s53 + $0x30] sm:$0xff]
    %v691 = vld [vmem:[%s53 + $0x38] sm:$0xff]
    %v692 = vld [vmem:[%s53 + $0x40] sm:$0xff]
    %v693 = vld [vmem:[%s53 + $0x48] sm:$0xff]
    %v694 = vld [vmem:[%s53 + $0x50] sm:$0xff]
    %v695 = vld [vmem:[%s53 + $0x58] sm:$0xff]
    %v696 = vld [vmem:[%s53 + $0x60] sm:$0xff]
    %v697 = vld [vmem:[%s53 + $0x68] sm:$0xff]
    %v698 = vld [vmem:[%s53 + $0x70] sm:$0xff]
    %v699 = vld [vmem:[%s53 + $0x78] sm:$0xff]
    %v700 = vld [vmem:[#allocation22] sm:$0xf]
    %v701 = vld [vmem:[#allocation22 + $0x4] sm:$0xf]
    %v702 = vld [vmem:[#allocation22 + $0x8] sm:$0xf]
    %v703 = vld [vmem:[#allocation22 + $0xc] sm:$0xf]
    %v704 = vld [vmem:[#allocation22 + $0x10] sm:$0xf]
    %v705 = vld [vmem:[#allocation22 + $0x14] sm:$0xf]
    %v706 = vld [vmem:[#allocation22 + $0x18] sm:$0xf]
    %v707 = vld [vmem:[#allocation22 + $0x1c] sm:$0xf]
    %v708 = vld [vmem:[%s57] sm:$0x1]
    %v709 = vld [vmem:[#allocation23] sm:$0xf]
    %v710 = vld [vmem:[#allocation23 + $0x4] sm:$0xf]
    %v711 = vld [vmem:[#allocation23 + $0x8] sm:$0xf]
    %v712 = vld [vmem:[#allocation23 + $0xc] sm:$0xf]
    %v713 = vld [vmem:[#allocation23 + $0x10] sm:$0xf]
    %v714 = vld [vmem:[#allocation23 + $0x14] sm:$0xf]
    %v715 = vld [vmem:[#allocation23 + $0x18] sm:$0xf]
    %v716 = vld [vmem:[#allocation23 + $0x1c] sm:$0xf]
    %v717 = vld [vmem:[#allocation25] sm:$0xf]
    %v718 = vld [vmem:[#allocation25 + $0x4] sm:$0xf]
    %v719 = vld [vmem:[#allocation25 + $0x8] sm:$0xf]
    %v720 = vld [vmem:[#allocation25 + $0xc] sm:$0xf]
    %v721 = vld [vmem:[#allocation25 + $0x10] sm:$0xf]
    %v722 = vld [vmem:[#allocation25 + $0x14] sm:$0xf]
    %v723 = vld [vmem:[#allocation25 + $0x18] sm:$0xf]
    %v724 = vld [vmem:[#allocation25 + $0x1c] sm:$0xf]
    %v725 = vld [vmem:[#allocation26] sm:$0xf]
    %v726 = vld [vmem:[#allocation26 + $0x4] sm:$0xf]
    %v727 = vld [vmem:[#allocation26 + $0x8] sm:$0xf]
    %v728 = vld [vmem:[#allocation26 + $0xc] sm:$0xf]
    %v729 = vld [vmem:[#allocation26 + $0x10] sm:$0xf]
    %v730 = vld [vmem:[#allocation26 + $0x14] sm:$0xf]
    %v731 = vld [vmem:[#allocation26 + $0x18] sm:$0xf]
    %v732 = vld [vmem:[#allocation26 + $0x1c] sm:$0xf]
    %v733 = vld [vmem:[%s65] sm:$0x1]
    %v734 = vld [vmem:[#allocation28] sm:$0xff]
    %v735 = vld [vmem:[#allocation28 + $0x8] sm:$0xff]
    %v736 = vld [vmem:[#allocation29] sm:$0xff]
    %v737 = vld [vmem:[#allocation29 + $0x8] sm:$0xff]
    %v738 = vld [vmem:[#allocation31] sm:$0xf]
    %v739 = vld [vmem:[#allocation31 + $0x4] sm:$0xf]
    %v740 = vld [vmem:[#allocation31 + $0x8] sm:$0xf]
    %v741 = vld [vmem:[#allocation31 + $0xc] sm:$0xf]
    %v742 = vld [vmem:[#allocation31 + $0x10] sm:$0xf]
    %v743 = vld [vmem:[#allocation31 + $0x14] sm:$0xf]
    %v744 = vld [vmem:[#allocation31 + $0x18] sm:$0xf]
    %v745 = vld [vmem:[#allocation31 + $0x1c] sm:$0xf]
    %v746 = vld [vmem:[%s73] sm:$0x1]
    %v747 = vld [vmem:[#allocation32] sm:$0xf]
    %v748 = vld [vmem:[#allocation32 + $0x4] sm:$0xf]
    %v749 = vld [vmem:[#allocation32 + $0x8] sm:$0xf]
    %v750 = vld [vmem:[#allocation32 + $0xc] sm:$0xf]
    %v751 = vld [vmem:[#allocation32 + $0x10] sm:$0xf]
    %v752 = vld [vmem:[#allocation32 + $0x14] sm:$0xf]
    %v753 = vld [vmem:[#allocation32 + $0x18] sm:$0xf]
    %v754 = vld [vmem:[#allocation32 + $0x1c] sm:$0xf]
    %v755 = vld [vmem:[%s77] sm:$0x1]
    %v756 = vld [vmem:[#allocation34] sm:$0xff]
    %v757 = vld [vmem:[#allocation34 + $0x8] sm:$0xff]
    %v758 = vld [vmem:[#allocation34 + $0x10] sm:$0xff]
    %v759 = vld [vmem:[#allocation34 + $0x18] sm:$0xff]
    %v760 = vld [vmem:[#allocation34 + $0x20] sm:$0xff]
    %v761 = vld [vmem:[#allocation34 + $0x28] sm:$0xff]
    %v762 = vld [vmem:[#allocation34 + $0x30] sm:$0xff]
    %v763 = vld [vmem:[#allocation34 + $0x38] sm:$0xff]
    %v764 = vld [vmem:[#allocation35] sm:$0xff]
    %v765 = vld [vmem:[#allocation35 + $0x8] sm:$0xff]
    %v766 = vld [vmem:[#allocation35 + $0x10] sm:$0xff]
    %v767 = vld [vmem:[#allocation35 + $0x18] sm:$0xff]
    %v768 = vld [vmem:[#allocation35 + $0x20] sm:$0xff]
    %v769 = vld [vmem:[#allocation35 + $0x28] sm:$0xff]
    %v770 = vld [vmem:[#allocation35 + $0x30] sm:$0xff]
    %v771 = vld [vmem:[#allocation35 + $0x38] sm:$0xff]
    %v772 = vld [vmem:[#allocation37] sm:$0xf]
    %v773 = vld [vmem:[#allocation37 + $0x4] sm:$0xf]
    %v774 = vld [vmem:[#allocation37 + $0x8] sm:$0xf]
    %v775 = vld [vmem:[#allocation37 + $0xc] sm:$0xf]
    %v776 = vld [vmem:[#allocation37 + $0x10] sm:$0xf]
    %v777 = vld [vmem:[#allocation37 + $0x14] sm:$0xf]
    %v778 = vld [vmem:[#allocation37 + $0x18] sm:$0xf]
    %v779 = vld [vmem:[#allocation37 + $0x1c] sm:$0xf]
    %v780 = vld [vmem:[%s85] sm:$0x1]
    %v781 = vld [vmem:[#allocation38] sm:$0x3]
    %v782 = vld [vmem:[#allocation40] sm:$0xff]
    %v783 = vld [vmem:[#allocation40 + $0x8] sm:$0xff]
    %v784 = vld [vmem:[#allocation40 + $0x10] sm:$0xff]
    %v785 = vld [vmem:[#allocation40 + $0x18] sm:$0xff]
    %v786 = vld [vmem:[#allocation40 + $0x20] sm:$0xff]
    %v787 = vld [vmem:[#allocation40 + $0x28] sm:$0xff]
    %v788 = vld [vmem:[#allocation40 + $0x30] sm:$0xff]
    %v789 = vld [vmem:[#allocation40 + $0x38] sm:$0xff]
    %v790 = vld [vmem:[#allocation40 + $0x40] sm:$0xff]
    %v791 = vld [vmem:[#allocation40 + $0x48] sm:$0xff]
    %v792 = vld [vmem:[#allocation40 + $0x50] sm:$0xff]
    %v793 = vld [vmem:[#allocation40 + $0x58] sm:$0xff]
    %v794 = vld [vmem:[#allocation40 + $0x60] sm:$0xff]
    %v795 = vld [vmem:[#allocation40 + $0x68] sm:$0xff]
    %v796 = vld [vmem:[#allocation40 + $0x70] sm:$0xff]
    %v797 = vld [vmem:[#allocation40 + $0x78] sm:$0xff]
    %v798 = vld [vmem:[%s91] sm:$0x1]
    %v799 = vld [vmem:[%s1] sm:$0xff]
    %v800 = vld [vmem:[%s1 + $0x8] sm:$0xff]
    %v801 = vld [vmem:[%s1 + $0x10] sm:$0xff]
    %v802 = vld [vmem:[%s1 + $0x18] sm:$0xff]
    %v803 = vpack.c.bf16 %v800, %v799
    %v804 = vpack.c.bf16 %v802, %v801
    %v811 = vunpack.c.l.b16 %v528
    %v812 = vunpack.c.l.b16 %v529
    %v813 = vunpack.c.l.b16 %v530
    %v814 = vunpack.c.l.b16 %v531
    %v815 = vunpack.c.l.b16 %v532
    %v816 = vunpack.c.l.b16 %v533
    %v817 = vpack.c.b16 %v812, %v811
    %v818 = vpack.c.b16 %v814, %v813
    %v819 = vpack.c.b16 %v816, %v815
    %vm823 = vcmask 392192
    %v825 = vsel %vm823, %v803, 0
    %v828 = vsel %vm823, %v804, 0
    %830 = vmatprep.subr.bf16.mxu0 0
    %831 = vmatpush1.bf16.msra.mxu0 0
    %832 = vmatprep.subr.bf16.mxu0 0
    %833 = vmatpush1.bf16.msra.mxu0 0
    %834 = vmatprep.subr.bf16.mxu0 0
    %835 = vmatpush1.bf16.msra.mxu0 0
    %836 = vmatprep.subr.bf16.mxu0 0
    %837 = vmatpush1.bf16.msra.mxu0 0
    %838 = vmatprep.subr.bf16.mxu0 0
    %839 = vmatpush1.bf16.msra.mxu0 0
    %840 = vmatprep.subr.bf16.mxu0 0
    %841 = vmatpush1.bf16.msra.mxu0 %v819
    %842 = vmatprep.subr.bf16.mxu0 0
    %843 = vmatpush1.bf16.msra.mxu0 %v818
    %844 = vmatprep.subr.bf16.mxu0 0
    %845 = vmatpush1.bf16.msra.mxu0 %v817
    %846 = vmatprep.subr.bf16.mxu0 0
    %847 = vmatpush2.bf16.msra.mxu0 0
    %848 = vmatprep.subr.bf16.mxu0 0
    %849 = vmatpush2.bf16.msra.mxu0 0
    %850 = vmatprep.subr.bf16.mxu0 0
    %851 = vmatpush2.bf16.msra.mxu0 0
    %852 = vmatprep.subr.bf16.mxu0 0
    %853 = vmatpush2.bf16.msra.mxu0 0
    %854 = vmatprep.subr.bf16.mxu0 0
    %855 = vmatpush2.bf16.msra.mxu0 0
    %856 = vmatprep.subr.bf16.mxu0 0
    %857 = vmatpush2.bf16.msra.mxu0 0
    %858 = vmatprep.subr.bf16.mxu0 0
    %859 = vmatpush2.bf16.msra.mxu0 0
    %860 = vmatprep.subr.bf16.mxu0 0
    %861 = vmatpush2.bf16.msra.mxu0 0
    %862 = vmatprep.mubr.bf16.mxu0 0
    %863 = vmatmul.mubr.bf16.gmra.mxu0 %v825
    %v864 = vpop.f32.mrf.mxu0
    %v865 = vadd.f32 0.0, %v864
    %v866 = vpop.f32.mrf.mxu0
    %v867 = vpop.f32.mrf.mxu0
    %v868 = vadd.f32 0.0, %v867
    %v869 = vpop.f32.mrf.mxu0
    %870 = vmatprep.mubr.bf16.mxu0 0
    %871 = vmatmul.mubr.bf16.gmra.mxu0 %v828
    %v872 = vpop.f32.mrf.mxu0
    %v873 = vadd.f32 0.0, %v872
    %v874 = vpop.f32.mrf.mxu0
    %v875 = vpop.f32.mrf.mxu0
    %v876 = vadd.f32 0.0, %v875
    %v877 = vpop.f32.mrf.mxu0
    %878 = vdwg.mxu0
    %v885 = vunpack.c.l.b16 %v534
    %v886 = vunpack.c.l.b16 %v535
    %v887 = vunpack.c.l.b16 %v536
    %v888 = vunpack.c.l.b16 %v537
    %v889 = vunpack.c.l.b16 %v538
    %v890 = vunpack.c.l.b16 %v539
    %v891 = vpack.c.b16 %v886, %v885
    %v892 = vpack.c.b16 %v888, %v887
    %v893 = vpack.c.b16 %v890, %v889
    %897 = vmatprep.subr.bf16.mxu0 0
    %898 = vmatpush1.bf16.msra.mxu0 0
    %899 = vmatprep.subr.bf16.mxu0 0
    %900 = vmatpush1.bf16.msra.mxu0 0
    %901 = vmatprep.subr.bf16.mxu0 0
    %902 = vmatpush1.bf16.msra.mxu0 0
    %903 = vmatprep.subr.bf16.mxu0 0
    %904 = vmatpush1.bf16.msra.mxu0 0
    %905 = vmatprep.subr.bf16.mxu0 0
    %906 = vmatpush1.bf16.msra.mxu0 0
    %907 = vmatprep.subr.bf16.mxu0 0
    %908 = vmatpush1.bf16.msra.mxu0 %v893
    %909 = vmatprep.subr.bf16.mxu0 0
    %910 = vmatpush1.bf16.msra.mxu0 %v892
    %911 = vmatprep.subr.bf16.mxu0 0
    %912 = vmatpush1.bf16.msra.mxu0 %v891
    %913 = vmatprep.subr.bf16.mxu0 0
    %914 = vmatpush2.bf16.msra.mxu0 0
    %915 = vmatprep.subr.bf16.mxu0 0
    %916 = vmatpush2.bf16.msra.mxu0 0
    %917 = vmatprep.subr.bf16.mxu0 0
    %918 = vmatpush2.bf16.msra.mxu0 0
    %919 = vmatprep.subr.bf16.mxu0 0
    %920 = vmatpush2.bf16.msra.mxu0 0
    %921 = vmatprep.subr.bf16.mxu0 0
    %922 = vmatpush2.bf16.msra.mxu0 0
    %923 = vmatprep.subr.bf16.mxu0 0
    %924 = vmatpush2.bf16.msra.mxu0 0
    %925 = vmatprep.subr.bf16.mxu0 0
    %926 = vmatpush2.bf16.msra.mxu0 0
    %927 = vmatprep.subr.bf16.mxu0 0
    %928 = vmatpush2.bf16.msra.mxu0 0
    %929 = vmatprep.mubr.bf16.mxu0 0
    %930 = vmatmul.mubr.bf16.gmra.mxu0 %v825
    %v931 = vpop.f32.mrf.mxu0
    %v932 = vadd.f32 0.0, %v931
    %v933 = vpop.f32.mrf.mxu0
    %v934 = vpop.f32.mrf.mxu0
    %v935 = vadd.f32 0.0, %v934
    %v936 = vpop.f32.mrf.mxu0
    %937 = vmatprep.mubr.bf16.mxu0 0
    %938 = vmatmul.mubr.bf16.gmra.mxu0 %v828
    %v939 = vpop.f32.mrf.mxu0
    %v940 = vadd.f32 0.0, %v939
    %v941 = vpop.f32.mrf.mxu0
    %v942 = vpop.f32.mrf.mxu0
    %v943 = vadd.f32 0.0, %v942
    %v944 = vpop.f32.mrf.mxu0
    %945 = vdwg.mxu0
    %vm946 = vcmask 261120
    %v948 = vsel %vm946, %v547, 0
    %v951 = vsel %vm946, %v548, 0
    %v954 = vsel %vm946, %v549, 0
    %v957 = vsel %vm946, %v550, 0
    %959 = vmatprep.subr.mxu0 0.0
    %960 = vmatpush1.msra.mxu0 0.0
    %961 = vmatprep.subr.mxu0 0.0
    %962 = vmatpush1.msra.mxu0 0.0
    %963 = vmatprep.subr.mxu0 0.0
    %964 = vmatpush1.msra.mxu0 0.0
    %965 = vmatprep.subr.mxu0 0.0
    %966 = vmatpush1.msra.mxu0 0.0
    %967 = vmatprep.subr.mxu0 0.0
    %968 = vmatpush1.msra.mxu0 0.0
    %969 = vmatprep.subr.mxu0 0.0
    %970 = vmatpush1.msra.mxu0 0.0
    %971 = vmatprep.subr.mxu0 0.0
    %972 = vmatpush1.msra.mxu0 0.0
    %973 = vmatprep.subr.mxu0 0.0
    %974 = vmatpush1.msra.mxu0 0.0
    %975 = vmatprep.subr.mxu0 0.0
    %976 = vmatpush1.msra.mxu0 0.0
    %977 = vmatprep.subr.mxu0 0.0
    %978 = vmatpush1.msra.mxu0 0.0
    %979 = vmatprep.subr.mxu0 0.0
    %980 = vmatpush1.msra.mxu0 0.0
    %981 = vmatprep.subr.mxu0 0.0
    %982 = vmatpush1.msra.mxu0 0.0
    %983 = vmatprep.subr.mxu0 0.0
    %984 = vmatpush1.msra.mxu0 %v876
    %985 = vmatprep.subr.mxu0 0.0
    %986 = vmatpush1.msra.mxu0 %v873
    %987 = vmatprep.subr.mxu0 0.0
    %988 = vmatpush1.msra.mxu0 %v868
    %989 = vmatprep.subr.mxu0 0.0
    %990 = vmatpush1.msra.mxu0 %v865
    %991 = vmatprep.subr.mxu0 0.0
    %992 = vmatpush2.msra.mxu0 0.0
    %993 = vmatprep.subr.mxu0 0.0
    %994 = vmatpush2.msra.mxu0 0.0
    %995 = vmatprep.subr.mxu0 0.0
    %996 = vmatpush2.msra.mxu0 0.0
    %997 = vmatprep.subr.mxu0 0.0
    %998 = vmatpush2.msra.mxu0 0.0
    %999 = vmatprep.subr.mxu0 0.0
    %1000 = vmatpush2.msra.mxu0 0.0
    %1001 = vmatprep.subr.mxu0 0.0
    %1002 = vmatpush2.msra.mxu0 0.0
    %1003 = vmatprep.subr.mxu0 0.0
    %1004 = vmatpush2.msra.mxu0 0.0
    %1005 = vmatprep.subr.mxu0 0.0
    %1006 = vmatpush2.msra.mxu0 0.0
    %1007 = vmatprep.subr.mxu0 0.0
    %1008 = vmatpush2.msra.mxu0 0.0
    %1009 = vmatprep.subr.mxu0 0.0
    %1010 = vmatpush2.msra.mxu0 0.0
    %1011 = vmatprep.subr.mxu0 0.0
    %1012 = vmatpush2.msra.mxu0 0.0
    %1013 = vmatprep.subr.mxu0 0.0
    %1014 = vmatpush2.msra.mxu0 0.0
    %1015 = vmatprep.subr.mxu0 0.0
    %1016 = vmatpush2.msra.mxu0 0.0
    %1017 = vmatprep.subr.mxu0 0.0
    %1018 = vmatpush2.msra.mxu0 0.0
    %1019 = vmatprep.subr.mxu0 0.0
    %1020 = vmatpush2.msra.mxu0 0.0
    %1021 = vmatprep.subr.mxu0 0.0
    %1022 = vmatpush2.msra.mxu0 0.0
    %1023 = vmatprep.mubr.f32.mxu0 0.0
    %1024 = vmatmul.mubr.f32.gmra.mxu0 %v948
    %v1025 = vpop.f32.mrf.mxu0
    %v1026 = vadd.f32 %v932, %v1025
    %v1027 = vpop.f32.mrf.mxu0
    %1028 = vmatprep.mubr.f32.mxu0 0.0
    %1029 = vmatmul.mubr.f32.gmra.mxu0 %v951
    %v1030 = vpop.f32.mrf.mxu0
    %v1031 = vadd.f32 %v935, %v1030
    %v1032 = vpop.f32.mrf.mxu0
    %1033 = vmatprep.mubr.f32.mxu0 0.0
    %1034 = vmatmul.mubr.f32.gmra.mxu0 %v954
    %v1035 = vpop.f32.mrf.mxu0
    %v1036 = vadd.f32 %v940, %v1035
    %v1037 = vpop.f32.mrf.mxu0
    %1038 = vmatprep.mubr.f32.mxu0 0.0
    %1039 = vmatmul.mubr.f32.gmra.mxu0 %v957
    %v1040 = vpop.f32.mrf.mxu0
    %v1041 = vadd.f32 %v943, %v1040
    %v1042 = vpop.f32.mrf.mxu0
    %1043 = vdwg.mxu0
    %v1050 = vunpack.c.l.b16 %v540
    %v1051 = vunpack.c.l.b16 %v541
    %v1052 = vunpack.c.l.b16 %v542
    %v1053 = vunpack.c.l.b16 %v543
    %v1054 = vunpack.c.l.b16 %v544
    %v1055 = vunpack.c.l.b16 %v545
    %v1056 = vpack.c.b16 %v1051, %v1050
    %v1057 = vpack.c.b16 %v1053, %v1052
    %v1058 = vpack.c.b16 %v1055, %v1054
    %1062 = vmatprep.subr.bf16.mxu0 0
    %1063 = vmatpush1.bf16.msra.mxu0 0
    %1064 = vmatprep.subr.bf16.mxu0 0
    %1065 = vmatpush1.bf16.msra.mxu0 0
    %1066 = vmatprep.subr.bf16.mxu0 0
    %1067 = vmatpush1.bf16.msra.mxu0 0
    %1068 = vmatprep.subr.bf16.mxu0 0
    %1069 = vmatpush1.bf16.msra.mxu0 0
    %1070 = vmatprep.subr.bf16.mxu0 0
    %1071 = vmatpush1.bf16.msra.mxu0 0
    %1072 = vmatprep.subr.bf16.mxu0 0
    %1073 = vmatpush1.bf16.msra.mxu0 %v1058
    %1074 = vmatprep.subr.bf16.mxu0 0
    %1075 = vmatpush1.bf16.msra.mxu0 %v1057
    %1076 = vmatprep.subr.bf16.mxu0 0
    %1077 = vmatpush1.bf16.msra.mxu0 %v1056
    %1078 = vmatprep.subr.bf16.mxu0 0
    %1079 = vmatpush2.bf16.msra.mxu0 0
    %1080 = vmatprep.subr.bf16.mxu0 0
    %1081 = vmatpush2.bf16.msra.mxu0 0
    %1082 = vmatprep.subr.bf16.mxu0 0
    %1083 = vmatpush2.bf16.msra.mxu0 0
    %1084 = vmatprep.subr.bf16.mxu0 0
    %1085 = vmatpush2.bf16.msra.mxu0 0
    %1086 = vmatprep.subr.bf16.mxu0 0
    %1087 = vmatpush2.bf16.msra.mxu0 0
    %1088 = vmatprep.subr.bf16.mxu0 0
    %1089 = vmatpush2.bf16.msra.mxu0 0
    %1090 = vmatprep.subr.bf16.mxu0 0
    %1091 = vmatpush2.bf16.msra.mxu0 0
    %1092 = vmatprep.subr.bf16.mxu0 0
    %1093 = vmatpush2.bf16.msra.mxu0 0
    %1094 = vmatprep.mubr.bf16.mxu0 0
    %1095 = vmatmul.mubr.bf16.gmra.mxu0 %v825
    %v1096 = vpop.f32.mrf.mxu0
    %v1097 = vadd.f32 0.0, %v1096
    %v1098 = vpop.f32.mrf.mxu0
    %v1099 = vpop.f32.mrf.mxu0
    %v1100 = vadd.f32 0.0, %v1099
    %v1101 = vpop.f32.mrf.mxu0
    %1102 = vmatprep.mubr.bf16.mxu0 0
    %1103 = vmatmul.mubr.bf16.gmra.mxu0 %v828
    %v1104 = vpop.f32.mrf.mxu0
    %v1105 = vadd.f32 0.0, %v1104
    %v1106 = vpop.f32.mrf.mxu0
    %v1107 = vpop.f32.mrf.mxu0
    %v1108 = vadd.f32 0.0, %v1107
    %v1109 = vpop.f32.mrf.mxu0
    %1110 = vdwg.mxu0
    %v1112 = vsel %vm946, %v551, 0
    %v1115 = vsel %vm946, %v552, 0
    %v1118 = vsel %vm946, %v553, 0
    %v1121 = vsel %vm946, %v554, 0
    %1123 = vmatprep.subr.mxu0 0.0
    %1124 = vmatpush1.msra.mxu0 0.0
    %1125 = vmatprep.subr.mxu0 0.0
    %1126 = vmatpush1.msra.mxu0 0.0
    %1127 = vmatprep.subr.mxu0 0.0
    %1128 = vmatpush1.msra.mxu0 0.0
    %1129 = vmatprep.subr.mxu0 0.0
    %1130 = vmatpush1.msra.mxu0 0.0
    %1131 = vmatprep.subr.mxu0 0.0
    %1132 = vmatpush1.msra.mxu0 0.0
    %1133 = vmatprep.subr.mxu0 0.0
    %1134 = vmatpush1.msra.mxu0 0.0
    %1135 = vmatprep.subr.mxu0 0.0
    %1136 = vmatpush1.msra.mxu0 0.0
    %1137 = vmatprep.subr.mxu0 0.0
    %1138 = vmatpush1.msra.mxu0 0.0
    %1139 = vmatprep.subr.mxu0 0.0
    %1140 = vmatpush1.msra.mxu0 0.0
    %1141 = vmatprep.subr.mxu0 0.0
    %1142 = vmatpush1.msra.mxu0 0.0
    %1143 = vmatprep.subr.mxu0 0.0
    %1144 = vmatpush1.msra.mxu0 0.0
    %1145 = vmatprep.subr.mxu0 0.0
    %1146 = vmatpush1.msra.mxu0 0.0
    %1147 = vmatprep.subr.mxu0 0.0
    %1148 = vmatpush1.msra.mxu0 %v1108
    %1149 = vmatprep.subr.mxu0 0.0
    %1150 = vmatpush1.msra.mxu0 %v1105
    %1151 = vmatprep.subr.mxu0 0.0
    %1152 = vmatpush1.msra.mxu0 %v1100
    %1153 = vmatprep.subr.mxu0 0.0
    %1154 = vmatpush1.msra.mxu0 %v1097
    %1155 = vmatprep.subr.mxu0 0.0
    %1156 = vmatpush2.msra.mxu0 0.0
    %1157 = vmatprep.subr.mxu0 0.0
    %1158 = vmatpush2.msra.mxu0 0.0
    %1159 = vmatprep.subr.mxu0 0.0
    %1160 = vmatpush2.msra.mxu0 0.0
    %1161 = vmatprep.subr.mxu0 0.0
    %1162 = vmatpush2.msra.mxu0 0.0
    %1163 = vmatprep.subr.mxu0 0.0
    %1164 = vmatpush2.msra.mxu0 0.0
    %1165 = vmatprep.subr.mxu0 0.0
    %1166 = vmatpush2.msra.mxu0 0.0
    %1167 = vmatprep.subr.mxu0 0.0
    %1168 = vmatpush2.msra.mxu0 0.0
    %1169 = vmatprep.subr.mxu0 0.0
    %1170 = vmatpush2.msra.mxu0 0.0
    %1171 = vmatprep.subr.mxu0 0.0
    %1172 = vmatpush2.msra.mxu0 0.0
    %1173 = vmatprep.subr.mxu0 0.0
    %1174 = vmatpush2.msra.mxu0 0.0
    %1175 = vmatprep.subr.mxu0 0.0
    %1176 = vmatpush2.msra.mxu0 0.0
    %1177 = vmatprep.subr.mxu0 0.0
    %1178 = vmatpush2.msra.mxu0 0.0
    %1179 = vmatprep.subr.mxu0 0.0
    %1180 = vmatpush2.msra.mxu0 0.0
    %1181 = vmatprep.subr.mxu0 0.0
    %1182 = vmatpush2.msra.mxu0 0.0
    %1183 = vmatprep.subr.mxu0 0.0
    %1184 = vmatpush2.msra.mxu0 0.0
    %1185 = vmatprep.subr.mxu0 0.0
    %1186 = vmatpush2.msra.mxu0 0.0
    %1187 = vmatprep.mubr.f32.mxu0 0.0
    %1188 = vmatmul.mubr.f32.gmra.mxu0 %v1112
    %v1189 = vpop.f32.mrf.mxu0
    %v1190 = vadd.f32 0.0, %v1189
    %v1191 = vpop.f32.mrf.mxu0
    %1192 = vmatprep.mubr.f32.mxu0 0.0
    %1193 = vmatmul.mubr.f32.gmra.mxu0 %v1115
    %v1194 = vpop.f32.mrf.mxu0
    %v1195 = vadd.f32 0.0, %v1194
    %v1196 = vpop.f32.mrf.mxu0
    %1197 = vmatprep.mubr.f32.mxu0 0.0
    %1198 = vmatmul.mubr.f32.gmra.mxu0 %v1118
    %v1199 = vpop.f32.mrf.mxu0
    %v1200 = vadd.f32 0.0, %v1199
    %v1201 = vpop.f32.mrf.mxu0
    %1202 = vmatprep.mubr.f32.mxu0 0.0
    %1203 = vmatmul.mubr.f32.gmra.mxu0 %v1121
    %v1204 = vpop.f32.mrf.mxu0
    %v1205 = vadd.f32 0.0, %v1204
    %v1206 = vpop.f32.mrf.mxu0
    %1207 = vdwg.mxu0
    %v1208 = vadd.f32 %v1026, %v1190
    %v1209 = vadd.f32 %v1031, %v1195
    %v1210 = vadd.f32 %v1036, %v1200
    %v1211 = vadd.f32 %v1041, %v1205
    %v1213 = vlaneseq
    %v1214 = vshrl.u32 %v1213, 7
    %v1215 = vsub.s32 0, %v1214
    %v1216 = vrot.slane %v546, %v1215
    %v1218 = vadd.f32 %v1208, %v1216
    %v1219 = vadd.f32 %v1209, %v1216
    %v1220 = vadd.f32 %v1210, %v1216
    %v1221 = vadd.f32 %v1211, %v1216
    %v1222 = vmax.f32 %v1218, 0.0
    %v1223 = vmax.f32 %v1219, 0.0
    %v1224 = vmax.f32 %v1220, 0.0
    %v1225 = vmax.f32 %v1221, 0.0
    %v1226 = vpack.c.bf16 %v1223, %v1222
    %v1227 = vpack.c.bf16 %v1225, %v1224
    %v1229 = vlaneseq
    %v1230 = vshrl.u32 %v1229, 7
    %v1231 = vsub.s32 0, %v1230
    %v1232 = vrot.slane %v571, %v1231
    %v1250 = vunpack.c.l.b16 %v555
    %v1251 = vunpack.c.l.b16 %v556
    %v1252 = vunpack.c.l.b16 %v557
    %v1253 = vunpack.c.l.b16 %v558
    %v1254 = vunpack.c.l.b16 %v559
    %v1255 = vunpack.c.l.b16 %v560
    %v1256 = vunpack.c.l.b16 %v561
    %v1257 = vunpack.c.l.b16 %v562
    %v1258 = vunpack.c.l.b16 %v563
    %v1259 = vunpack.c.l.b16 %v564
    %v1260 = vunpack.c.l.b16 %v565
    %v1261 = vunpack.c.l.b16 %v566
    %v1262 = vunpack.c.l.b16 %v567
    %v1263 = vunpack.c.l.b16 %v568
    %v1264 = vunpack.c.l.b16 %v569
    %v1265 = vunpack.c.l.b16 %v570
    %v1266 = vpack.c.b16 %v1251, %v1250
    %v1267 = vpack.c.b16 %v1253, %v1252
    %v1268 = vpack.c.b16 %v1255, %v1254
    %v1269 = vpack.c.b16 %v1257, %v1256
    %v1270 = vpack.c.b16 %v1259, %v1258
    %v1271 = vpack.c.b16 %v1261, %v1260
    %v1272 = vpack.c.b16 %v1263, %v1262
    %v1273 = vpack.c.b16 %v1265, %v1264
    %1282 = vmatprep.subr.bf16.mxu0 0
    %1283 = vmatpush1.bf16.msra.mxu0 %v1273
    %1284 = vmatprep.subr.bf16.mxu0 0
    %1285 = vmatpush1.bf16.msra.mxu0 %v1272
    %1286 = vmatprep.subr.bf16.mxu0 0
    %1287 = vmatpush1.bf16.msra.mxu0 %v1271
    %1288 = vmatprep.subr.bf16.mxu0 0
    %1289 = vmatpush1.bf16.msra.mxu0 %v1270
    %1290 = vmatprep.subr.bf16.mxu0 0
    %1291 = vmatpush1.bf16.msra.mxu0 %v1269
    %1292 = vmatprep.subr.bf16.mxu0 0
    %1293 = vmatpush1.bf16.msra.mxu0 %v1268
    %1294 = vmatprep.subr.bf16.mxu0 0
    %1295 = vmatpush1.bf16.msra.mxu0 %v1267
    %1296 = vmatprep.subr.bf16.mxu0 0
    %1297 = vmatpush1.bf16.msra.mxu0 %v1266
    %1298 = vmatprep.subr.bf16.mxu0 0
    %1299 = vmatpush2.bf16.msra.mxu0 0
    %1300 = vmatprep.subr.bf16.mxu0 0
    %1301 = vmatpush2.bf16.msra.mxu0 0
    %1302 = vmatprep.subr.bf16.mxu0 0
    %1303 = vmatpush2.bf16.msra.mxu0 0
    %1304 = vmatprep.subr.bf16.mxu0 0
    %1305 = vmatpush2.bf16.msra.mxu0 0
    %1306 = vmatprep.subr.bf16.mxu0 0
    %1307 = vmatpush2.bf16.msra.mxu0 0
    %1308 = vmatprep.subr.bf16.mxu0 0
    %1309 = vmatpush2.bf16.msra.mxu0 0
    %1310 = vmatprep.subr.bf16.mxu0 0
    %1311 = vmatpush2.bf16.msra.mxu0 0
    %1312 = vmatprep.subr.bf16.mxu0 0
    %1313 = vmatpush2.bf16.msra.mxu0 0
    %1314 = vmatprep.mubr.bf16.mxu0 0
    %1315 = vmatmul.mubr.bf16.gmra.mxu0 %v1226
    %v1316 = vpop.f32.mrf.mxu0
    %v1317 = vadd.f32 %v1232, %v1316
    %v1318 = vpop.f32.mrf.mxu0
    %v1319 = vpop.f32.mrf.mxu0
    %v1320 = vadd.f32 %v1232, %v1319
    %v1321 = vpop.f32.mrf.mxu0
    %1322 = vmatprep.mubr.bf16.mxu0 0
    %1323 = vmatmul.mubr.bf16.gmra.mxu0 %v1227
    %v1324 = vpop.f32.mrf.mxu0
    %v1325 = vadd.f32 %v1232, %v1324
    %v1326 = vpop.f32.mrf.mxu0
    %v1327 = vpop.f32.mrf.mxu0
    %v1328 = vadd.f32 %v1232, %v1327
    %v1329 = vpop.f32.mrf.mxu0
    %1330 = vdwg.mxu0
    %v1331 = vmax.f32 %v1317, 0.0
    %v1332 = vmax.f32 %v1320, 0.0
    %v1333 = vmax.f32 %v1325, 0.0
    %v1334 = vmax.f32 %v1328, 0.0
    %v1335 = vpack.c.bf16 %v1332, %v1331
    %v1336 = vpack.c.bf16 %v1334, %v1333
    %v1345 = vunpack.c.l.b16 %v572
    %v1346 = vunpack.c.l.b16 %v573
    %v1347 = vunpack.c.l.b16 %v574
    %v1348 = vunpack.c.l.b16 %v575
    %v1349 = vunpack.c.l.b16 %v576
    %v1350 = vunpack.c.l.b16 %v577
    %v1351 = vunpack.c.l.b16 %v578
    %v1352 = vunpack.c.l.b16 %v579
    %v1353 = vpack.c.b16 %v1346, %v1345
    %v1354 = vpack.c.b16 %v1348, %v1347
    %v1355 = vpack.c.b16 %v1350, %v1349
    %v1356 = vpack.c.b16 %v1352, %v1351
    %vm1361 = vcmask 523264
    %v1363 = vsel %vm1361, %v1335, 0
    %v1366 = vsel %vm1361, %v1336, 0
    %1368 = vmatprep.subr.bf16.mxu0 0
    %1369 = vmatpush1.bf16.msra.mxu0 0
    %1370 = vmatprep.subr.bf16.mxu0 0
    %1371 = vmatpush1.bf16.msra.mxu0 0
    %1372 = vmatprep.subr.bf16.mxu0 0
    %1373 = vmatpush1.bf16.msra.mxu0 0
    %1374 = vmatprep.subr.bf16.mxu0 0
    %1375 = vmatpush1.bf16.msra.mxu0 0
    %1376 = vmatprep.subr.bf16.mxu0 0
    %1377 = vmatpush1.bf16.msra.mxu0 %v1356
    %1378 = vmatprep.subr.bf16.mxu0 0
    %1379 = vmatpush1.bf16.msra.mxu0 %v1355
    %1380 = vmatprep.subr.bf16.mxu0 0
    %1381 = vmatpush1.bf16.msra.mxu0 %v1354
    %1382 = vmatprep.subr.bf16.mxu0 0
    %1383 = vmatpush1.bf16.msra.mxu0 %v1353
    %1384 = vmatprep.subr.bf16.mxu0 0
    %1385 = vmatpush2.bf16.msra.mxu0 0
    %1386 = vmatprep.subr.bf16.mxu0 0
    %1387 = vmatpush2.bf16.msra.mxu0 0
    %1388 = vmatprep.subr.bf16.mxu0 0
    %1389 = vmatpush2.bf16.msra.mxu0 0
    %1390 = vmatprep.subr.bf16.mxu0 0
    %1391 = vmatpush2.bf16.msra.mxu0 0
    %1392 = vmatprep.subr.bf16.mxu0 0
    %1393 = vmatpush2.bf16.msra.mxu0 0
    %1394 = vmatprep.subr.bf16.mxu0 0
    %1395 = vmatpush2.bf16.msra.mxu0 0
    %1396 = vmatprep.subr.bf16.mxu0 0
    %1397 = vmatpush2.bf16.msra.mxu0 0
    %1398 = vmatprep.subr.bf16.mxu0 0
    %1399 = vmatpush2.bf16.msra.mxu0 0
    %1400 = vmatprep.mubr.bf16.mxu0 0
    %1401 = vmatmul.mubr.bf16.gmra.mxu0 %v1363
    %v1402 = vpop.f32.mrf.mxu0
    %v1403 = vadd.f32 0.0, %v1402
    %v1404 = vpop.f32.mrf.mxu0
    %v1405 = vpop.f32.mrf.mxu0
    %v1406 = vadd.f32 0.0, %v1405
    %v1407 = vpop.f32.mrf.mxu0
    %1408 = vmatprep.mubr.bf16.mxu0 0
    %1409 = vmatmul.mubr.bf16.gmra.mxu0 %v1366
    %v1410 = vpop.f32.mrf.mxu0
    %v1411 = vadd.f32 0.0, %v1410
    %v1412 = vpop.f32.mrf.mxu0
    %v1413 = vpop.f32.mrf.mxu0
    %v1414 = vadd.f32 0.0, %v1413
    %v1415 = vpop.f32.mrf.mxu0
    %1416 = vdwg.mxu0
    %v1425 = vunpack.c.l.b16 %v580
    %v1426 = vunpack.c.l.b16 %v581
    %v1427 = vunpack.c.l.b16 %v582
    %v1428 = vunpack.c.l.b16 %v583
    %v1429 = vunpack.c.l.b16 %v584
    %v1430 = vunpack.c.l.b16 %v585
    %v1431 = vunpack.c.l.b16 %v586
    %v1432 = vunpack.c.l.b16 %v587
    %v1433 = vpack.c.b16 %v1426, %v1425
    %v1434 = vpack.c.b16 %v1428, %v1427
    %v1435 = vpack.c.b16 %v1430, %v1429
    %v1436 = vpack.c.b16 %v1432, %v1431
    %1441 = vmatprep.subr.bf16.mxu0 0
    %1442 = vmatpush1.bf16.msra.mxu0 0
    %1443 = vmatprep.subr.bf16.mxu0 0
    %1444 = vmatpush1.bf16.msra.mxu0 0
    %1445 = vmatprep.subr.bf16.mxu0 0
    %1446 = vmatpush1.bf16.msra.mxu0 0
    %1447 = vmatprep.subr.bf16.mxu0 0
    %1448 = vmatpush1.bf16.msra.mxu0 0
    %1449 = vmatprep.subr.bf16.mxu0 0
    %1450 = vmatpush1.bf16.msra.mxu0 %v1436
    %1451 = vmatprep.subr.bf16.mxu0 0
    %1452 = vmatpush1.bf16.msra.mxu0 %v1435
    %1453 = vmatprep.subr.bf16.mxu0 0
    %1454 = vmatpush1.bf16.msra.mxu0 %v1434
    %1455 = vmatprep.subr.bf16.mxu0 0
    %1456 = vmatpush1.bf16.msra.mxu0 %v1433
    %1457 = vmatprep.subr.bf16.mxu0 0
    %1458 = vmatpush2.bf16.msra.mxu0 0
    %1459 = vmatprep.subr.bf16.mxu0 0
    %1460 = vmatpush2.bf16.msra.mxu0 0
    %1461 = vmatprep.subr.bf16.mxu0 0
    %1462 = vmatpush2.bf16.msra.mxu0 0
    %1463 = vmatprep.subr.bf16.mxu0 0
    %1464 = vmatpush2.bf16.msra.mxu0 0
    %1465 = vmatprep.subr.bf16.mxu0 0
    %1466 = vmatpush2.bf16.msra.mxu0 0
    %1467 = vmatprep.subr.bf16.mxu0 0
    %1468 = vmatpush2.bf16.msra.mxu0 0
    %1469 = vmatprep.subr.bf16.mxu0 0
    %1470 = vmatpush2.bf16.msra.mxu0 0
    %1471 = vmatprep.subr.bf16.mxu0 0
    %1472 = vmatpush2.bf16.msra.mxu0 0
    %1473 = vmatprep.mubr.bf16.mxu0 0
    %1474 = vmatmul.mubr.bf16.gmra.mxu0 %v1363
    %v1475 = vpop.f32.mrf.mxu0
    %v1476 = vadd.f32 0.0, %v1475
    %v1477 = vpop.f32.mrf.mxu0
    %v1478 = vpop.f32.mrf.mxu0
    %v1479 = vadd.f32 0.0, %v1478
    %v1480 = vpop.f32.mrf.mxu0
    %1481 = vmatprep.mubr.bf16.mxu0 0
    %1482 = vmatmul.mubr.bf16.gmra.mxu0 %v1366
    %v1483 = vpop.f32.mrf.mxu0
    %v1484 = vadd.f32 0.0, %v1483
    %v1485 = vpop.f32.mrf.mxu0
    %v1486 = vpop.f32.mrf.mxu0
    %v1487 = vadd.f32 0.0, %v1486
    %v1488 = vpop.f32.mrf.mxu0
    %1489 = vdwg.mxu0
    %v1491 = vsel %vm946, %v597, 0
    %v1494 = vsel %vm946, %v598, 0
    %v1497 = vsel %vm946, %v599, 0
    %v1500 = vsel %vm946, %v600, 0
    %1502 = vmatprep.subr.mxu0 0.0
    %1503 = vmatpush1.msra.mxu0 0.0
    %1504 = vmatprep.subr.mxu0 0.0
    %1505 = vmatpush1.msra.mxu0 0.0
    %1506 = vmatprep.subr.mxu0 0.0
    %1507 = vmatpush1.msra.mxu0 0.0
    %1508 = vmatprep.subr.mxu0 0.0
    %1509 = vmatpush1.msra.mxu0 0.0
    %1510 = vmatprep.subr.mxu0 0.0
    %1511 = vmatpush1.msra.mxu0 0.0
    %1512 = vmatprep.subr.mxu0 0.0
    %1513 = vmatpush1.msra.mxu0 0.0
    %1514 = vmatprep.subr.mxu0 0.0
    %1515 = vmatpush1.msra.mxu0 0.0
    %1516 = vmatprep.subr.mxu0 0.0
    %1517 = vmatpush1.msra.mxu0 0.0
    %1518 = vmatprep.subr.mxu0 0.0
    %1519 = vmatpush1.msra.mxu0 0.0
    %1520 = vmatprep.subr.mxu0 0.0
    %1521 = vmatpush1.msra.mxu0 0.0
    %1522 = vmatprep.subr.mxu0 0.0
    %1523 = vmatpush1.msra.mxu0 0.0
    %1524 = vmatprep.subr.mxu0 0.0
    %1525 = vmatpush1.msra.mxu0 0.0
    %1526 = vmatprep.subr.mxu0 0.0
    %1527 = vmatpush1.msra.mxu0 %v1414
    %1528 = vmatprep.subr.mxu0 0.0
    %1529 = vmatpush1.msra.mxu0 %v1411
    %1530 = vmatprep.subr.mxu0 0.0
    %1531 = vmatpush1.msra.mxu0 %v1406
    %1532 = vmatprep.subr.mxu0 0.0
    %1533 = vmatpush1.msra.mxu0 %v1403
    %1534 = vmatprep.subr.mxu0 0.0
    %1535 = vmatpush2.msra.mxu0 0.0
    %1536 = vmatprep.subr.mxu0 0.0
    %1537 = vmatpush2.msra.mxu0 0.0
    %1538 = vmatprep.subr.mxu0 0.0
    %1539 = vmatpush2.msra.mxu0 0.0
    %1540 = vmatprep.subr.mxu0 0.0
    %1541 = vmatpush2.msra.mxu0 0.0
    %1542 = vmatprep.subr.mxu0 0.0
    %1543 = vmatpush2.msra.mxu0 0.0
    %1544 = vmatprep.subr.mxu0 0.0
    %1545 = vmatpush2.msra.mxu0 0.0
    %1546 = vmatprep.subr.mxu0 0.0
    %1547 = vmatpush2.msra.mxu0 0.0
    %1548 = vmatprep.subr.mxu0 0.0
    %1549 = vmatpush2.msra.mxu0 0.0
    %1550 = vmatprep.subr.mxu0 0.0
    %1551 = vmatpush2.msra.mxu0 0.0
    %1552 = vmatprep.subr.mxu0 0.0
    %1553 = vmatpush2.msra.mxu0 0.0
    %1554 = vmatprep.subr.mxu0 0.0
    %1555 = vmatpush2.msra.mxu0 0.0
    %1556 = vmatprep.subr.mxu0 0.0
    %1557 = vmatpush2.msra.mxu0 0.0
    %1558 = vmatprep.subr.mxu0 0.0
    %1559 = vmatpush2.msra.mxu0 0.0
    %1560 = vmatprep.subr.mxu0 0.0
    %1561 = vmatpush2.msra.mxu0 0.0
    %1562 = vmatprep.subr.mxu0 0.0
    %1563 = vmatpush2.msra.mxu0 0.0
    %1564 = vmatprep.subr.mxu0 0.0
    %1565 = vmatpush2.msra.mxu0 0.0
    %1566 = vmatprep.mubr.f32.mxu0 0.0
    %1567 = vmatmul.mubr.f32.gmra.mxu0 %v1491
    %v1568 = vpop.f32.mrf.mxu0
    %v1569 = vadd.f32 %v1476, %v1568
    %v1570 = vpop.f32.mrf.mxu0
    %1571 = vmatprep.mubr.f32.mxu0 0.0
    %1572 = vmatmul.mubr.f32.gmra.mxu0 %v1494
    %v1573 = vpop.f32.mrf.mxu0
    %v1574 = vadd.f32 %v1479, %v1573
    %v1575 = vpop.f32.mrf.mxu0
    %1576 = vmatprep.mubr.f32.mxu0 0.0
    %1577 = vmatmul.mubr.f32.gmra.mxu0 %v1497
    %v1578 = vpop.f32.mrf.mxu0
    %v1579 = vadd.f32 %v1484, %v1578
    %v1580 = vpop.f32.mrf.mxu0
    %1581 = vmatprep.mubr.f32.mxu0 0.0
    %1582 = vmatmul.mubr.f32.gmra.mxu0 %v1500
    %v1583 = vpop.f32.mrf.mxu0
    %v1584 = vadd.f32 %v1487, %v1583
    %v1585 = vpop.f32.mrf.mxu0
    %1586 = vdwg.mxu0
    %v1595 = vunpack.c.l.b16 %v588
    %v1596 = vunpack.c.l.b16 %v589
    %v1597 = vunpack.c.l.b16 %v590
    %v1598 = vunpack.c.l.b16 %v591
    %v1599 = vunpack.c.l.b16 %v592
    %v1600 = vunpack.c.l.b16 %v593
    %v1601 = vunpack.c.l.b16 %v594
    %v1602 = vunpack.c.l.b16 %v595
    %v1603 = vpack.c.b16 %v1596, %v1595
    %v1604 = vpack.c.b16 %v1598, %v1597
    %v1605 = vpack.c.b16 %v1600, %v1599
    %v1606 = vpack.c.b16 %v1602, %v1601
    %1611 = vmatprep.subr.bf16.mxu0 0
    %1612 = vmatpush1.bf16.msra.mxu0 0
    %1613 = vmatprep.subr.bf16.mxu0 0
    %1614 = vmatpush1.bf16.msra.mxu0 0
    %1615 = vmatprep.subr.bf16.mxu0 0
    %1616 = vmatpush1.bf16.msra.mxu0 0
    %1617 = vmatprep.subr.bf16.mxu0 0
    %1618 = vmatpush1.bf16.msra.mxu0 0
    %1619 = vmatprep.subr.bf16.mxu0 0
    %1620 = vmatpush1.bf16.msra.mxu0 %v1606
    %1621 = vmatprep.subr.bf16.mxu0 0
    %1622 = vmatpush1.bf16.msra.mxu0 %v1605
    %1623 = vmatprep.subr.bf16.mxu0 0
    %1624 = vmatpush1.bf16.msra.mxu0 %v1604
    %1625 = vmatprep.subr.bf16.mxu0 0
    %1626 = vmatpush1.bf16.msra.mxu0 %v1603
    %1627 = vmatprep.subr.bf16.mxu0 0
    %1628 = vmatpush2.bf16.msra.mxu0 0
    %1629 = vmatprep.subr.bf16.mxu0 0
    %1630 = vmatpush2.bf16.msra.mxu0 0
    %1631 = vmatprep.subr.bf16.mxu0 0
    %1632 = vmatpush2.bf16.msra.mxu0 0
    %1633 = vmatprep.subr.bf16.mxu0 0
    %1634 = vmatpush2.bf16.msra.mxu0 0
    %1635 = vmatprep.subr.bf16.mxu0 0
    %1636 = vmatpush2.bf16.msra.mxu0 0
    %1637 = vmatprep.subr.bf16.mxu0 0
    %1638 = vmatpush2.bf16.msra.mxu0 0
    %1639 = vmatprep.subr.bf16.mxu0 0
    %1640 = vmatpush2.bf16.msra.mxu0 0
    %1641 = vmatprep.subr.bf16.mxu0 0
    %1642 = vmatpush2.bf16.msra.mxu0 0
    %1643 = vmatprep.mubr.bf16.mxu0 0
    %1644 = vmatmul.mubr.bf16.gmra.mxu0 %v1363
    %v1645 = vpop.f32.mrf.mxu0
    %v1646 = vadd.f32 0.0, %v1645
    %v1647 = vpop.f32.mrf.mxu0
    %v1648 = vpop.f32.mrf.mxu0
    %v1649 = vadd.f32 0.0, %v1648
    %v1650 = vpop.f32.mrf.mxu0
    %1651 = vmatprep.mubr.bf16.mxu0 0
    %1652 = vmatmul.mubr.bf16.gmra.mxu0 %v1366
    %v1653 = vpop.f32.mrf.mxu0
    %v1654 = vadd.f32 0.0, %v1653
    %v1655 = vpop.f32.mrf.mxu0
    %v1656 = vpop.f32.mrf.mxu0
    %v1657 = vadd.f32 0.0, %v1656
    %v1658 = vpop.f32.mrf.mxu0
    %1659 = vdwg.mxu0
    %v1661 = vsel %vm946, %v601, 0
    %v1664 = vsel %vm946, %v602, 0
    %v1667 = vsel %vm946, %v603, 0
    %v1670 = vsel %vm946, %v604, 0
    %1672 = vmatprep.subr.mxu0 0.0
    %1673 = vmatpush1.msra.mxu0 0.0
    %1674 = vmatprep.subr.mxu0 0.0
    %1675 = vmatpush1.msra.mxu0 0.0
    %1676 = vmatprep.subr.mxu0 0.0
    %1677 = vmatpush1.msra.mxu0 0.0
    %1678 = vmatprep.subr.mxu0 0.0
    %1679 = vmatpush1.msra.mxu0 0.0
    %1680 = vmatprep.subr.mxu0 0.0
    %1681 = vmatpush1.msra.mxu0 0.0
    %1682 = vmatprep.subr.mxu0 0.0
    %1683 = vmatpush1.msra.mxu0 0.0
    %1684 = vmatprep.subr.mxu0 0.0
    %1685 = vmatpush1.msra.mxu0 0.0
    %1686 = vmatprep.subr.mxu0 0.0
    %1687 = vmatpush1.msra.mxu0 0.0
    %1688 = vmatprep.subr.mxu0 0.0
    %1689 = vmatpush1.msra.mxu0 0.0
    %1690 = vmatprep.subr.mxu0 0.0
    %1691 = vmatpush1.msra.mxu0 0.0
    %1692 = vmatprep.subr.mxu0 0.0
    %1693 = vmatpush1.msra.mxu0 0.0
    %1694 = vmatprep.subr.mxu0 0.0
    %1695 = vmatpush1.msra.mxu0 0.0
    %1696 = vmatprep.subr.mxu0 0.0
    %1697 = vmatpush1.msra.mxu0 %v1657
    %1698 = vmatprep.subr.mxu0 0.0
    %1699 = vmatpush1.msra.mxu0 %v1654
    %1700 = vmatprep.subr.mxu0 0.0
    %1701 = vmatpush1.msra.mxu0 %v1649
    %1702 = vmatprep.subr.mxu0 0.0
    %1703 = vmatpush1.msra.mxu0 %v1646
    %1704 = vmatprep.subr.mxu0 0.0
    %1705 = vmatpush2.msra.mxu0 0.0
    %1706 = vmatprep.subr.mxu0 0.0
    %1707 = vmatpush2.msra.mxu0 0.0
    %1708 = vmatprep.subr.mxu0 0.0
    %1709 = vmatpush2.msra.mxu0 0.0
    %1710 = vmatprep.subr.mxu0 0.0
    %1711 = vmatpush2.msra.mxu0 0.0
    %1712 = vmatprep.subr.mxu0 0.0
    %1713 = vmatpush2.msra.mxu0 0.0
    %1714 = vmatprep.subr.mxu0 0.0
    %1715 = vmatpush2.msra.mxu0 0.0
    %1716 = vmatprep.subr.mxu0 0.0
    %1717 = vmatpush2.msra.mxu0 0.0
    %1718 = vmatprep.subr.mxu0 0.0
    %1719 = vmatpush2.msra.mxu0 0.0
    %1720 = vmatprep.subr.mxu0 0.0
    %1721 = vmatpush2.msra.mxu0 0.0
    %1722 = vmatprep.subr.mxu0 0.0
    %1723 = vmatpush2.msra.mxu0 0.0
    %1724 = vmatprep.subr.mxu0 0.0
    %1725 = vmatpush2.msra.mxu0 0.0
    %1726 = vmatprep.subr.mxu0 0.0
    %1727 = vmatpush2.msra.mxu0 0.0
    %1728 = vmatprep.subr.mxu0 0.0
    %1729 = vmatpush2.msra.mxu0 0.0
    %1730 = vmatprep.subr.mxu0 0.0
    %1731 = vmatpush2.msra.mxu0 0.0
    %1732 = vmatprep.subr.mxu0 0.0
    %1733 = vmatpush2.msra.mxu0 0.0
    %1734 = vmatprep.subr.mxu0 0.0
    %1735 = vmatpush2.msra.mxu0 0.0
    %1736 = vmatprep.mubr.f32.mxu0 0.0
    %1737 = vmatmul.mubr.f32.gmra.mxu0 %v1661
    %v1738 = vpop.f32.mrf.mxu0
    %v1739 = vadd.f32 0.0, %v1738
    %v1740 = vpop.f32.mrf.mxu0
    %1741 = vmatprep.mubr.f32.mxu0 0.0
    %1742 = vmatmul.mubr.f32.gmra.mxu0 %v1664
    %v1743 = vpop.f32.mrf.mxu0
    %v1744 = vadd.f32 0.0, %v1743
    %v1745 = vpop.f32.mrf.mxu0
    %1746 = vmatprep.mubr.f32.mxu0 0.0
    %1747 = vmatmul.mubr.f32.gmra.mxu0 %v1667
    %v1748 = vpop.f32.mrf.mxu0
    %v1749 = vadd.f32 0.0, %v1748
    %v1750 = vpop.f32.mrf.mxu0
    %1751 = vmatprep.mubr.f32.mxu0 0.0
    %1752 = vmatmul.mubr.f32.gmra.mxu0 %v1670
    %v1753 = vpop.f32.mrf.mxu0
    %v1754 = vadd.f32 0.0, %v1753
    %v1755 = vpop.f32.mrf.mxu0
    %1756 = vdwg.mxu0
    %v1757 = vadd.f32 %v1569, %v1739
    %v1758 = vadd.f32 %v1574, %v1744
    %v1759 = vadd.f32 %v1579, %v1749
    %v1760 = vadd.f32 %v1584, %v1754
    %v1762 = vlaneseq
    %v1763 = vshrl.u32 %v1762, 7
    %v1764 = vsub.s32 0, %v1763
    %v1765 = vrot.slane %v596, %v1764
    %v1767 = vadd.f32 %v1757, %v1765
    %v1768 = vadd.f32 %v1758, %v1765
    %v1769 = vadd.f32 %v1759, %v1765
    %v1770 = vadd.f32 %v1760, %v1765
    %v1771 = vmax.f32 %v1767, 0.0
    %v1772 = vmax.f32 %v1768, 0.0
    %v1773 = vmax.f32 %v1769, 0.0
    %v1774 = vmax.f32 %v1770, 0.0
    %v1776 = vlaneseq
    %v1777 = vshrl.u32 %v1776, 7
    %v1778 = vsub.s32 0, %v1777
    %v1779 = vrot.slane %v621, %v1778
    %v1797 = vunpack.c.l.b16 %v605
    %v1798 = vunpack.c.l.b16 %v606
    %v1799 = vunpack.c.l.b16 %v607
    %v1800 = vunpack.c.l.b16 %v608
    %v1801 = vunpack.c.l.b16 %v609
    %v1802 = vunpack.c.l.b16 %v610
    %v1803 = vunpack.c.l.b16 %v611
    %v1804 = vunpack.c.l.b16 %v612
    %v1805 = vunpack.c.l.b16 %v613
    %v1806 = vunpack.c.l.b16 %v614
    %v1807 = vunpack.c.l.b16 %v615
    %v1808 = vunpack.c.l.b16 %v616
    %v1809 = vunpack.c.l.b16 %v617
    %v1810 = vunpack.c.l.b16 %v618
    %v1811 = vunpack.c.l.b16 %v619
    %v1812 = vunpack.c.l.b16 %v620
    %v1813 = vpack.c.b16 %v1798, %v1797
    %v1814 = vpack.c.b16 %v1800, %v1799
    %v1815 = vpack.c.b16 %v1802, %v1801
    %v1816 = vpack.c.b16 %v1804, %v1803
    %v1817 = vpack.c.b16 %v1806, %v1805
    %v1818 = vpack.c.b16 %v1808, %v1807
    %v1819 = vpack.c.b16 %v1810, %v1809
    %v1820 = vpack.c.b16 %v1812, %v1811
    %1829 = vmatprep.subr.bf16.mxu0 0
    %1830 = vmatpush1.bf16.msra.mxu0 %v1820
    %1831 = vmatprep.subr.bf16.mxu0 0
    %1832 = vmatpush1.bf16.msra.mxu0 %v1819
    %1833 = vmatprep.subr.bf16.mxu0 0
    %1834 = vmatpush1.bf16.msra.mxu0 %v1818
    %1835 = vmatprep.subr.bf16.mxu0 0
    %1836 = vmatpush1.bf16.msra.mxu0 %v1817
    %1837 = vmatprep.subr.bf16.mxu0 0
    %1838 = vmatpush1.bf16.msra.mxu0 %v1816
    %1839 = vmatprep.subr.bf16.mxu0 0
    %1840 = vmatpush1.bf16.msra.mxu0 %v1815
    %1841 = vmatprep.subr.bf16.mxu0 0
    %1842 = vmatpush1.bf16.msra.mxu0 %v1814
    %1843 = vmatprep.subr.bf16.mxu0 0
    %1844 = vmatpush1.bf16.msra.mxu0 %v1813
    %1845 = vmatprep.subr.bf16.mxu0 0
    %1846 = vmatpush2.bf16.msra.mxu0 0
    %1847 = vmatprep.subr.bf16.mxu0 0
    %1848 = vmatpush2.bf16.msra.mxu0 0
    %1849 = vmatprep.subr.bf16.mxu0 0
    %1850 = vmatpush2.bf16.msra.mxu0 0
    %1851 = vmatprep.subr.bf16.mxu0 0
    %1852 = vmatpush2.bf16.msra.mxu0 0
    %1853 = vmatprep.subr.bf16.mxu0 0
    %1854 = vmatpush2.bf16.msra.mxu0 0
    %1855 = vmatprep.subr.bf16.mxu0 0
    %1856 = vmatpush2.bf16.msra.mxu0 0
    %1857 = vmatprep.subr.bf16.mxu0 0
    %1858 = vmatpush2.bf16.msra.mxu0 0
    %1859 = vmatprep.subr.bf16.mxu0 0
    %1860 = vmatpush2.bf16.msra.mxu0 0
    %1861 = vmatprep.mubr.bf16.mxu0 0
    %1862 = vmatmul.mubr.bf16.gmra.mxu0 %v1226
    %v1863 = vpop.f32.mrf.mxu0
    %v1864 = vadd.f32 %v1779, %v1863
    %v1865 = vpop.f32.mrf.mxu0
    %v1866 = vpop.f32.mrf.mxu0
    %v1867 = vadd.f32 %v1779, %v1866
    %v1868 = vpop.f32.mrf.mxu0
    %1869 = vmatprep.mubr.bf16.mxu0 0
    %1870 = vmatmul.mubr.bf16.gmra.mxu0 %v1227
    %v1871 = vpop.f32.mrf.mxu0
    %v1872 = vadd.f32 %v1779, %v1871
    %v1873 = vpop.f32.mrf.mxu0
    %v1874 = vpop.f32.mrf.mxu0
    %v1875 = vadd.f32 %v1779, %v1874
    %v1876 = vpop.f32.mrf.mxu0
    %1877 = vdwg.mxu0
    %v1878 = vmax.f32 %v1864, 0.0
    %v1879 = vmax.f32 %v1867, 0.0
    %v1880 = vmax.f32 %v1872, 0.0
    %v1881 = vmax.f32 %v1875, 0.0
    %v1882 = vadd.f32 %v1878, %v1771
    %v1883 = vadd.f32 %v1879, %v1772
    %v1884 = vadd.f32 %v1880, %v1773
    %v1885 = vadd.f32 %v1881, %v1774
    %v1886 = vpack.c.bf16 %v1883, %v1882
    %v1887 = vpack.c.bf16 %v1885, %v1884
    %v1889 = vlaneseq
    %v1890 = vshrl.u32 %v1889, 7
    %v1891 = vsub.s32 0, %v1890
    %v1892 = vrot.slane %v630, %v1891
    %v1902 = vunpack.c.l.b16 %v622
    %v1903 = vunpack.c.l.b16 %v623
    %v1904 = vunpack.c.l.b16 %v624
    %v1905 = vunpack.c.l.b16 %v625
    %v1906 = vunpack.c.l.b16 %v626
    %v1907 = vunpack.c.l.b16 %v627
    %v1908 = vunpack.c.l.b16 %v628
    %v1909 = vunpack.c.l.b16 %v629
    %v1910 = vpack.c.b16 %v1903, %v1902
    %v1911 = vpack.c.b16 %v1905, %v1904
    %v1912 = vpack.c.b16 %v1907, %v1906
    %v1913 = vpack.c.b16 %v1909, %v1908
    %v1919 = vsel %vm1361, %v1886, 0
    %v1922 = vsel %vm1361, %v1887, 0
    %1924 = vmatprep.subr.bf16.mxu0 0
    %1925 = vmatpush1.bf16.msra.mxu0 0
    %1926 = vmatprep.subr.bf16.mxu0 0
    %1927 = vmatpush1.bf16.msra.mxu0 0
    %1928 = vmatprep.subr.bf16.mxu0 0
    %1929 = vmatpush1.bf16.msra.mxu0 0
    %1930 = vmatprep.subr.bf16.mxu0 0
    %1931 = vmatpush1.bf16.msra.mxu0 0
    %1932 = vmatprep.subr.bf16.mxu0 0
    %1933 = vmatpush1.bf16.msra.mxu0 %v1913
    %1934 = vmatprep.subr.bf16.mxu0 0
    %1935 = vmatpush1.bf16.msra.mxu0 %v1912
    %1936 = vmatprep.subr.bf16.mxu0 0
    %1937 = vmatpush1.bf16.msra.mxu0 %v1911
    %1938 = vmatprep.subr.bf16.mxu0 0
    %1939 = vmatpush1.bf16.msra.mxu0 %v1910
    %1940 = vmatprep.subr.bf16.mxu0 0
    %1941 = vmatpush2.bf16.msra.mxu0 0
    %1942 = vmatprep.subr.bf16.mxu0 0
    %1943 = vmatpush2.bf16.msra.mxu0 0
    %1944 = vmatprep.subr.bf16.mxu0 0
    %1945 = vmatpush2.bf16.msra.mxu0 0
    %1946 = vmatprep.subr.bf16.mxu0 0
    %1947 = vmatpush2.bf16.msra.mxu0 0
    %1948 = vmatprep.subr.bf16.mxu0 0
    %1949 = vmatpush2.bf16.msra.mxu0 0
    %1950 = vmatprep.subr.bf16.mxu0 0
    %1951 = vmatpush2.bf16.msra.mxu0 0
    %1952 = vmatprep.subr.bf16.mxu0 0
    %1953 = vmatpush2.bf16.msra.mxu0 0
    %1954 = vmatprep.subr.bf16.mxu0 0
    %1955 = vmatpush2.bf16.msra.mxu0 0
    %1956 = vmatprep.mubr.bf16.mxu0 0
    %1957 = vmatmul.mubr.bf16.gmra.mxu0 %v1919
    %v1958 = vpop.f32.mrf.mxu0
    %v1959 = vadd.f32 %v1892, %v1958
    %v1960 = vpop.f32.mrf.mxu0
    %v1961 = vpop.f32.mrf.mxu0
    %v1962 = vadd.f32 %v1892, %v1961
    %v1963 = vpop.f32.mrf.mxu0
    %1964 = vmatprep.mubr.bf16.mxu0 0
    %1965 = vmatmul.mubr.bf16.gmra.mxu0 %v1922
    %v1966 = vpop.f32.mrf.mxu0
    %v1967 = vadd.f32 %v1892, %v1966
    %v1968 = vpop.f32.mrf.mxu0
    %v1969 = vpop.f32.mrf.mxu0
    %v1970 = vadd.f32 %v1892, %v1969
    %v1971 = vpop.f32.mrf.mxu0
    %1972 = vdwg.mxu0
    %v1973 = vmax.f32 %v1959, 0.0
    %v1974 = vmax.f32 %v1962, 0.0
    %v1975 = vmax.f32 %v1967, 0.0
    %v1976 = vmax.f32 %v1970, 0.0
    %v1978 = vsel %vm1361, %v1973, 0
    %v1981 = vsel %vm1361, %v1974, 0
    %v1984 = vsel %vm1361, %v1975, 0
    %v1987 = vsel %vm1361, %v1976, 0
    %1989 = vmatprep.subr.mxu0 0.0
    %1990 = vmatpush1.msra.mxu0 0.0
    %1991 = vmatprep.subr.mxu0 0.0
    %1992 = vmatpush1.msra.mxu0 0.0
    %1993 = vmatprep.subr.mxu0 0.0
    %1994 = vmatpush1.msra.mxu0 0.0
    %1995 = vmatprep.subr.mxu0 0.0
    %1996 = vmatpush1.msra.mxu0 0.0
    %1997 = vmatprep.subr.mxu0 0.0
    %1998 = vmatpush1.msra.mxu0 0.0
    %1999 = vmatprep.subr.mxu0 0.0
    %2000 = vmatpush1.msra.mxu0 0.0
    %2001 = vmatprep.subr.mxu0 0.0
    %2002 = vmatpush1.msra.mxu0 0.0
    %2003 = vmatprep.subr.mxu0 0.0
    %2004 = vmatpush1.msra.mxu0 0.0
    %2005 = vmatprep.subr.mxu0 0.0
    %2006 = vmatpush1.msra.mxu0 %v646
    %2007 = vmatprep.subr.mxu0 0.0
    %2008 = vmatpush1.msra.mxu0 %v645
    %2009 = vmatprep.subr.mxu0 0.0
    %2010 = vmatpush1.msra.mxu0 %v644
    %2011 = vmatprep.subr.mxu0 0.0
    %2012 = vmatpush1.msra.mxu0 %v643
    %2013 = vmatprep.subr.mxu0 0.0
    %2014 = vmatpush1.msra.mxu0 %v642
    %2015 = vmatprep.subr.mxu0 0.0
    %2016 = vmatpush1.msra.mxu0 %v641
    %2017 = vmatprep.subr.mxu0 0.0
    %2018 = vmatpush1.msra.mxu0 %v640
    %2019 = vmatprep.subr.mxu0 0.0
    %2020 = vmatpush1.msra.mxu0 %v639
    %2021 = vmatprep.subr.mxu0 0.0
    %2022 = vmatpush2.msra.mxu0 0.0
    %2023 = vmatprep.subr.mxu0 0.0
    %2024 = vmatpush2.msra.mxu0 0.0
    %2025 = vmatprep.subr.mxu0 0.0
    %2026 = vmatpush2.msra.mxu0 0.0
    %2027 = vmatprep.subr.mxu0 0.0
    %2028 = vmatpush2.msra.mxu0 0.0
    %2029 = vmatprep.subr.mxu0 0.0
    %2030 = vmatpush2.msra.mxu0 0.0
    %2031 = vmatprep.subr.mxu0 0.0
    %2032 = vmatpush2.msra.mxu0 0.0
    %2033 = vmatprep.subr.mxu0 0.0
    %2034 = vmatpush2.msra.mxu0 0.0
    %2035 = vmatprep.subr.mxu0 0.0
    %2036 = vmatpush2.msra.mxu0 0.0
    %2037 = vmatprep.subr.mxu0 0.0
    %2038 = vmatpush2.msra.mxu0 0.0
    %2039 = vmatprep.subr.mxu0 0.0
    %2040 = vmatpush2.msra.mxu0 0.0
    %2041 = vmatprep.subr.mxu0 0.0
    %2042 = vmatpush2.msra.mxu0 0.0
    %2043 = vmatprep.subr.mxu0 0.0
    %2044 = vmatpush2.msra.mxu0 0.0
    %2045 = vmatprep.subr.mxu0 0.0
    %2046 = vmatpush2.msra.mxu0 0.0
    %2047 = vmatprep.subr.mxu0 0.0
    %2048 = vmatpush2.msra.mxu0 0.0
    %2049 = vmatprep.subr.mxu0 0.0
    %2050 = vmatpush2.msra.mxu0 0.0
    %2051 = vmatprep.subr.mxu0 0.0
    %2052 = vmatpush2.msra.mxu0 0.0
    %2053 = vmatprep.mubr.f32.mxu0 0.0
    %2054 = vmatmul.mubr.f32.gmra.mxu0 %v1978
    %v2055 = vpop.f32.mrf.mxu0
    %v2056 = vadd.f32 0.0, %v2055
    %v2057 = vpop.f32.mrf.mxu0
    %2058 = vmatprep.mubr.f32.mxu0 0.0
    %2059 = vmatmul.mubr.f32.gmra.mxu0 %v1981
    %v2060 = vpop.f32.mrf.mxu0
    %v2061 = vadd.f32 0.0, %v2060
    %v2062 = vpop.f32.mrf.mxu0
    %2063 = vmatprep.mubr.f32.mxu0 0.0
    %2064 = vmatmul.mubr.f32.gmra.mxu0 %v1984
    %v2065 = vpop.f32.mrf.mxu0
    %v2066 = vadd.f32 0.0, %v2065
    %v2067 = vpop.f32.mrf.mxu0
    %2068 = vmatprep.mubr.f32.mxu0 0.0
    %2069 = vmatmul.mubr.f32.gmra.mxu0 %v1987
    %v2070 = vpop.f32.mrf.mxu0
    %v2071 = vadd.f32 0.0, %v2070
    %v2072 = vpop.f32.mrf.mxu0
    %2073 = vdwg.mxu0
    %v2075 = vsel %vm1361, %v1771, 0
    %v2078 = vsel %vm1361, %v1772, 0
    %v2081 = vsel %vm1361, %v1773, 0
    %v2084 = vsel %vm1361, %v1774, 0
    %2086 = vmatprep.subr.mxu0 0.0
    %2087 = vmatpush1.msra.mxu0 0.0
    %2088 = vmatprep.subr.mxu0 0.0
    %2089 = vmatpush1.msra.mxu0 0.0
    %2090 = vmatprep.subr.mxu0 0.0
    %2091 = vmatpush1.msra.mxu0 0.0
    %2092 = vmatprep.subr.mxu0 0.0
    %2093 = vmatpush1.msra.mxu0 0.0
    %2094 = vmatprep.subr.mxu0 0.0
    %2095 = vmatpush1.msra.mxu0 0.0
    %2096 = vmatprep.subr.mxu0 0.0
    %2097 = vmatpush1.msra.mxu0 0.0
    %2098 = vmatprep.subr.mxu0 0.0
    %2099 = vmatpush1.msra.mxu0 0.0
    %2100 = vmatprep.subr.mxu0 0.0
    %2101 = vmatpush1.msra.mxu0 0.0
    %2102 = vmatprep.subr.mxu0 0.0
    %2103 = vmatpush1.msra.mxu0 %v638
    %2104 = vmatprep.subr.mxu0 0.0
    %2105 = vmatpush1.msra.mxu0 %v637
    %2106 = vmatprep.subr.mxu0 0.0
    %2107 = vmatpush1.msra.mxu0 %v636
    %2108 = vmatprep.subr.mxu0 0.0
    %2109 = vmatpush1.msra.mxu0 %v635
    %2110 = vmatprep.subr.mxu0 0.0
    %2111 = vmatpush1.msra.mxu0 %v634
    %2112 = vmatprep.subr.mxu0 0.0
    %2113 = vmatpush1.msra.mxu0 %v633
    %2114 = vmatprep.subr.mxu0 0.0
    %2115 = vmatpush1.msra.mxu0 %v632
    %2116 = vmatprep.subr.mxu0 0.0
    %2117 = vmatpush1.msra.mxu0 %v631
    %2118 = vmatprep.subr.mxu0 0.0
    %2119 = vmatpush2.msra.mxu0 0.0
    %2120 = vmatprep.subr.mxu0 0.0
    %2121 = vmatpush2.msra.mxu0 0.0
    %2122 = vmatprep.subr.mxu0 0.0
    %2123 = vmatpush2.msra.mxu0 0.0
    %2124 = vmatprep.subr.mxu0 0.0
    %2125 = vmatpush2.msra.mxu0 0.0
    %2126 = vmatprep.subr.mxu0 0.0
    %2127 = vmatpush2.msra.mxu0 0.0
    %2128 = vmatprep.subr.mxu0 0.0
    %2129 = vmatpush2.msra.mxu0 0.0
    %2130 = vmatprep.subr.mxu0 0.0
    %2131 = vmatpush2.msra.mxu0 0.0
    %2132 = vmatprep.subr.mxu0 0.0
    %2133 = vmatpush2.msra.mxu0 0.0
    %2134 = vmatprep.subr.mxu0 0.0
    %2135 = vmatpush2.msra.mxu0 0.0
    %2136 = vmatprep.subr.mxu0 0.0
    %2137 = vmatpush2.msra.mxu0 0.0
    %2138 = vmatprep.subr.mxu0 0.0
    %2139 = vmatpush2.msra.mxu0 0.0
    %2140 = vmatprep.subr.mxu0 0.0
    %2141 = vmatpush2.msra.mxu0 0.0
    %2142 = vmatprep.subr.mxu0 0.0
    %2143 = vmatpush2.msra.mxu0 0.0
    %2144 = vmatprep.subr.mxu0 0.0
    %2145 = vmatpush2.msra.mxu0 0.0
    %2146 = vmatprep.subr.mxu0 0.0
    %2147 = vmatpush2.msra.mxu0 0.0
    %2148 = vmatprep.subr.mxu0 0.0
    %2149 = vmatpush2.msra.mxu0 0.0
    %2150 = vmatprep.mubr.f32.mxu0 0.0
    %2151 = vmatmul.mubr.f32.gmra.mxu0 %v2075
    %v2152 = vpop.f32.mrf.mxu0
    %v2153 = vadd.f32 %v2056, %v2152
    %v2154 = vpop.f32.mrf.mxu0
    %2155 = vmatprep.mubr.f32.mxu0 0.0
    %2156 = vmatmul.mubr.f32.gmra.mxu0 %v2078
    %v2157 = vpop.f32.mrf.mxu0
    %v2158 = vadd.f32 %v2061, %v2157
    %v2159 = vpop.f32.mrf.mxu0
    %2160 = vmatprep.mubr.f32.mxu0 0.0
    %2161 = vmatmul.mubr.f32.gmra.mxu0 %v2081
    %v2162 = vpop.f32.mrf.mxu0
    %v2163 = vadd.f32 %v2066, %v2162
    %v2164 = vpop.f32.mrf.mxu0
    %2165 = vmatprep.mubr.f32.mxu0 0.0
    %2166 = vmatmul.mubr.f32.gmra.mxu0 %v2084
    %v2167 = vpop.f32.mrf.mxu0
    %v2168 = vadd.f32 %v2071, %v2167
    %v2169 = vpop.f32.mrf.mxu0
    %2170 = vdwg.mxu0
    %v2172 = vlaneseq
    %v2173 = vshrl.u32 %v2172, 7
    %v2174 = vsub.s32 0, %v2173
    %v2175 = vrot.slane %v663, %v2174
    %v2193 = vunpack.c.l.b16 %v647
    %v2194 = vunpack.c.l.b16 %v648
    %v2195 = vunpack.c.l.b16 %v649
    %v2196 = vunpack.c.l.b16 %v650
    %v2197 = vunpack.c.l.b16 %v651
    %v2198 = vunpack.c.l.b16 %v652
    %v2199 = vunpack.c.l.b16 %v653
    %v2200 = vunpack.c.l.b16 %v654
    %v2201 = vunpack.c.l.b16 %v655
    %v2202 = vunpack.c.l.b16 %v656
    %v2203 = vunpack.c.l.b16 %v657
    %v2204 = vunpack.c.l.b16 %v658
    %v2205 = vunpack.c.l.b16 %v659
    %v2206 = vunpack.c.l.b16 %v660
    %v2207 = vunpack.c.l.b16 %v661
    %v2208 = vunpack.c.l.b16 %v662
    %v2209 = vpack.c.b16 %v2194, %v2193
    %v2210 = vpack.c.b16 %v2196, %v2195
    %v2211 = vpack.c.b16 %v2198, %v2197
    %v2212 = vpack.c.b16 %v2200, %v2199
    %v2213 = vpack.c.b16 %v2202, %v2201
    %v2214 = vpack.c.b16 %v2204, %v2203
    %v2215 = vpack.c.b16 %v2206, %v2205
    %v2216 = vpack.c.b16 %v2208, %v2207
    %2225 = vmatprep.subr.bf16.mxu0 0
    %2226 = vmatpush1.bf16.msra.mxu0 %v2216
    %2227 = vmatprep.subr.bf16.mxu0 0
    %2228 = vmatpush1.bf16.msra.mxu0 %v2215
    %2229 = vmatprep.subr.bf16.mxu0 0
    %2230 = vmatpush1.bf16.msra.mxu0 %v2214
    %2231 = vmatprep.subr.bf16.mxu0 0
    %2232 = vmatpush1.bf16.msra.mxu0 %v2213
    %2233 = vmatprep.subr.bf16.mxu0 0
    %2234 = vmatpush1.bf16.msra.mxu0 %v2212
    %2235 = vmatprep.subr.bf16.mxu0 0
    %2236 = vmatpush1.bf16.msra.mxu0 %v2211
    %2237 = vmatprep.subr.bf16.mxu0 0
    %2238 = vmatpush1.bf16.msra.mxu0 %v2210
    %2239 = vmatprep.subr.bf16.mxu0 0
    %2240 = vmatpush1.bf16.msra.mxu0 %v2209
    %2241 = vmatprep.subr.bf16.mxu0 0
    %2242 = vmatpush2.bf16.msra.mxu0 0
    %2243 = vmatprep.subr.bf16.mxu0 0
    %2244 = vmatpush2.bf16.msra.mxu0 0
    %2245 = vmatprep.subr.bf16.mxu0 0
    %2246 = vmatpush2.bf16.msra.mxu0 0
    %2247 = vmatprep.subr.bf16.mxu0 0
    %2248 = vmatpush2.bf16.msra.mxu0 0
    %2249 = vmatprep.subr.bf16.mxu0 0
    %2250 = vmatpush2.bf16.msra.mxu0 0
    %2251 = vmatprep.subr.bf16.mxu0 0
    %2252 = vmatpush2.bf16.msra.mxu0 0
    %2253 = vmatprep.subr.bf16.mxu0 0
    %2254 = vmatpush2.bf16.msra.mxu0 0
    %2255 = vmatprep.subr.bf16.mxu0 0
    %2256 = vmatpush2.bf16.msra.mxu0 0
    %2257 = vmatprep.mubr.bf16.mxu0 0
    %2258 = vmatmul.mubr.bf16.gmra.mxu0 %v1226
    %v2259 = vpop.f32.mrf.mxu0
    %v2260 = vadd.f32 %v2175, %v2259
    %v2261 = vpop.f32.mrf.mxu0
    %v2262 = vpop.f32.mrf.mxu0
    %v2263 = vadd.f32 %v2175, %v2262
    %v2264 = vpop.f32.mrf.mxu0
    %2265 = vmatprep.mubr.bf16.mxu0 0
    %2266 = vmatmul.mubr.bf16.gmra.mxu0 %v1227
    %v2267 = vpop.f32.mrf.mxu0
    %v2268 = vadd.f32 %v2175, %v2267
    %v2269 = vpop.f32.mrf.mxu0
    %v2270 = vpop.f32.mrf.mxu0
    %v2271 = vadd.f32 %v2175, %v2270
    %v2272 = vpop.f32.mrf.mxu0
    %2273 = vdwg.mxu0
    %v2274 = vmax.f32 %v2260, 0.0
    %v2275 = vmax.f32 %v2263, 0.0
    %v2276 = vmax.f32 %v2268, 0.0
    %v2277 = vmax.f32 %v2271, 0.0
    %v2278 = vadd.f32 %v2274, %v2153
    %v2279 = vadd.f32 %v2275, %v2158
    %v2280 = vadd.f32 %v2276, %v2163
    %v2281 = vadd.f32 %v2277, %v2168
    %v2283 = vsel %vm946, %v664, 0
    %v2286 = vsel %vm946, %v665, 0
    %2288 = vmatprep.subr.mxu0 0.0
    %2289 = vmatpush1.msra.mxu0 0.0
    %2290 = vmatprep.subr.mxu0 0.0
    %2291 = vmatpush1.msra.mxu0 0.0
    %2292 = vmatprep.subr.mxu0 0.0
    %2293 = vmatpush1.msra.mxu0 0.0
    %2294 = vmatprep.subr.mxu0 0.0
    %2295 = vmatpush1.msra.mxu0 0.0
    %2296 = vmatprep.subr.mxu0 0.0
    %2297 = vmatpush1.msra.mxu0 0.0
    %2298 = vmatprep.subr.mxu0 0.0
    %2299 = vmatpush1.msra.mxu0 0.0
    %2300 = vmatprep.subr.mxu0 0.0
    %2301 = vmatpush1.msra.mxu0 0.0
    %2302 = vmatprep.subr.mxu0 0.0
    %2303 = vmatpush1.msra.mxu0 0.0
    %2304 = vmatprep.subr.mxu0 0.0
    %2305 = vmatpush1.msra.mxu0 0.0
    %2306 = vmatprep.subr.mxu0 0.0
    %2307 = vmatpush1.msra.mxu0 0.0
    %2308 = vmatprep.subr.mxu0 0.0
    %2309 = vmatpush1.msra.mxu0 0.0
    %2310 = vmatprep.subr.mxu0 0.0
    %2311 = vmatpush1.msra.mxu0 0.0
    %2312 = vmatprep.subr.mxu0 0.0
    %2313 = vmatpush1.msra.mxu0 %v2281
    %2314 = vmatprep.subr.mxu0 0.0
    %2315 = vmatpush1.msra.mxu0 %v2280
    %2316 = vmatprep.subr.mxu0 0.0
    %2317 = vmatpush1.msra.mxu0 %v2279
    %2318 = vmatprep.subr.mxu0 0.0
    %2319 = vmatpush1.msra.mxu0 %v2278
    %2320 = vmatprep.subr.mxu0 0.0
    %2321 = vmatpush2.msra.mxu0 0.0
    %2322 = vmatprep.subr.mxu0 0.0
    %2323 = vmatpush2.msra.mxu0 0.0
    %2324 = vmatprep.subr.mxu0 0.0
    %2325 = vmatpush2.msra.mxu0 0.0
    %2326 = vmatprep.subr.mxu0 0.0
    %2327 = vmatpush2.msra.mxu0 0.0
    %2328 = vmatprep.subr.mxu0 0.0
    %2329 = vmatpush2.msra.mxu0 0.0
    %2330 = vmatprep.subr.mxu0 0.0
    %2331 = vmatpush2.msra.mxu0 0.0
    %2332 = vmatprep.subr.mxu0 0.0
    %2333 = vmatpush2.msra.mxu0 0.0
    %2334 = vmatprep.subr.mxu0 0.0
    %2335 = vmatpush2.msra.mxu0 0.0
    %2336 = vmatprep.subr.mxu0 0.0
    %2337 = vmatpush2.msra.mxu0 0.0
    %2338 = vmatprep.subr.mxu0 0.0
    %2339 = vmatpush2.msra.mxu0 0.0
    %2340 = vmatprep.subr.mxu0 0.0
    %2341 = vmatpush2.msra.mxu0 0.0
    %2342 = vmatprep.subr.mxu0 0.0
    %2343 = vmatpush2.msra.mxu0 0.0
    %2344 = vmatprep.subr.mxu0 0.0
    %2345 = vmatpush2.msra.mxu0 0.0
    %2346 = vmatprep.subr.mxu0 0.0
    %2347 = vmatpush2.msra.mxu0 0.0
    %2348 = vmatprep.subr.mxu0 0.0
    %2349 = vmatpush2.msra.mxu0 0.0
    %2350 = vmatprep.subr.mxu0 0.0
    %2351 = vmatpush2.msra.mxu0 0.0
    %2352 = vmatprep.mubr.f32.mxu0 0.0
    %2353 = vmatmul.mubr.f32.gmra.mxu0 %v2283
    %v2354 = vpop.f32.mrf.mxu0
    %v2355 = vadd.f32 0.0, %v2354
    %v2356 = vpop.f32.mrf.mxu0
    %2357 = vmatprep.mubr.f32.mxu0 0.0
    %2358 = vmatmul.mubr.f32.gmra.mxu0 %v2286
    %v2359 = vpop.f32.mrf.mxu0
    %v2360 = vadd.f32 0.0, %v2359
    %v2361 = vpop.f32.mrf.mxu0
    %2362 = vdwg.mxu0
    %v2364 = vsel %vm946, %v666, 0
    %v2367 = vsel %vm946, %v667, 0
    %2369 = vmatprep.subr.mxu0 0.0
    %2370 = vmatpush1.msra.mxu0 0.0
    %2371 = vmatprep.subr.mxu0 0.0
    %2372 = vmatpush1.msra.mxu0 0.0
    %2373 = vmatprep.subr.mxu0 0.0
    %2374 = vmatpush1.msra.mxu0 0.0
    %2375 = vmatprep.subr.mxu0 0.0
    %2376 = vmatpush1.msra.mxu0 0.0
    %2377 = vmatprep.subr.mxu0 0.0
    %2378 = vmatpush1.msra.mxu0 0.0
    %2379 = vmatprep.subr.mxu0 0.0
    %2380 = vmatpush1.msra.mxu0 0.0
    %2381 = vmatprep.subr.mxu0 0.0
    %2382 = vmatpush1.msra.mxu0 0.0
    %2383 = vmatprep.subr.mxu0 0.0
    %2384 = vmatpush1.msra.mxu0 0.0
    %2385 = vmatprep.subr.mxu0 0.0
    %2386 = vmatpush1.msra.mxu0 0.0
    %2387 = vmatprep.subr.mxu0 0.0
    %2388 = vmatpush1.msra.mxu0 0.0
    %2389 = vmatprep.subr.mxu0 0.0
    %2390 = vmatpush1.msra.mxu0 0.0
    %2391 = vmatprep.subr.mxu0 0.0
    %2392 = vmatpush1.msra.mxu0 0.0
    %2393 = vmatprep.subr.mxu0 0.0
    %2394 = vmatpush1.msra.mxu0 %v2281
    %2395 = vmatprep.subr.mxu0 0.0
    %2396 = vmatpush1.msra.mxu0 %v2280
    %2397 = vmatprep.subr.mxu0 0.0
    %2398 = vmatpush1.msra.mxu0 %v2279
    %2399 = vmatprep.subr.mxu0 0.0
    %2400 = vmatpush1.msra.mxu0 %v2278
    %2401 = vmatprep.subr.mxu0 0.0
    %2402 = vmatpush2.msra.mxu0 0.0
    %2403 = vmatprep.subr.mxu0 0.0
    %2404 = vmatpush2.msra.mxu0 0.0
    %2405 = vmatprep.subr.mxu0 0.0
    %2406 = vmatpush2.msra.mxu0 0.0
    %2407 = vmatprep.subr.mxu0 0.0
    %2408 = vmatpush2.msra.mxu0 0.0
    %2409 = vmatprep.subr.mxu0 0.0
    %2410 = vmatpush2.msra.mxu0 0.0
    %2411 = vmatprep.subr.mxu0 0.0
    %2412 = vmatpush2.msra.mxu0 0.0
    %2413 = vmatprep.subr.mxu0 0.0
    %2414 = vmatpush2.msra.mxu0 0.0
    %2415 = vmatprep.subr.mxu0 0.0
    %2416 = vmatpush2.msra.mxu0 0.0
    %2417 = vmatprep.subr.mxu0 0.0
    %2418 = vmatpush2.msra.mxu0 0.0
    %2419 = vmatprep.subr.mxu0 0.0
    %2420 = vmatpush2.msra.mxu0 0.0
    %2421 = vmatprep.subr.mxu0 0.0
    %2422 = vmatpush2.msra.mxu0 0.0
    %2423 = vmatprep.subr.mxu0 0.0
    %2424 = vmatpush2.msra.mxu0 0.0
    %2425 = vmatprep.subr.mxu0 0.0
    %2426 = vmatpush2.msra.mxu0 0.0
    %2427 = vmatprep.subr.mxu0 0.0
    %2428 = vmatpush2.msra.mxu0 0.0
    %2429 = vmatprep.subr.mxu0 0.0
    %2430 = vmatpush2.msra.mxu0 0.0
    %2431 = vmatprep.subr.mxu0 0.0
    %2432 = vmatpush2.msra.mxu0 0.0
    %2433 = vmatprep.mubr.f32.mxu0 0.0
    %2434 = vmatmul.mubr.f32.gmra.mxu0 %v2364
    %v2435 = vpop.f32.mrf.mxu0
    %v2436 = vadd.f32 0.0, %v2435
    %v2437 = vpop.f32.mrf.mxu0
    %2438 = vmatprep.mubr.f32.mxu0 0.0
    %2439 = vmatmul.mubr.f32.gmra.mxu0 %v2367
    %v2440 = vpop.f32.mrf.mxu0
    %v2441 = vadd.f32 0.0, %v2440
    %v2442 = vpop.f32.mrf.mxu0
    %2443 = vdwg.mxu0
    %v2444 = vmax.f32 %v2355, %v2436
    %v2445 = vmax.f32 %v2360, %v2441
    %2446 = vmatprep.subr.mxu0 0.0
    %2447 = vmatpush1.msra.mxu0 %v683
    %2448 = vmatprep.subr.mxu0 0.0
    %2449 = vmatpush1.msra.mxu0 %v682
    %2450 = vmatprep.subr.mxu0 0.0
    %2451 = vmatpush1.msra.mxu0 %v681
    %2452 = vmatprep.subr.mxu0 0.0
    %2453 = vmatpush1.msra.mxu0 %v680
    %2454 = vmatprep.subr.mxu0 0.0
    %2455 = vmatpush1.msra.mxu0 %v679
    %2456 = vmatprep.subr.mxu0 0.0
    %2457 = vmatpush1.msra.mxu0 %v678
    %2458 = vmatprep.subr.mxu0 0.0
    %2459 = vmatpush1.msra.mxu0 %v677
    %2460 = vmatprep.subr.mxu0 0.0
    %2461 = vmatpush1.msra.mxu0 %v676
    %2462 = vmatprep.subr.mxu0 0.0
    %2463 = vmatpush1.msra.mxu0 %v675
    %2464 = vmatprep.subr.mxu0 0.0
    %2465 = vmatpush1.msra.mxu0 %v674
    %2466 = vmatprep.subr.mxu0 0.0
    %2467 = vmatpush1.msra.mxu0 %v673
    %2468 = vmatprep.subr.mxu0 0.0
    %2469 = vmatpush1.msra.mxu0 %v672
    %2470 = vmatprep.subr.mxu0 0.0
    %2471 = vmatpush1.msra.mxu0 %v671
    %2472 = vmatprep.subr.mxu0 0.0
    %2473 = vmatpush1.msra.mxu0 %v670
    %2474 = vmatprep.subr.mxu0 0.0
    %2475 = vmatpush1.msra.mxu0 %v669
    %2476 = vmatprep.subr.mxu0 0.0
    %2477 = vmatpush1.msra.mxu0 %v668
    %2478 = vmatprep.subr.mxu0 0.0
    %2479 = vmatpush2.msra.mxu0 0.0
    %2480 = vmatprep.subr.mxu0 0.0
    %2481 = vmatpush2.msra.mxu0 0.0
    %2482 = vmatprep.subr.mxu0 0.0
    %2483 = vmatpush2.msra.mxu0 0.0
    %2484 = vmatprep.subr.mxu0 0.0
    %2485 = vmatpush2.msra.mxu0 0.0
    %2486 = vmatprep.subr.mxu0 0.0
    %2487 = vmatpush2.msra.mxu0 0.0
    %2488 = vmatprep.subr.mxu0 0.0
    %2489 = vmatpush2.msra.mxu0 0.0
    %2490 = vmatprep.subr.mxu0 0.0
    %2491 = vmatpush2.msra.mxu0 0.0
    %2492 = vmatprep.subr.mxu0 0.0
    %2493 = vmatpush2.msra.mxu0 0.0
    %2494 = vmatprep.subr.mxu0 0.0
    %2495 = vmatpush2.msra.mxu0 0.0
    %2496 = vmatprep.subr.mxu0 0.0
    %2497 = vmatpush2.msra.mxu0 0.0
    %2498 = vmatprep.subr.mxu0 0.0
    %2499 = vmatpush2.msra.mxu0 0.0
    %2500 = vmatprep.subr.mxu0 0.0
    %2501 = vmatpush2.msra.mxu0 0.0
    %2502 = vmatprep.subr.mxu0 0.0
    %2503 = vmatpush2.msra.mxu0 0.0
    %2504 = vmatprep.subr.mxu0 0.0
    %2505 = vmatpush2.msra.mxu0 0.0
    %2506 = vmatprep.subr.mxu0 0.0
    %2507 = vmatpush2.msra.mxu0 0.0
    %2508 = vmatprep.subr.mxu0 0.0
    %2509 = vmatpush2.msra.mxu0 0.0
    %2510 = vmatprep.mubr.f32.mxu0 0.0
    %2511 = vmatmul.mubr.f32.gmra.mxu0 %v2444
    %v2512 = vpop.f32.mrf.mxu0
    %v2513 = vadd.f32 0.0, %v2512
    %v2514 = vpop.f32.mrf.mxu0
    %2515 = vmatprep.mubr.f32.mxu0 0.0
    %2516 = vmatmul.mubr.f32.gmra.mxu0 %v2445
    %v2517 = vpop.f32.mrf.mxu0
    %v2518 = vadd.f32 0.0, %v2517
    %v2519 = vpop.f32.mrf.mxu0
    %2520 = vdwg.mxu0
    %2521 = vmatprep.subr.mxu0 0.0
    %2522 = vmatpush1.msra.mxu0 %v699
    %2523 = vmatprep.subr.mxu0 0.0
    %2524 = vmatpush1.msra.mxu0 %v698
    %2525 = vmatprep.subr.mxu0 0.0
    %2526 = vmatpush1.msra.mxu0 %v697
    %2527 = vmatprep.subr.mxu0 0.0
    %2528 = vmatpush1.msra.mxu0 %v696
    %2529 = vmatprep.subr.mxu0 0.0
    %2530 = vmatpush1.msra.mxu0 %v695
    %2531 = vmatprep.subr.mxu0 0.0
    %2532 = vmatpush1.msra.mxu0 %v694
    %2533 = vmatprep.subr.mxu0 0.0
    %2534 = vmatpush1.msra.mxu0 %v693
    %2535 = vmatprep.subr.mxu0 0.0
    %2536 = vmatpush1.msra.mxu0 %v692
    %2537 = vmatprep.subr.mxu0 0.0
    %2538 = vmatpush1.msra.mxu0 %v691
    %2539 = vmatprep.subr.mxu0 0.0
    %2540 = vmatpush1.msra.mxu0 %v690
    %2541 = vmatprep.subr.mxu0 0.0
    %2542 = vmatpush1.msra.mxu0 %v689
    %2543 = vmatprep.subr.mxu0 0.0
    %2544 = vmatpush1.msra.mxu0 %v688
    %2545 = vmatprep.subr.mxu0 0.0
    %2546 = vmatpush1.msra.mxu0 %v687
    %2547 = vmatprep.subr.mxu0 0.0
    %2548 = vmatpush1.msra.mxu0 %v686
    %2549 = vmatprep.subr.mxu0 0.0
    %2550 = vmatpush1.msra.mxu0 %v685
    %2551 = vmatprep.subr.mxu0 0.0
    %2552 = vmatpush1.msra.mxu0 %v684
    %2553 = vmatprep.subr.mxu0 0.0
    %2554 = vmatpush2.msra.mxu0 0.0
    %2555 = vmatprep.subr.mxu0 0.0
    %2556 = vmatpush2.msra.mxu0 0.0
    %2557 = vmatprep.subr.mxu0 0.0
    %2558 = vmatpush2.msra.mxu0 0.0
    %2559 = vmatprep.subr.mxu0 0.0
    %2560 = vmatpush2.msra.mxu0 0.0
    %2561 = vmatprep.subr.mxu0 0.0
    %2562 = vmatpush2.msra.mxu0 0.0
    %2563 = vmatprep.subr.mxu0 0.0
    %2564 = vmatpush2.msra.mxu0 0.0
    %2565 = vmatprep.subr.mxu0 0.0
    %2566 = vmatpush2.msra.mxu0 0.0
    %2567 = vmatprep.subr.mxu0 0.0
    %2568 = vmatpush2.msra.mxu0 0.0
    %2569 = vmatprep.subr.mxu0 0.0
    %2570 = vmatpush2.msra.mxu0 0.0
    %2571 = vmatprep.subr.mxu0 0.0
    %2572 = vmatpush2.msra.mxu0 0.0
    %2573 = vmatprep.subr.mxu0 0.0
    %2574 = vmatpush2.msra.mxu0 0.0
    %2575 = vmatprep.subr.mxu0 0.0
    %2576 = vmatpush2.msra.mxu0 0.0
    %2577 = vmatprep.subr.mxu0 0.0
    %2578 = vmatpush2.msra.mxu0 0.0
    %2579 = vmatprep.subr.mxu0 0.0
    %2580 = vmatpush2.msra.mxu0 0.0
    %2581 = vmatprep.subr.mxu0 0.0
    %2582 = vmatpush2.msra.mxu0 0.0
    %2583 = vmatprep.subr.mxu0 0.0
    %2584 = vmatpush2.msra.mxu0 0.0
    %2585 = vmatprep.mubr.f32.mxu0 0.0
    %2586 = vmatmul.mubr.f32.gmra.mxu0 %v2444
    %v2587 = vpop.f32.mrf.mxu0
    %v2588 = vadd.f32 0.0, %v2587
    %v2589 = vpop.f32.mrf.mxu0
    %2590 = vmatprep.mubr.f32.mxu0 0.0
    %2591 = vmatmul.mubr.f32.gmra.mxu0 %v2445
    %v2592 = vpop.f32.mrf.mxu0
    %v2593 = vadd.f32 0.0, %v2592
    %v2594 = vpop.f32.mrf.mxu0
    %2595 = vdwg.mxu0
    %v2596 = vmax.f32 %v2513, %v2588
    %v2597 = vmax.f32 %v2518, %v2593
    %v2598 = vpack.c.bf16 %v2597, %v2596
    %v2600 = vlaneseq
    %v2601 = vshrl.u32 %v2600, 7
    %v2602 = vsub.s32 0, %v2601
    %v2603 = vrot.slane %v708, %v2602
    %v2613 = vunpack.c.l.b16 %v700
    %v2614 = vunpack.c.l.b16 %v701
    %v2615 = vunpack.c.l.b16 %v702
    %v2616 = vunpack.c.l.b16 %v703
    %v2617 = vunpack.c.l.b16 %v704
    %v2618 = vunpack.c.l.b16 %v705
    %v2619 = vunpack.c.l.b16 %v706
    %v2620 = vunpack.c.l.b16 %v707
    %v2621 = vpack.c.b16 %v2614, %v2613
    %v2622 = vpack.c.b16 %v2616, %v2615
    %v2623 = vpack.c.b16 %v2618, %v2617
    %v2624 = vpack.c.b16 %v2620, %v2619
    %v2630 = vsel %vm1361, %v2598, 0
    %2632 = vmatprep.subr.bf16.mxu0 0
    %2633 = vmatpush1.bf16.msra.mxu0 0
    %2634 = vmatprep.subr.bf16.mxu0 0
    %2635 = vmatpush1.bf16.msra.mxu0 0
    %2636 = vmatprep.subr.bf16.mxu0 0
    %2637 = vmatpush1.bf16.msra.mxu0 0
    %2638 = vmatprep.subr.bf16.mxu0 0
    %2639 = vmatpush1.bf16.msra.mxu0 0
    %2640 = vmatprep.subr.bf16.mxu0 0
    %2641 = vmatpush1.bf16.msra.mxu0 %v2624
    %2642 = vmatprep.subr.bf16.mxu0 0
    %2643 = vmatpush1.bf16.msra.mxu0 %v2623
    %2644 = vmatprep.subr.bf16.mxu0 0
    %2645 = vmatpush1.bf16.msra.mxu0 %v2622
    %2646 = vmatprep.subr.bf16.mxu0 0
    %2647 = vmatpush1.bf16.msra.mxu0 %v2621
    %2648 = vmatprep.subr.bf16.mxu0 0
    %2649 = vmatpush2.bf16.msra.mxu0 0
    %2650 = vmatprep.subr.bf16.mxu0 0
    %2651 = vmatpush2.bf16.msra.mxu0 0
    %2652 = vmatprep.subr.bf16.mxu0 0
    %2653 = vmatpush2.bf16.msra.mxu0 0
    %2654 = vmatprep.subr.bf16.mxu0 0
    %2655 = vmatpush2.bf16.msra.mxu0 0
    %2656 = vmatprep.subr.bf16.mxu0 0
    %2657 = vmatpush2.bf16.msra.mxu0 0
    %2658 = vmatprep.subr.bf16.mxu0 0
    %2659 = vmatpush2.bf16.msra.mxu0 0
    %2660 = vmatprep.subr.bf16.mxu0 0
    %2661 = vmatpush2.bf16.msra.mxu0 0
    %2662 = vmatprep.subr.bf16.mxu0 0
    %2663 = vmatpush2.bf16.msra.mxu0 0
    %2664 = vmatprep.mubr.bf16.mxu0 0
    %2665 = vmatmul.mubr.bf16.gmra.mxu0 %v2630
    %v2666 = vpop.f32.mrf.mxu0
    %v2667 = vadd.f32 %v2603, %v2666
    %v2668 = vpop.f32.mrf.mxu0
    %v2669 = vpop.f32.mrf.mxu0
    %v2670 = vadd.f32 %v2603, %v2669
    %v2671 = vpop.f32.mrf.mxu0
    %2672 = vdwg.mxu0
    %v2673 = vmax.f32 %v2667, 0.0
    %v2674 = vmax.f32 %v2670, 0.0
    %v2675 = vpack.c.bf16 %v2674, %v2673
    %v2684 = vunpack.c.l.b16 %v709
    %v2685 = vunpack.c.l.b16 %v710
    %v2686 = vunpack.c.l.b16 %v711
    %v2687 = vunpack.c.l.b16 %v712
    %v2688 = vunpack.c.l.b16 %v713
    %v2689 = vunpack.c.l.b16 %v714
    %v2690 = vunpack.c.l.b16 %v715
    %v2691 = vunpack.c.l.b16 %v716
    %v2692 = vpack.c.b16 %v2685, %v2684
    %v2693 = vpack.c.b16 %v2687, %v2686
    %v2694 = vpack.c.b16 %v2689, %v2688
    %v2695 = vpack.c.b16 %v2691, %v2690
    %v2701 = vsel %vm1361, %v2675, 0
    %2703 = vmatprep.subr.bf16.mxu0 0
    %2704 = vmatpush1.bf16.msra.mxu0 0
    %2705 = vmatprep.subr.bf16.mxu0 0
    %2706 = vmatpush1.bf16.msra.mxu0 0
    %2707 = vmatprep.subr.bf16.mxu0 0
    %2708 = vmatpush1.bf16.msra.mxu0 0
    %2709 = vmatprep.subr.bf16.mxu0 0
    %2710 = vmatpush1.bf16.msra.mxu0 0
    %2711 = vmatprep.subr.bf16.mxu0 0
    %2712 = vmatpush1.bf16.msra.mxu0 %v2695
    %2713 = vmatprep.subr.bf16.mxu0 0
    %2714 = vmatpush1.bf16.msra.mxu0 %v2694
    %2715 = vmatprep.subr.bf16.mxu0 0
    %2716 = vmatpush1.bf16.msra.mxu0 %v2693
    %2717 = vmatprep.subr.bf16.mxu0 0
    %2718 = vmatpush1.bf16.msra.mxu0 %v2692
    %2719 = vmatprep.subr.bf16.mxu0 0
    %2720 = vmatpush2.bf16.msra.mxu0 0
    %2721 = vmatprep.subr.bf16.mxu0 0
    %2722 = vmatpush2.bf16.msra.mxu0 0
    %2723 = vmatprep.subr.bf16.mxu0 0
    %2724 = vmatpush2.bf16.msra.mxu0 0
    %2725 = vmatprep.subr.bf16.mxu0 0
    %2726 = vmatpush2.bf16.msra.mxu0 0
    %2727 = vmatprep.subr.bf16.mxu0 0
    %2728 = vmatpush2.bf16.msra.mxu0 0
    %2729 = vmatprep.subr.bf16.mxu0 0
    %2730 = vmatpush2.bf16.msra.mxu0 0
    %2731 = vmatprep.subr.bf16.mxu0 0
    %2732 = vmatpush2.bf16.msra.mxu0 0
    %2733 = vmatprep.subr.bf16.mxu0 0
    %2734 = vmatpush2.bf16.msra.mxu0 0
    %2735 = vmatprep.mubr.bf16.mxu0 0
    %2736 = vmatmul.mubr.bf16.gmra.mxu0 %v2701
    %v2737 = vpop.f32.mrf.mxu0
    %v2738 = vadd.f32 0.0, %v2737
    %v2739 = vpop.f32.mrf.mxu0
    %v2740 = vpop.f32.mrf.mxu0
    %v2741 = vadd.f32 0.0, %v2740
    %v2742 = vpop.f32.mrf.mxu0
    %2743 = vdwg.mxu0
    %v2752 = vunpack.c.l.b16 %v717
    %v2753 = vunpack.c.l.b16 %v718
    %v2754 = vunpack.c.l.b16 %v719
    %v2755 = vunpack.c.l.b16 %v720
    %v2756 = vunpack.c.l.b16 %v721
    %v2757 = vunpack.c.l.b16 %v722
    %v2758 = vunpack.c.l.b16 %v723
    %v2759 = vunpack.c.l.b16 %v724
    %v2760 = vpack.c.b16 %v2753, %v2752
    %v2761 = vpack.c.b16 %v2755, %v2754
    %v2762 = vpack.c.b16 %v2757, %v2756
    %v2763 = vpack.c.b16 %v2759, %v2758
    %2768 = vmatprep.subr.bf16.mxu0 0
    %2769 = vmatpush1.bf16.msra.mxu0 0
    %2770 = vmatprep.subr.bf16.mxu0 0
    %2771 = vmatpush1.bf16.msra.mxu0 0
    %2772 = vmatprep.subr.bf16.mxu0 0
    %2773 = vmatpush1.bf16.msra.mxu0 0
    %2774 = vmatprep.subr.bf16.mxu0 0
    %2775 = vmatpush1.bf16.msra.mxu0 0
    %2776 = vmatprep.subr.bf16.mxu0 0
    %2777 = vmatpush1.bf16.msra.mxu0 %v2763
    %2778 = vmatprep.subr.bf16.mxu0 0
    %2779 = vmatpush1.bf16.msra.mxu0 %v2762
    %2780 = vmatprep.subr.bf16.mxu0 0
    %2781 = vmatpush1.bf16.msra.mxu0 %v2761
    %2782 = vmatprep.subr.bf16.mxu0 0
    %2783 = vmatpush1.bf16.msra.mxu0 %v2760
    %2784 = vmatprep.subr.bf16.mxu0 0
    %2785 = vmatpush2.bf16.msra.mxu0 0
    %2786 = vmatprep.subr.bf16.mxu0 0
    %2787 = vmatpush2.bf16.msra.mxu0 0
    %2788 = vmatprep.subr.bf16.mxu0 0
    %2789 = vmatpush2.bf16.msra.mxu0 0
    %2790 = vmatprep.subr.bf16.mxu0 0
    %2791 = vmatpush2.bf16.msra.mxu0 0
    %2792 = vmatprep.subr.bf16.mxu0 0
    %2793 = vmatpush2.bf16.msra.mxu0 0
    %2794 = vmatprep.subr.bf16.mxu0 0
    %2795 = vmatpush2.bf16.msra.mxu0 0
    %2796 = vmatprep.subr.bf16.mxu0 0
    %2797 = vmatpush2.bf16.msra.mxu0 0
    %2798 = vmatprep.subr.bf16.mxu0 0
    %2799 = vmatpush2.bf16.msra.mxu0 0
    %2800 = vmatprep.mubr.bf16.mxu0 0
    %2801 = vmatmul.mubr.bf16.gmra.mxu0 %v2701
    %v2802 = vpop.f32.mrf.mxu0
    %v2803 = vadd.f32 0.0, %v2802
    %v2804 = vpop.f32.mrf.mxu0
    %v2805 = vpop.f32.mrf.mxu0
    %v2806 = vadd.f32 0.0, %v2805
    %v2807 = vpop.f32.mrf.mxu0
    %2808 = vdwg.mxu0
    %vm2809 = vcmask 130048
    %v2811 = vsel %vm2809, %v734, 0
    %v2814 = vsel %vm2809, %v735, 0
    %2816 = vmatprep.subr.mxu0 0.0
    %2817 = vmatpush1.msra.mxu0 0.0
    %2818 = vmatprep.subr.mxu0 0.0
    %2819 = vmatpush1.msra.mxu0 0.0
    %2820 = vmatprep.subr.mxu0 0.0
    %2821 = vmatpush1.msra.mxu0 0.0
    %2822 = vmatprep.subr.mxu0 0.0
    %2823 = vmatpush1.msra.mxu0 0.0
    %2824 = vmatprep.subr.mxu0 0.0
    %2825 = vmatpush1.msra.mxu0 0.0
    %2826 = vmatprep.subr.mxu0 0.0
    %2827 = vmatpush1.msra.mxu0 0.0
    %2828 = vmatprep.subr.mxu0 0.0
    %2829 = vmatpush1.msra.mxu0 0.0
    %2830 = vmatprep.subr.mxu0 0.0
    %2831 = vmatpush1.msra.mxu0 0.0
    %2832 = vmatprep.subr.mxu0 0.0
    %2833 = vmatpush1.msra.mxu0 0.0
    %2834 = vmatprep.subr.mxu0 0.0
    %2835 = vmatpush1.msra.mxu0 0.0
    %2836 = vmatprep.subr.mxu0 0.0
    %2837 = vmatpush1.msra.mxu0 0.0
    %2838 = vmatprep.subr.mxu0 0.0
    %2839 = vmatpush1.msra.mxu0 0.0
    %2840 = vmatprep.subr.mxu0 0.0
    %2841 = vmatpush1.msra.mxu0 0.0
    %2842 = vmatprep.subr.mxu0 0.0
    %2843 = vmatpush1.msra.mxu0 0.0
    %2844 = vmatprep.subr.mxu0 0.0
    %2845 = vmatpush1.msra.mxu0 %v2741
    %2846 = vmatprep.subr.mxu0 0.0
    %2847 = vmatpush1.msra.mxu0 %v2738
    %2848 = vmatprep.subr.mxu0 0.0
    %2849 = vmatpush2.msra.mxu0 0.0
    %2850 = vmatprep.subr.mxu0 0.0
    %2851 = vmatpush2.msra.mxu0 0.0
    %2852 = vmatprep.subr.mxu0 0.0
    %2853 = vmatpush2.msra.mxu0 0.0
    %2854 = vmatprep.subr.mxu0 0.0
    %2855 = vmatpush2.msra.mxu0 0.0
    %2856 = vmatprep.subr.mxu0 0.0
    %2857 = vmatpush2.msra.mxu0 0.0
    %2858 = vmatprep.subr.mxu0 0.0
    %2859 = vmatpush2.msra.mxu0 0.0
    %2860 = vmatprep.subr.mxu0 0.0
    %2861 = vmatpush2.msra.mxu0 0.0
    %2862 = vmatprep.subr.mxu0 0.0
    %2863 = vmatpush2.msra.mxu0 0.0
    %2864 = vmatprep.subr.mxu0 0.0
    %2865 = vmatpush2.msra.mxu0 0.0
    %2866 = vmatprep.subr.mxu0 0.0
    %2867 = vmatpush2.msra.mxu0 0.0
    %2868 = vmatprep.subr.mxu0 0.0
    %2869 = vmatpush2.msra.mxu0 0.0
    %2870 = vmatprep.subr.mxu0 0.0
    %2871 = vmatpush2.msra.mxu0 0.0
    %2872 = vmatprep.subr.mxu0 0.0
    %2873 = vmatpush2.msra.mxu0 0.0
    %2874 = vmatprep.subr.mxu0 0.0
    %2875 = vmatpush2.msra.mxu0 0.0
    %2876 = vmatprep.subr.mxu0 0.0
    %2877 = vmatpush2.msra.mxu0 0.0
    %2878 = vmatprep.subr.mxu0 0.0
    %2879 = vmatpush2.msra.mxu0 0.0
    %2880 = vmatprep.mubr.f32.mxu0 0.0
    %2881 = vmatmul.mubr.f32.gmra.mxu0 %v2811
    %v2882 = vpop.f32.mrf.mxu0
    %v2883 = vadd.f32 %v2803, %v2882
    %v2884 = vpop.f32.mrf.mxu0
    %2885 = vmatprep.mubr.f32.mxu0 0.0
    %2886 = vmatmul.mubr.f32.gmra.mxu0 %v2814
    %v2887 = vpop.f32.mrf.mxu0
    %v2888 = vadd.f32 %v2806, %v2887
    %v2889 = vpop.f32.mrf.mxu0
    %2890 = vdwg.mxu0
    %v2899 = vunpack.c.l.b16 %v725
    %v2900 = vunpack.c.l.b16 %v726
    %v2901 = vunpack.c.l.b16 %v727
    %v2902 = vunpack.c.l.b16 %v728
    %v2903 = vunpack.c.l.b16 %v729
    %v2904 = vunpack.c.l.b16 %v730
    %v2905 = vunpack.c.l.b16 %v731
    %v2906 = vunpack.c.l.b16 %v732
    %v2907 = vpack.c.b16 %v2900, %v2899
    %v2908 = vpack.c.b16 %v2902, %v2901
    %v2909 = vpack.c.b16 %v2904, %v2903
    %v2910 = vpack.c.b16 %v2906, %v2905
    %2915 = vmatprep.subr.bf16.mxu0 0
    %2916 = vmatpush1.bf16.msra.mxu0 0
    %2917 = vmatprep.subr.bf16.mxu0 0
    %2918 = vmatpush1.bf16.msra.mxu0 0
    %2919 = vmatprep.subr.bf16.mxu0 0
    %2920 = vmatpush1.bf16.msra.mxu0 0
    %2921 = vmatprep.subr.bf16.mxu0 0
    %2922 = vmatpush1.bf16.msra.mxu0 0
    %2923 = vmatprep.subr.bf16.mxu0 0
    %2924 = vmatpush1.bf16.msra.mxu0 %v2910
    %2925 = vmatprep.subr.bf16.mxu0 0
    %2926 = vmatpush1.bf16.msra.mxu0 %v2909
    %2927 = vmatprep.subr.bf16.mxu0 0
    %2928 = vmatpush1.bf16.msra.mxu0 %v2908
    %2929 = vmatprep.subr.bf16.mxu0 0
    %2930 = vmatpush1.bf16.msra.mxu0 %v2907
    %2931 = vmatprep.subr.bf16.mxu0 0
    %2932 = vmatpush2.bf16.msra.mxu0 0
    %2933 = vmatprep.subr.bf16.mxu0 0
    %2934 = vmatpush2.bf16.msra.mxu0 0
    %2935 = vmatprep.subr.bf16.mxu0 0
    %2936 = vmatpush2.bf16.msra.mxu0 0
    %2937 = vmatprep.subr.bf16.mxu0 0
    %2938 = vmatpush2.bf16.msra.mxu0 0
    %2939 = vmatprep.subr.bf16.mxu0 0
    %2940 = vmatpush2.bf16.msra.mxu0 0
    %2941 = vmatprep.subr.bf16.mxu0 0
    %2942 = vmatpush2.bf16.msra.mxu0 0
    %2943 = vmatprep.subr.bf16.mxu0 0
    %2944 = vmatpush2.bf16.msra.mxu0 0
    %2945 = vmatprep.subr.bf16.mxu0 0
    %2946 = vmatpush2.bf16.msra.mxu0 0
    %2947 = vmatprep.mubr.bf16.mxu0 0
    %2948 = vmatmul.mubr.bf16.gmra.mxu0 %v2701
    %v2949 = vpop.f32.mrf.mxu0
    %v2950 = vadd.f32 0.0, %v2949
    %v2951 = vpop.f32.mrf.mxu0
    %v2952 = vpop.f32.mrf.mxu0
    %v2953 = vadd.f32 0.0, %v2952
    %v2954 = vpop.f32.mrf.mxu0
    %2955 = vdwg.mxu0
    %v2957 = vsel %vm2809, %v736, 0
    %v2960 = vsel %vm2809, %v737, 0
    %2962 = vmatprep.subr.mxu0 0.0
    %2963 = vmatpush1.msra.mxu0 0.0
    %2964 = vmatprep.subr.mxu0 0.0
    %2965 = vmatpush1.msra.mxu0 0.0
    %2966 = vmatprep.subr.mxu0 0.0
    %2967 = vmatpush1.msra.mxu0 0.0
    %2968 = vmatprep.subr.mxu0 0.0
    %2969 = vmatpush1.msra.mxu0 0.0
    %2970 = vmatprep.subr.mxu0 0.0
    %2971 = vmatpush1.msra.mxu0 0.0
    %2972 = vmatprep.subr.mxu0 0.0
    %2973 = vmatpush1.msra.mxu0 0.0
    %2974 = vmatprep.subr.mxu0 0.0
    %2975 = vmatpush1.msra.mxu0 0.0
    %2976 = vmatprep.subr.mxu0 0.0
    %2977 = vmatpush1.msra.mxu0 0.0
    %2978 = vmatprep.subr.mxu0 0.0
    %2979 = vmatpush1.msra.mxu0 0.0
    %2980 = vmatprep.subr.mxu0 0.0
    %2981 = vmatpush1.msra.mxu0 0.0
    %2982 = vmatprep.subr.mxu0 0.0
    %2983 = vmatpush1.msra.mxu0 0.0
    %2984 = vmatprep.subr.mxu0 0.0
    %2985 = vmatpush1.msra.mxu0 0.0
    %2986 = vmatprep.subr.mxu0 0.0
    %2987 = vmatpush1.msra.mxu0 0.0
    %2988 = vmatprep.subr.mxu0 0.0
    %2989 = vmatpush1.msra.mxu0 0.0
    %2990 = vmatprep.subr.mxu0 0.0
    %2991 = vmatpush1.msra.mxu0 %v2953
    %2992 = vmatprep.subr.mxu0 0.0
    %2993 = vmatpush1.msra.mxu0 %v2950
    %2994 = vmatprep.subr.mxu0 0.0
    %2995 = vmatpush2.msra.mxu0 0.0
    %2996 = vmatprep.subr.mxu0 0.0
    %2997 = vmatpush2.msra.mxu0 0.0
    %2998 = vmatprep.subr.mxu0 0.0
    %2999 = vmatpush2.msra.mxu0 0.0
    %3000 = vmatprep.subr.mxu0 0.0
    %3001 = vmatpush2.msra.mxu0 0.0
    %3002 = vmatprep.subr.mxu0 0.0
    %3003 = vmatpush2.msra.mxu0 0.0
    %3004 = vmatprep.subr.mxu0 0.0
    %3005 = vmatpush2.msra.mxu0 0.0
    %3006 = vmatprep.subr.mxu0 0.0
    %3007 = vmatpush2.msra.mxu0 0.0
    %3008 = vmatprep.subr.mxu0 0.0
    %3009 = vmatpush2.msra.mxu0 0.0
    %3010 = vmatprep.subr.mxu0 0.0
    %3011 = vmatpush2.msra.mxu0 0.0
    %3012 = vmatprep.subr.mxu0 0.0
    %3013 = vmatpush2.msra.mxu0 0.0
    %3014 = vmatprep.subr.mxu0 0.0
    %3015 = vmatpush2.msra.mxu0 0.0
    %3016 = vmatprep.subr.mxu0 0.0
    %3017 = vmatpush2.msra.mxu0 0.0
    %3018 = vmatprep.subr.mxu0 0.0
    %3019 = vmatpush2.msra.mxu0 0.0
    %3020 = vmatprep.subr.mxu0 0.0
    %3021 = vmatpush2.msra.mxu0 0.0
    %3022 = vmatprep.subr.mxu0 0.0
    %3023 = vmatpush2.msra.mxu0 0.0
    %3024 = vmatprep.subr.mxu0 0.0
    %3025 = vmatpush2.msra.mxu0 0.0
    %3026 = vmatprep.mubr.f32.mxu0 0.0
    %3027 = vmatmul.mubr.f32.gmra.mxu0 %v2957
    %v3028 = vpop.f32.mrf.mxu0
    %v3029 = vadd.f32 0.0, %v3028
    %v3030 = vpop.f32.mrf.mxu0
    %3031 = vmatprep.mubr.f32.mxu0 0.0
    %3032 = vmatmul.mubr.f32.gmra.mxu0 %v2960
    %v3033 = vpop.f32.mrf.mxu0
    %v3034 = vadd.f32 0.0, %v3033
    %v3035 = vpop.f32.mrf.mxu0
    %3036 = vdwg.mxu0
    %v3037 = vadd.f32 %v2883, %v3029
    %v3038 = vadd.f32 %v2888, %v3034
    %v3040 = vlaneseq
    %v3041 = vshrl.u32 %v3040, 7
    %v3042 = vsub.s32 0, %v3041
    %v3043 = vrot.slane %v733, %v3042
    %v3045 = vadd.f32 %v3037, %v3043
    %v3046 = vadd.f32 %v3038, %v3043
    %v3047 = vmax.f32 %v3045, 0.0
    %v3048 = vmax.f32 %v3046, 0.0
    %v3050 = vlaneseq
    %v3051 = vshrl.u32 %v3050, 7
    %v3052 = vsub.s32 0, %v3051
    %v3053 = vrot.slane %v746, %v3052
    %v3063 = vunpack.c.l.b16 %v738
    %v3064 = vunpack.c.l.b16 %v739
    %v3065 = vunpack.c.l.b16 %v740
    %v3066 = vunpack.c.l.b16 %v741
    %v3067 = vunpack.c.l.b16 %v742
    %v3068 = vunpack.c.l.b16 %v743
    %v3069 = vunpack.c.l.b16 %v744
    %v3070 = vunpack.c.l.b16 %v745
    %v3071 = vpack.c.b16 %v3064, %v3063
    %v3072 = vpack.c.b16 %v3066, %v3065
    %v3073 = vpack.c.b16 %v3068, %v3067
    %v3074 = vpack.c.b16 %v3070, %v3069
    %3079 = vmatprep.subr.bf16.mxu0 0
    %3080 = vmatpush1.bf16.msra.mxu0 0
    %3081 = vmatprep.subr.bf16.mxu0 0
    %3082 = vmatpush1.bf16.msra.mxu0 0
    %3083 = vmatprep.subr.bf16.mxu0 0
    %3084 = vmatpush1.bf16.msra.mxu0 0
    %3085 = vmatprep.subr.bf16.mxu0 0
    %3086 = vmatpush1.bf16.msra.mxu0 0
    %3087 = vmatprep.subr.bf16.mxu0 0
    %3088 = vmatpush1.bf16.msra.mxu0 %v3074
    %3089 = vmatprep.subr.bf16.mxu0 0
    %3090 = vmatpush1.bf16.msra.mxu0 %v3073
    %3091 = vmatprep.subr.bf16.mxu0 0
    %3092 = vmatpush1.bf16.msra.mxu0 %v3072
    %3093 = vmatprep.subr.bf16.mxu0 0
    %3094 = vmatpush1.bf16.msra.mxu0 %v3071
    %3095 = vmatprep.subr.bf16.mxu0 0
    %3096 = vmatpush2.bf16.msra.mxu0 0
    %3097 = vmatprep.subr.bf16.mxu0 0
    %3098 = vmatpush2.bf16.msra.mxu0 0
    %3099 = vmatprep.subr.bf16.mxu0 0
    %3100 = vmatpush2.bf16.msra.mxu0 0
    %3101 = vmatprep.subr.bf16.mxu0 0
    %3102 = vmatpush2.bf16.msra.mxu0 0
    %3103 = vmatprep.subr.bf16.mxu0 0
    %3104 = vmatpush2.bf16.msra.mxu0 0
    %3105 = vmatprep.subr.bf16.mxu0 0
    %3106 = vmatpush2.bf16.msra.mxu0 0
    %3107 = vmatprep.subr.bf16.mxu0 0
    %3108 = vmatpush2.bf16.msra.mxu0 0
    %3109 = vmatprep.subr.bf16.mxu0 0
    %3110 = vmatpush2.bf16.msra.mxu0 0
    %3111 = vmatprep.mubr.bf16.mxu0 0
    %3112 = vmatmul.mubr.bf16.gmra.mxu0 %v2630
    %v3113 = vpop.f32.mrf.mxu0
    %v3114 = vadd.f32 %v3053, %v3113
    %v3115 = vpop.f32.mrf.mxu0
    %v3116 = vpop.f32.mrf.mxu0
    %v3117 = vadd.f32 %v3053, %v3116
    %v3118 = vpop.f32.mrf.mxu0
    %3119 = vdwg.mxu0
    %v3120 = vmax.f32 %v3114, 0.0
    %v3121 = vmax.f32 %v3117, 0.0
    %v3122 = vadd.f32 %v3120, %v3047
    %v3123 = vadd.f32 %v3121, %v3048
    %v3124 = vpack.c.bf16 %v3123, %v3122
    %v3126 = vlaneseq
    %v3127 = vshrl.u32 %v3126, 7
    %v3128 = vsub.s32 0, %v3127
    %v3129 = vrot.slane %v755, %v3128
    %v3139 = vunpack.c.l.b16 %v747
    %v3140 = vunpack.c.l.b16 %v748
    %v3141 = vunpack.c.l.b16 %v749
    %v3142 = vunpack.c.l.b16 %v750
    %v3143 = vunpack.c.l.b16 %v751
    %v3144 = vunpack.c.l.b16 %v752
    %v3145 = vunpack.c.l.b16 %v753
    %v3146 = vunpack.c.l.b16 %v754
    %v3147 = vpack.c.b16 %v3140, %v3139
    %v3148 = vpack.c.b16 %v3142, %v3141
    %v3149 = vpack.c.b16 %v3144, %v3143
    %v3150 = vpack.c.b16 %v3146, %v3145
    %v3156 = vsel %vm1361, %v3124, 0
    %3158 = vmatprep.subr.bf16.mxu0 0
    %3159 = vmatpush1.bf16.msra.mxu0 0
    %3160 = vmatprep.subr.bf16.mxu0 0
    %3161 = vmatpush1.bf16.msra.mxu0 0
    %3162 = vmatprep.subr.bf16.mxu0 0
    %3163 = vmatpush1.bf16.msra.mxu0 0
    %3164 = vmatprep.subr.bf16.mxu0 0
    %3165 = vmatpush1.bf16.msra.mxu0 0
    %3166 = vmatprep.subr.bf16.mxu0 0
    %3167 = vmatpush1.bf16.msra.mxu0 %v3150
    %3168 = vmatprep.subr.bf16.mxu0 0
    %3169 = vmatpush1.bf16.msra.mxu0 %v3149
    %3170 = vmatprep.subr.bf16.mxu0 0
    %3171 = vmatpush1.bf16.msra.mxu0 %v3148
    %3172 = vmatprep.subr.bf16.mxu0 0
    %3173 = vmatpush1.bf16.msra.mxu0 %v3147
    %3174 = vmatprep.subr.bf16.mxu0 0
    %3175 = vmatpush2.bf16.msra.mxu0 0
    %3176 = vmatprep.subr.bf16.mxu0 0
    %3177 = vmatpush2.bf16.msra.mxu0 0
    %3178 = vmatprep.subr.bf16.mxu0 0
    %3179 = vmatpush2.bf16.msra.mxu0 0
    %3180 = vmatprep.subr.bf16.mxu0 0
    %3181 = vmatpush2.bf16.msra.mxu0 0
    %3182 = vmatprep.subr.bf16.mxu0 0
    %3183 = vmatpush2.bf16.msra.mxu0 0
    %3184 = vmatprep.subr.bf16.mxu0 0
    %3185 = vmatpush2.bf16.msra.mxu0 0
    %3186 = vmatprep.subr.bf16.mxu0 0
    %3187 = vmatpush2.bf16.msra.mxu0 0
    %3188 = vmatprep.subr.bf16.mxu0 0
    %3189 = vmatpush2.bf16.msra.mxu0 0
    %3190 = vmatprep.mubr.bf16.mxu0 0
    %3191 = vmatmul.mubr.bf16.gmra.mxu0 %v3156
    %v3192 = vpop.f32.mrf.mxu0
    %v3193 = vadd.f32 %v3129, %v3192
    %v3194 = vpop.f32.mrf.mxu0
    %v3195 = vpop.f32.mrf.mxu0
    %v3196 = vadd.f32 %v3129, %v3195
    %v3197 = vpop.f32.mrf.mxu0
    %3198 = vdwg.mxu0
    %v3199 = vmax.f32 %v3193, 0.0
    %v3200 = vmax.f32 %v3196, 0.0
    %v3202 = vsel %vm1361, %v3199, 0
    %v3205 = vsel %vm1361, %v3200, 0
    %3207 = vmatprep.subr.mxu0 0.0
    %3208 = vmatpush1.msra.mxu0 0.0
    %3209 = vmatprep.subr.mxu0 0.0
    %3210 = vmatpush1.msra.mxu0 0.0
    %3211 = vmatprep.subr.mxu0 0.0
    %3212 = vmatpush1.msra.mxu0 0.0
    %3213 = vmatprep.subr.mxu0 0.0
    %3214 = vmatpush1.msra.mxu0 0.0
    %3215 = vmatprep.subr.mxu0 0.0
    %3216 = vmatpush1.msra.mxu0 0.0
    %3217 = vmatprep.subr.mxu0 0.0
    %3218 = vmatpush1.msra.mxu0 0.0
    %3219 = vmatprep.subr.mxu0 0.0
    %3220 = vmatpush1.msra.mxu0 0.0
    %3221 = vmatprep.subr.mxu0 0.0
    %3222 = vmatpush1.msra.mxu0 0.0
    %3223 = vmatprep.subr.mxu0 0.0
    %3224 = vmatpush1.msra.mxu0 %v771
    %3225 = vmatprep.subr.mxu0 0.0
    %3226 = vmatpush1.msra.mxu0 %v770
    %3227 = vmatprep.subr.mxu0 0.0
    %3228 = vmatpush1.msra.mxu0 %v769
    %3229 = vmatprep.subr.mxu0 0.0
    %3230 = vmatpush1.msra.mxu0 %v768
    %3231 = vmatprep.subr.mxu0 0.0
    %3232 = vmatpush1.msra.mxu0 %v767
    %3233 = vmatprep.subr.mxu0 0.0
    %3234 = vmatpush1.msra.mxu0 %v766
    %3235 = vmatprep.subr.mxu0 0.0
    %3236 = vmatpush1.msra.mxu0 %v765
    %3237 = vmatprep.subr.mxu0 0.0
    %3238 = vmatpush1.msra.mxu0 %v764
    %3239 = vmatprep.subr.mxu0 0.0
    %3240 = vmatpush2.msra.mxu0 0.0
    %3241 = vmatprep.subr.mxu0 0.0
    %3242 = vmatpush2.msra.mxu0 0.0
    %3243 = vmatprep.subr.mxu0 0.0
    %3244 = vmatpush2.msra.mxu0 0.0
    %3245 = vmatprep.subr.mxu0 0.0
    %3246 = vmatpush2.msra.mxu0 0.0
    %3247 = vmatprep.subr.mxu0 0.0
    %3248 = vmatpush2.msra.mxu0 0.0
    %3249 = vmatprep.subr.mxu0 0.0
    %3250 = vmatpush2.msra.mxu0 0.0
    %3251 = vmatprep.subr.mxu0 0.0
    %3252 = vmatpush2.msra.mxu0 0.0
    %3253 = vmatprep.subr.mxu0 0.0
    %3254 = vmatpush2.msra.mxu0 0.0
    %3255 = vmatprep.subr.mxu0 0.0
    %3256 = vmatpush2.msra.mxu0 0.0
    %3257 = vmatprep.subr.mxu0 0.0
    %3258 = vmatpush2.msra.mxu0 0.0
    %3259 = vmatprep.subr.mxu0 0.0
    %3260 = vmatpush2.msra.mxu0 0.0
    %3261 = vmatprep.subr.mxu0 0.0
    %3262 = vmatpush2.msra.mxu0 0.0
    %3263 = vmatprep.subr.mxu0 0.0
    %3264 = vmatpush2.msra.mxu0 0.0
    %3265 = vmatprep.subr.mxu0 0.0
    %3266 = vmatpush2.msra.mxu0 0.0
    %3267 = vmatprep.subr.mxu0 0.0
    %3268 = vmatpush2.msra.mxu0 0.0
    %3269 = vmatprep.subr.mxu0 0.0
    %3270 = vmatpush2.msra.mxu0 0.0
    %3271 = vmatprep.mubr.f32.mxu0 0.0
    %3272 = vmatmul.mubr.f32.gmra.mxu0 %v3202
    %v3273 = vpop.f32.mrf.mxu0
    %v3274 = vadd.f32 0.0, %v3273
    %v3275 = vpop.f32.mrf.mxu0
    %3276 = vmatprep.mubr.f32.mxu0 0.0
    %3277 = vmatmul.mubr.f32.gmra.mxu0 %v3205
    %v3278 = vpop.f32.mrf.mxu0
    %v3279 = vadd.f32 0.0, %v3278
    %v3280 = vpop.f32.mrf.mxu0
    %3281 = vdwg.mxu0
    %v3283 = vsel %vm1361, %v3047, 0
    %v3286 = vsel %vm1361, %v3048, 0
    %3288 = vmatprep.subr.mxu0 0.0
    %3289 = vmatpush1.msra.mxu0 0.0
    %3290 = vmatprep.subr.mxu0 0.0
    %3291 = vmatpush1.msra.mxu0 0.0
    %3292 = vmatprep.subr.mxu0 0.0
    %3293 = vmatpush1.msra.mxu0 0.0
    %3294 = vmatprep.subr.mxu0 0.0
    %3295 = vmatpush1.msra.mxu0 0.0
    %3296 = vmatprep.subr.mxu0 0.0
    %3297 = vmatpush1.msra.mxu0 0.0
    %3298 = vmatprep.subr.mxu0 0.0
    %3299 = vmatpush1.msra.mxu0 0.0
    %3300 = vmatprep.subr.mxu0 0.0
    %3301 = vmatpush1.msra.mxu0 0.0
    %3302 = vmatprep.subr.mxu0 0.0
    %3303 = vmatpush1.msra.mxu0 0.0
    %3304 = vmatprep.subr.mxu0 0.0
    %3305 = vmatpush1.msra.mxu0 %v763
    %3306 = vmatprep.subr.mxu0 0.0
    %3307 = vmatpush1.msra.mxu0 %v762
    %3308 = vmatprep.subr.mxu0 0.0
    %3309 = vmatpush1.msra.mxu0 %v761
    %3310 = vmatprep.subr.mxu0 0.0
    %3311 = vmatpush1.msra.mxu0 %v760
    %3312 = vmatprep.subr.mxu0 0.0
    %3313 = vmatpush1.msra.mxu0 %v759
    %3314 = vmatprep.subr.mxu0 0.0
    %3315 = vmatpush1.msra.mxu0 %v758
    %3316 = vmatprep.subr.mxu0 0.0
    %3317 = vmatpush1.msra.mxu0 %v757
    %3318 = vmatprep.subr.mxu0 0.0
    %3319 = vmatpush1.msra.mxu0 %v756
    %3320 = vmatprep.subr.mxu0 0.0
    %3321 = vmatpush2.msra.mxu0 0.0
    %3322 = vmatprep.subr.mxu0 0.0
    %3323 = vmatpush2.msra.mxu0 0.0
    %3324 = vmatprep.subr.mxu0 0.0
    %3325 = vmatpush2.msra.mxu0 0.0
    %3326 = vmatprep.subr.mxu0 0.0
    %3327 = vmatpush2.msra.mxu0 0.0
    %3328 = vmatprep.subr.mxu0 0.0
    %3329 = vmatpush2.msra.mxu0 0.0
    %3330 = vmatprep.subr.mxu0 0.0
    %3331 = vmatpush2.msra.mxu0 0.0
    %3332 = vmatprep.subr.mxu0 0.0
    %3333 = vmatpush2.msra.mxu0 0.0
    %3334 = vmatprep.subr.mxu0 0.0
    %3335 = vmatpush2.msra.mxu0 0.0
    %3336 = vmatprep.subr.mxu0 0.0
    %3337 = vmatpush2.msra.mxu0 0.0
    %3338 = vmatprep.subr.mxu0 0.0
    %3339 = vmatpush2.msra.mxu0 0.0
    %3340 = vmatprep.subr.mxu0 0.0
    %3341 = vmatpush2.msra.mxu0 0.0
    %3342 = vmatprep.subr.mxu0 0.0
    %3343 = vmatpush2.msra.mxu0 0.0
    %3344 = vmatprep.subr.mxu0 0.0
    %3345 = vmatpush2.msra.mxu0 0.0
    %3346 = vmatprep.subr.mxu0 0.0
    %3347 = vmatpush2.msra.mxu0 0.0
    %3348 = vmatprep.subr.mxu0 0.0
    %3349 = vmatpush2.msra.mxu0 0.0
    %3350 = vmatprep.subr.mxu0 0.0
    %3351 = vmatpush2.msra.mxu0 0.0
    %3352 = vmatprep.mubr.f32.mxu0 0.0
    %3353 = vmatmul.mubr.f32.gmra.mxu0 %v3283
    %v3354 = vpop.f32.mrf.mxu0
    %v3355 = vadd.f32 %v3274, %v3354
    %v3356 = vpop.f32.mrf.mxu0
    %3357 = vmatprep.mubr.f32.mxu0 0.0
    %3358 = vmatmul.mubr.f32.gmra.mxu0 %v3286
    %v3359 = vpop.f32.mrf.mxu0
    %v3360 = vadd.f32 %v3279, %v3359
    %v3361 = vpop.f32.mrf.mxu0
    %3362 = vdwg.mxu0
    %v3364 = vlaneseq
    %v3365 = vshrl.u32 %v3364, 7
    %v3366 = vsub.s32 0, %v3365
    %v3367 = vrot.slane %v780, %v3366
    %v3377 = vunpack.c.l.b16 %v772
    %v3378 = vunpack.c.l.b16 %v773
    %v3379 = vunpack.c.l.b16 %v774
    %v3380 = vunpack.c.l.b16 %v775
    %v3381 = vunpack.c.l.b16 %v776
    %v3382 = vunpack.c.l.b16 %v777
    %v3383 = vunpack.c.l.b16 %v778
    %v3384 = vunpack.c.l.b16 %v779
    %v3385 = vpack.c.b16 %v3378, %v3377
    %v3386 = vpack.c.b16 %v3380, %v3379
    %v3387 = vpack.c.b16 %v3382, %v3381
    %v3388 = vpack.c.b16 %v3384, %v3383
    %3393 = vmatprep.subr.bf16.mxu0 0
    %3394 = vmatpush1.bf16.msra.mxu0 0
    %3395 = vmatprep.subr.bf16.mxu0 0
    %3396 = vmatpush1.bf16.msra.mxu0 0
    %3397 = vmatprep.subr.bf16.mxu0 0
    %3398 = vmatpush1.bf16.msra.mxu0 0
    %3399 = vmatprep.subr.bf16.mxu0 0
    %3400 = vmatpush1.bf16.msra.mxu0 0
    %3401 = vmatprep.subr.bf16.mxu0 0
    %3402 = vmatpush1.bf16.msra.mxu0 %v3388
    %3403 = vmatprep.subr.bf16.mxu0 0
    %3404 = vmatpush1.bf16.msra.mxu0 %v3387
    %3405 = vmatprep.subr.bf16.mxu0 0
    %3406 = vmatpush1.bf16.msra.mxu0 %v3386
    %3407 = vmatprep.subr.bf16.mxu0 0
    %3408 = vmatpush1.bf16.msra.mxu0 %v3385
    %3409 = vmatprep.subr.bf16.mxu0 0
    %3410 = vmatpush2.bf16.msra.mxu0 0
    %3411 = vmatprep.subr.bf16.mxu0 0
    %3412 = vmatpush2.bf16.msra.mxu0 0
    %3413 = vmatprep.subr.bf16.mxu0 0
    %3414 = vmatpush2.bf16.msra.mxu0 0
    %3415 = vmatprep.subr.bf16.mxu0 0
    %3416 = vmatpush2.bf16.msra.mxu0 0
    %3417 = vmatprep.subr.bf16.mxu0 0
    %3418 = vmatpush2.bf16.msra.mxu0 0
    %3419 = vmatprep.subr.bf16.mxu0 0
    %3420 = vmatpush2.bf16.msra.mxu0 0
    %3421 = vmatprep.subr.bf16.mxu0 0
    %3422 = vmatpush2.bf16.msra.mxu0 0
    %3423 = vmatprep.subr.bf16.mxu0 0
    %3424 = vmatpush2.bf16.msra.mxu0 0
    %3425 = vmatprep.mubr.bf16.mxu0 0
    %3426 = vmatmul.mubr.bf16.gmra.mxu0 %v2630
    %v3427 = vpop.f32.mrf.mxu0
    %v3428 = vadd.f32 %v3367, %v3427
    %v3429 = vpop.f32.mrf.mxu0
    %v3430 = vpop.f32.mrf.mxu0
    %v3431 = vadd.f32 %v3367, %v3430
    %v3432 = vpop.f32.mrf.mxu0
    %3433 = vdwg.mxu0
    %v3434 = vmax.f32 %v3428, 0.0
    %v3435 = vmax.f32 %v3431, 0.0
    %v3436 = vadd.f32 %v3434, %v3355
    %v3437 = vadd.f32 %v3435, %v3360
    %v3439 = vsel %vm2809, %v781, 0
    %3441 = vmatprep.subr.mxu0 0.0
    %3442 = vmatpush1.msra.mxu0 0.0
    %3443 = vmatprep.subr.mxu0 0.0
    %3444 = vmatpush1.msra.mxu0 0.0
    %3445 = vmatprep.subr.mxu0 0.0
    %3446 = vmatpush1.msra.mxu0 0.0
    %3447 = vmatprep.subr.mxu0 0.0
    %3448 = vmatpush1.msra.mxu0 0.0
    %3449 = vmatprep.subr.mxu0 0.0
    %3450 = vmatpush1.msra.mxu0 0.0
    %3451 = vmatprep.subr.mxu0 0.0
    %3452 = vmatpush1.msra.mxu0 0.0
    %3453 = vmatprep.subr.mxu0 0.0
    %3454 = vmatpush1.msra.mxu0 0.0
    %3455 = vmatprep.subr.mxu0 0.0
    %3456 = vmatpush1.msra.mxu0 0.0
    %3457 = vmatprep.subr.mxu0 0.0
    %3458 = vmatpush1.msra.mxu0 0.0
    %3459 = vmatprep.subr.mxu0 0.0
    %3460 = vmatpush1.msra.mxu0 0.0
    %3461 = vmatprep.subr.mxu0 0.0
    %3462 = vmatpush1.msra.mxu0 0.0
    %3463 = vmatprep.subr.mxu0 0.0
    %3464 = vmatpush1.msra.mxu0 0.0
    %3465 = vmatprep.subr.mxu0 0.0
    %3466 = vmatpush1.msra.mxu0 0.0
    %3467 = vmatprep.subr.mxu0 0.0
    %3468 = vmatpush1.msra.mxu0 0.0
    %3469 = vmatprep.subr.mxu0 0.0
    %3470 = vmatpush1.msra.mxu0 %v3437
    %3471 = vmatprep.subr.mxu0 0.0
    %3472 = vmatpush1.msra.mxu0 %v3436
    %3473 = vmatprep.subr.mxu0 0.0
    %3474 = vmatpush2.msra.mxu0 0.0
    %3475 = vmatprep.subr.mxu0 0.0
    %3476 = vmatpush2.msra.mxu0 0.0
    %3477 = vmatprep.subr.mxu0 0.0
    %3478 = vmatpush2.msra.mxu0 0.0
    %3479 = vmatprep.subr.mxu0 0.0
    %3480 = vmatpush2.msra.mxu0 0.0
    %3481 = vmatprep.subr.mxu0 0.0
    %3482 = vmatpush2.msra.mxu0 0.0
    %3483 = vmatprep.subr.mxu0 0.0
    %3484 = vmatpush2.msra.mxu0 0.0
    %3485 = vmatprep.subr.mxu0 0.0
    %3486 = vmatpush2.msra.mxu0 0.0
    %3487 = vmatprep.subr.mxu0 0.0
    %3488 = vmatpush2.msra.mxu0 0.0
    %3489 = vmatprep.subr.mxu0 0.0
    %3490 = vmatpush2.msra.mxu0 0.0
    %3491 = vmatprep.subr.mxu0 0.0
    %3492 = vmatpush2.msra.mxu0 0.0
    %3493 = vmatprep.subr.mxu0 0.0
    %3494 = vmatpush2.msra.mxu0 0.0
    %3495 = vmatprep.subr.mxu0 0.0
    %3496 = vmatpush2.msra.mxu0 0.0
    %3497 = vmatprep.subr.mxu0 0.0
    %3498 = vmatpush2.msra.mxu0 0.0
    %3499 = vmatprep.subr.mxu0 0.0
    %3500 = vmatpush2.msra.mxu0 0.0
    %3501 = vmatprep.subr.mxu0 0.0
    %3502 = vmatpush2.msra.mxu0 0.0
    %3503 = vmatprep.subr.mxu0 0.0
    %3504 = vmatpush2.msra.mxu0 0.0
    %3505 = vmatprep.mubr.f32.mxu0 0.0
    %3506 = vmatmul.mubr.f32.gmra.mxu0 %v3439
    %v3507 = vpop.f32.mrf.mxu0
    %v3508 = vadd.f32 0.0, %v3507
    %v3509 = vpop.f32.mrf.mxu0
    %3510 = vdwg.mxu0
    %v3512 = vlaneseq
    %v3513 = vshrl.u32 %v3512, 7
    %v3514 = vsub.s32 0, %v3513
    %v3515 = vrot.slane %v798, %v3514
    %3517 = vmatprep.subr.mxu0 0.0
    %3518 = vmatpush1.msra.mxu0 %v797
    %3519 = vmatprep.subr.mxu0 0.0
    %3520 = vmatpush1.msra.mxu0 %v796
    %3521 = vmatprep.subr.mxu0 0.0
    %3522 = vmatpush1.msra.mxu0 %v795
    %3523 = vmatprep.subr.mxu0 0.0
    %3524 = vmatpush1.msra.mxu0 %v794
    %3525 = vmatprep.subr.mxu0 0.0
    %3526 = vmatpush1.msra.mxu0 %v793
    %3527 = vmatprep.subr.mxu0 0.0
    %3528 = vmatpush1.msra.mxu0 %v792
    %3529 = vmatprep.subr.mxu0 0.0
    %3530 = vmatpush1.msra.mxu0 %v791
    %3531 = vmatprep.subr.mxu0 0.0
    %3532 = vmatpush1.msra.mxu0 %v790
    %3533 = vmatprep.subr.mxu0 0.0
    %3534 = vmatpush1.msra.mxu0 %v789
    %3535 = vmatprep.subr.mxu0 0.0
    %3536 = vmatpush1.msra.mxu0 %v788
    %3537 = vmatprep.subr.mxu0 0.0
    %3538 = vmatpush1.msra.mxu0 %v787
    %3539 = vmatprep.subr.mxu0 0.0
    %3540 = vmatpush1.msra.mxu0 %v786
    %3541 = vmatprep.subr.mxu0 0.0
    %3542 = vmatpush1.msra.mxu0 %v785
    %3543 = vmatprep.subr.mxu0 0.0
    %3544 = vmatpush1.msra.mxu0 %v784
    %3545 = vmatprep.subr.mxu0 0.0
    %3546 = vmatpush1.msra.mxu0 %v783
    %3547 = vmatprep.subr.mxu0 0.0
    %3548 = vmatpush1.msra.mxu0 %v782
    %3549 = vmatprep.subr.mxu0 0.0
    %3550 = vmatpush2.msra.mxu0 0.0
    %3551 = vmatprep.subr.mxu0 0.0
    %3552 = vmatpush2.msra.mxu0 0.0
    %3553 = vmatprep.subr.mxu0 0.0
    %3554 = vmatpush2.msra.mxu0 0.0
    %3555 = vmatprep.subr.mxu0 0.0
    %3556 = vmatpush2.msra.mxu0 0.0
    %3557 = vmatprep.subr.mxu0 0.0
    %3558 = vmatpush2.msra.mxu0 0.0
    %3559 = vmatprep.subr.mxu0 0.0
    %3560 = vmatpush2.msra.mxu0 0.0
    %3561 = vmatprep.subr.mxu0 0.0
    %3562 = vmatpush2.msra.mxu0 0.0
    %3563 = vmatprep.subr.mxu0 0.0
    %3564 = vmatpush2.msra.mxu0 0.0
    %3565 = vmatprep.subr.mxu0 0.0
    %3566 = vmatpush2.msra.mxu0 0.0
    %3567 = vmatprep.subr.mxu0 0.0
    %3568 = vmatpush2.msra.mxu0 0.0
    %3569 = vmatprep.subr.mxu0 0.0
    %3570 = vmatpush2.msra.mxu0 0.0
    %3571 = vmatprep.subr.mxu0 0.0
    %3572 = vmatpush2.msra.mxu0 0.0
    %3573 = vmatprep.subr.mxu0 0.0
    %3574 = vmatpush2.msra.mxu0 0.0
    %3575 = vmatprep.subr.mxu0 0.0
    %3576 = vmatpush2.msra.mxu0 0.0
    %3577 = vmatprep.subr.mxu0 0.0
    %3578 = vmatpush2.msra.mxu0 0.0
    %3579 = vmatprep.subr.mxu0 0.0
    %3580 = vmatpush2.msra.mxu0 0.0
    %3581 = vmatprep.mubr.f32.mxu0 0.0
    %3582 = vmatmul.mubr.f32.gmra.mxu0 %v3508
    %v3583 = vpop.f32.mrf.mxu0
    %v3584 = vadd.f32 %v3515, %v3583
    %v3585 = vpop.f32.mrf.mxu0
    %3586 = vdwg.mxu0
    %vm3587 = vcmask 74752
    %3588 = vst.msk [vmem:[#allocation41] sm:$0x3] %vm3587, %v3584
    // Predicated region
    $region286: #{forward.1} parent=1 // pred_check
      _
    $region287: #{forward.1} parent=1 // pred_check_branch
      %3590 = sbr.rel (0) target = $region289
    $region288: #{forward.1} parent=1 // pred_region
      %s3592 = ssub.s32 32, 32
      %3593 = vsyncadd [#allocation4], %s3592
      %s3595 = sshll.u32 [#allocation41], 4
      %s3596 = int_to_ptr.vmem [resolvable:$true] %s3595
      %3598 = dma.vmem_to_hbm [thread:$0]  %s3596, 32, %s93, [#allocation4]
    $region289: #{forward.1} parent=1 // pred_fallthru
      _
    // Predicated region
    $region290: #{forward.1} parent=1 // pred_check
      _
    $region291: #{forward.1} parent=1 // pred_check_branch
      %3600 = sbr.rel (0) target = $region293
    $region292: #{forward.1} parent=1 // pred_region
      %3601 = dma.done [#allocation4], 32
    $region293: #{forward.1} parent=1 // pred_fallthru
      _
    %3602 = vsyncpa [#allocation3], 1
    %3603 = vsyncpa [#allocation6], 1
    %3604 = vsyncpa [#allocation9], 1
    %3605 = vsyncpa [#allocation12], 1
    %3606 = vsyncpa [#allocation15], 1
    %3607 = vsyncpa [#allocation18], 1
    %3608 = vsyncpa [#allocation21], 1
    %3609 = vsyncpa [#allocation24], 1
    %3610 = vsyncpa [#allocation27], 1
    %3611 = vsyncpa [#allocation30], 1
    %3612 = vsyncpa [#allocation33], 1
    %3613 = vsyncpa [#allocation36], 1
    %3614 = vsyncpa [#allocation39], 1
    %3615 = vsyncpa [#allocation4], 1

</llo_original>
